<compile_context>
chip_gen: v7x
topology: tpu7x:2x2x1
jax: 0.10.0
libtpu: 0.0.40
codegen_flags: <defaults>
</compile_context>

<pallas_src>
import numpy as np
import jax
import jax.numpy as jnp
from jax import lax
from jax.experimental import pallas as pl
from jax.experimental.pallas import tpu as pltpu

POOL = 4                # MaxPool1d(pool_size=4)


def _phase_perm(H):
    """Phase-major lane permutation: perm[p*q + j] = POOL*j + p (q = H // POOL)."""
    q = H // POOL
    return np.arange(H).reshape(q, POOL).T.reshape(-1).copy()


def _pick_time_block(T, B, max_block=32):
    """Largest Tt <= max_block with T % Tt == 0 and (Tt*B) % 8 == 0 (sublane-aligned)."""
    best = None
    for tb in range(1, min(T, max_block) + 1):
        if T % tb == 0 and (tb * B) % 8 == 0:
            best = tb
    return best if best is not None else T


def _pack_layer(lp, first, perm):
    """Fuse one ResidualGRUCell's raw tensors into the packed, lane-permuted layout."""
    (wxr, wxz, wxn, whr, whz, whn, br, bz, bin_, bhn,
     lin_w, lin_b, bn_scale, bn_shift, exp_w, exp_b) = lp

    colp = lambda w: w[:, perm]      # permute hidden-lane (output) axis to phase-major
    rowp = lambda w: w[perm, :]      # permute input axis (consumes pi-ordered hidden)

    wxr, wxz, wxn, lin_w = (colp(w) for w in (wxr, wxz, wxn, lin_w))
    if not first:                    # layer i>0 consumes the pi-ordered hidden as input
        wxr, wxz, wxn, lin_w = (rowp(w) for w in (wxr, wxz, wxn, lin_w))
    whr, whz, whn = (rowp(colp(w)) for w in (whr, whz, whn))
    br, bz, bin_, bhn, lin_b, bn_scale, bn_shift, exp_b = (
        colp(v) for v in (br, bz, bin_, bhn, lin_b, bn_scale, bn_shift, exp_b))
    exp_w = colp(exp_w)              # rows stay in canonical pooling-window order

    # input-side fused weight/bias (BatchNorm(eval) affine folded into the residual linear)
    Wx = jnp.concatenate([wxr, wxz, wxn, lin_w * bn_scale], axis=1)             # (D, 4H)
    bx = jnp.concatenate([br, bz, bin_, lin_b * bn_scale + bn_shift], axis=1)   # (1, 4H)
    Wh = jnp.concatenate([whr, whz, whn], axis=1)                               # (H, 3H)
    return Wx, bx, Wh, bhn, bn_scale, exp_w, exp_b


def deep_residual_gru(x, layer_params, proj_w, proj_b, *,
                      time_block=None, mxu_dtype=jnp.float32):
    """x: (B, T, D_in) float32 -> (B, T, output_size) float32."""
    B, T, D_in = x.shape
    H, O = proj_w.shape
    L = len(layer_params)
    assert H % POOL == 0
    q = H // POOL
    Tt = time_block if time_block is not None else _pick_time_block(T, B)
    assert T % Tt == 0 and (Tt == T or (Tt * B) % 8 == 0)
    R = Tt * B                      # rows per time block (time-major, flattened)

    # ---- pack / permute parameters (wrapper-side, XLA) ----
    perm = _phase_perm(H)
    packed = [_pack_layer(lp, i == 0, perm) for i, lp in enumerate(layer_params)]

    wx0, bx0, wh0, bhn0 = packed[0][0], packed[0][1], packed[0][2], packed[0][3]
    scale_all = jnp.stack([p[4] for p in packed], axis=0)        # (L, 1, H)
    wexp_all = jnp.stack([p[5] for p in packed], axis=0)         # (L, q, H) compact expand
    expb_all = jnp.stack([p[6] for p in packed], axis=0)         # (L, 1, H)
    if L > 1:
        # layers i>0: one fused (H, 7H) = [Wx | Wh] weight and a (1, 7H) fused bias
        wfull = jnp.stack([jnp.concatenate([p[0], p[2]], axis=1)
                           for p in packed[1:]], axis=0)                         # (L-1, H, 7H)
        bfull = jnp.stack([jnp.concatenate(
            [p[1], jnp.zeros((1, 2 * H), jnp.float32), p[3]], axis=1)
            for p in packed[1:]], axis=0)                                        # (L-1, 1, 7H)
    else:
        wfull = jnp.zeros((1, H, 7 * H), jnp.float32)            # unused dummy (L == 1)
        bfull = jnp.zeros((1, 1, 7 * H), jnp.float32)

    projw = proj_w[perm, :]          # rows consume the pi-ordered hidden
    projb = proj_b

    # Pre-cast MXU weight operands once (bf16 halves weight VMEM/HBM on v5e/v6e/v7x);
    # biases / affine constants stay f32 and are added post-accumulation.
    wx0, wh0, wfull, wexp_all, projw = (
        w.astype(mxu_dtype) for w in (wx0, wh0, wfull, wexp_all, projw))

    x_tm = jnp.transpose(x, (1, 0, 2)).reshape(T * B, D_in)      # time-major, flat rows

    params = [wx0, bx0, wh0, bhn0, wfull, bfull, wexp_all, scale_all, expb_all,
              projw, projb]

    # ---- kernel ----
    def kernel(x_ref, wx0_ref, bx0_ref, wh0_ref, bhn0_ref,
               wfull_ref, bfull_ref, wexp_ref, scale_ref, expb_ref,
               projw_ref, projb_ref, out_ref, h_ref, hall_ref, gx_ref):
        f32 = jnp.float32

        @pl.when(pl.program_id(0) == 0)
        def _():
            h_ref[...] = jnp.zeros(h_ref.shape, h_ref.dtype)

        def mdot(a, w):
            return jnp.dot(a.astype(mxu_dtype), w, preferred_element_type=f32)

        # Layer-0 input projection for the whole time block: one well-shaped
        # (R, D_in) x (D_in, 4H) GEMM, hoisted off the serial recurrence.
        gx_ref[...] = mdot(x_ref[...], wx0_ref[...]) + bx0_ref[...]

        def cell(gx, gh, h, bn_scale, exp_w, exp_b, bhn=None):
            """One ResidualGRUCell; gx = fused input-side proj (B,4H), gh = h-side (B,3H)."""
            r = jax.nn.sigmoid(gx[:, 0:H] + gh[:, 0:H])
            z = jax.nn.sigmoid(gx[:, H:2 * H] + gh[:, H:2 * H])
            ghn = gh[:, 2 * H:3 * H]
            if bhn is not None:
                ghn = ghn + bhn
            n = jnp.tanh(gx[:, 2 * H:3 * H] + r * ghn)
            h_gru = (1.0 - z) * n + z * h
            # residual Linear + BatchNorm1d(eval) affine folded into gx[:, 3H:4H] / bn_scale
            hid = jnp.maximum(bn_scale * h_gru + gx[:, 3 * H:4 * H], 0.0)  # ReLU; dropout=id
            # MaxPool1d(POOL): hidden lanes are phase-major permuted, so each pooling window
            # is the elementwise max of POOL contiguous q-lane blocks (no roll / gather),
            # and the expand weight stays compact (q, H).
            pooled = hid[:, 0:q]
            for p in range(1, POOL):
                pooled = jnp.maximum(pooled, hid[:, p * q:(p + 1) * q])
            return jnp.tanh(mdot(pooled, exp_w) + exp_b)

        h = h_ref[...]
        # Static (fully unrolled) time loop: Tt is small here.
        # TODO(synk): for large Tt*num_layers switch to lax.fori_loop with partial unroll
        # to bound vreg pressure.
        for t in range(Tt):
            row = t * B
            # layer 0: precomputed input projection + one h matmul
            gh0 = mdot(h, wh0_ref[...])
            h = cell(gx_ref[row:row + B, :], gh0, h,
                     scale_ref[0], wexp_ref[0], expb_ref[0], bhn=bhn0_ref[...])
            # layers i>0: single fused (H, 7H) matmul per layer per step
            for i in range(1, L):
                g = mdot(h, wfull_ref[i - 1]) + bfull_ref[i - 1]
                h = cell(g[:, 0:4 * H], g[:, 4 * H:7 * H], h,
                         scale_ref[i], wexp_ref[i], expb_ref[i])
            hall_ref[row:row + B, :] = h
        h_ref[...] = h                           # carry hidden state to the next grid step

        # Batched output projection over the whole time block:
        # one (R, H) x (H, O) GEMM + one slab store (only the last layer's proj survives
        # in the PyTorch loop).
        out = mdot(hall_ref[...], projw_ref[...]) + projb_ref[...]
        out_ref[...] = out.astype(out_ref.dtype)

    # ---- specs ----
    in_specs = [pl.BlockSpec((R, D_in), lambda t: (t, 0))]
    for prm in params:
        nd = prm.ndim
        # whole-array, constant-index weight blocks (DMA'd once; see review note on
        # single-buffering via pl.Buffered(1) for very large weight sets on v7x).
        in_specs.append(pl.BlockSpec(prm.shape, lambda t, _nd=nd: (0,) * _nd))
    out_spec = pl.BlockSpec((R, O), lambda t: (t, 0))

    weight_bytes = sum(int(np.prod(prm.shape)) * prm.dtype.itemsize for prm in params)
    block_bytes = R * (D_in + O) * 4
    scratch_bytes = 4 * (B * H + R * H + R * 4 * H)
    vmem_limit = int(max(32 * 1024 * 1024,
                         2 * (weight_bytes + block_bytes) + scratch_bytes + (1 << 20)))

    out_flat = pl.pallas_call(
        kernel,
        out_shape=jax.ShapeDtypeStruct((T * B, O), jnp.float32),
        grid_spec=pltpu.PrefetchScalarGridSpec(
            num_scalar_prefetch=0,
            grid=(T // Tt,),
            in_specs=in_specs,
            out_specs=out_spec,
            scratch_shapes=[
                pltpu.VMEM((B, H), jnp.float32),        # carried hidden state
                pltpu.VMEM((R, H), jnp.float32),        # per-step hidden for batched proj
                pltpu.VMEM((R, 4 * H), jnp.float32),    # layer-0 input projection
            ],
        ),
        compiler_params=pltpu.CompilerParams(
            dimension_semantics=("arbitrary",),         # serial recurrence over time
            vmem_limit_bytes=vmem_limit),
    )(x_tm, *params)

    return jnp.transpose(out_flat.reshape(T, B, O), (1, 0, 2))   # back to (B, T, O)


def init_params(key, input_size, hidden_size, output_size, num_layers):
    """Deterministic synthetic parameter init (mirrors the PyTorch shapes)."""
    H = hidden_size
    layer_params = []

    def uni(k, shape, lim):
        return jax.random.uniform(k, shape, jnp.float32, -lim, lim)

    for i in range(num_layers):
        D = input_size if i == 0 else H
        key, *ks = jax.random.split(key, 16)
        s = 1.0 / np.sqrt(H)
        wxr = uni(ks[0], (D, H), s)
        wxz = uni(ks[1], (D, H), s)
        wxn = uni(ks[2], (D, H), s)
        whr = uni(ks[3], (H, H), s)
        whz = uni(ks[4], (H, H), s)
        whn = uni(ks[5], (H, H), s)
        br = uni(ks[6], (1, H), s) + uni(ks[7], (1, H), s)    # b_ir + b_hr
        bz = uni(ks[8], (1, H), s) + uni(ks[9], (1, H), s)    # b_iz + b_hz
        bin_ = uni(ks[10], (1, H), s)
        bhn = uni(ks[11], (1, H), s)

        xav = float(np.sqrt(6.0 / (D + H)))                   # xavier_uniform_
        lin_w = uni(ks[12], (D, H), xav)
        lin_b = jnp.zeros((1, H), jnp.float32)

        eps = 1e-5                                            # BN eval: gamma=1, beta=0,
        bn_scale = jnp.full((1, H), 1.0 / np.sqrt(1.0 + eps), jnp.float32)
        bn_shift = jnp.zeros((1, H), jnp.float32)             # running_mean=0, running_var=1

        se = 1.0 / np.sqrt(H // POOL)                         # LazyLinear(H//POOL -> H)
        exp_w = uni(ks[13], (H // POOL, H), se)
        exp_b = uni(ks[14], (1, H), se)

        layer_params.append((wxr, wxz, wxn, whr, whz, whn, br, bz, bin_, bhn,
                             lin_w, lin_b, bn_scale, bn_shift, exp_w, exp_b))

    key, k1 = jax.random.split(key)
    xav = float(np.sqrt(6.0 / (H + output_size)))
    proj_w = uni(k1, (H, output_size), xav)
    proj_b = jnp.zeros((1, output_size), jnp.float32)
    return layer_params, proj_w, proj_b


def reference_forward(x, layer_params, proj_w, proj_b):
    """Pure-JAX reference mirroring the PyTorch forward (eval semantics)."""
    B, T, _ = x.shape
    H = proj_w.shape[0]
    hp = jax.lax.Precision.HIGHEST
    dot = lambda a, b: jnp.dot(a, b, precision=hp)
    h = jnp.zeros((B, H), jnp.float32)
    outs = []
    for t in range(T):
        inp = x[:, t, :]
        for lp in layer_params:
            (wxr, wxz, wxn, whr, whz, whn, br, bz, bin_, bhn,
             lin_w, lin_b, bn_scale, bn_shift, exp_w, exp_b) = lp
            r = jax.nn.sigmoid(dot(inp, wxr) + dot(h, whr) + br)
            z = jax.nn.sigmoid(dot(inp, wxz) + dot(h, whz) + bz)
            n = jnp.tanh(dot(inp, wxn) + bin_ + r * (dot(h, whn) + bhn))
            h_gru = (1.0 - z) * n + z * h
            hid = h_gru + dot(inp, lin_w) + lin_b
            hid = hid * bn_scale + bn_shift
            hid = jnp.maximum(hid, 0.0)
            pooled = jnp.max(hid.reshape(B, H // POOL, POOL), axis=-1)
            hid = jnp.tanh(dot(pooled, exp_w) + exp_b)
            h = hid
            inp = hid
        outs.append(dot(h, proj_w) + proj_b)
    return jnp.stack(outs, axis=1)


if __name__ == "__main__":
    B, T = 2, 8
    input_size, hidden_size, output_size, num_layers = 16, 32, 8, 2

    key = jax.random.PRNGKey(0)
    key, xk, pk = jax.random.split(key, 3)
    x = jax.random.normal(xk, (B, T, input_size), jnp.float32)
    layer_params, proj_w, proj_b = init_params(
        pk, input_size, hidden_size, output_size, num_layers)

    # time_block=4 -> grid=(2,): exercises the hidden-state carry across grid steps.
    out = deep_residual_gru(x, layer_params, proj_w, proj_b, time_block=4)
    out = jax.block_until_ready(out)

    ref = reference_forward(x, layer_params, proj_w, proj_b)
    err = float(jnp.max(jnp.abs(out - ref)))
    assert out.shape == (B, T, output_size), out.shape
    assert err < 5e-2, f"max abs err too large: {err}"
    print("KERNEL_OK")
</pallas_src>

<mosaic_0001>
module attributes {stable_mosaic.version = 11 : i64} {
  func.func @kernel(%arg0: i32, %arg1: memref<8x16xf32, #tpu.memory_space<vmem>>, %arg2: memref<16x128xf32, #tpu.memory_space<vmem>>, %arg3: memref<1x128xf32, #tpu.memory_space<vmem>>, %arg4: memref<32x96xf32, #tpu.memory_space<vmem>>, %arg5: memref<1x32xf32, #tpu.memory_space<vmem>>, %arg6: memref<1x32x224xf32, #tpu.memory_space<vmem>>, %arg7: memref<1x1x224xf32, #tpu.memory_space<vmem>>, %arg8: memref<2x8x32xf32, #tpu.memory_space<vmem>>, %arg9: memref<2x1x32xf32, #tpu.memory_space<vmem>>, %arg10: memref<2x1x32xf32, #tpu.memory_space<vmem>>, %arg11: memref<32x8xf32, #tpu.memory_space<vmem>>, %arg12: memref<1x8xf32, #tpu.memory_space<vmem>>, %arg13: memref<8x8xf32, #tpu.memory_space<vmem>>, %arg14: memref<2x32xf32, #tpu.memory_space<vmem>>, %arg15: memref<8x32xf32, #tpu.memory_space<vmem>>, %arg16: memref<8x128xf32, #tpu.memory_space<vmem>>) attributes {dimension_semantics = [#tpu.dimension_semantics<arbitrary>], iteration_bounds = array<i64: 2>, scalar_prefetch = 0 : i64, scratch_operands = 3 : i64, tpu.core_type = #tpu.core_type<tc>, window_params = [{transform_indices = @transform_0, window_bounds = array<i64: 8, 16>}, {pipeline_mode = #tpu.pipeline_mode<synchronous>, transform_indices = @transform_1, window_bounds = array<i64: 16, 128>}, {pipeline_mode = #tpu.pipeline_mode<synchronous>, transform_indices = @transform_2, window_bounds = array<i64: 1, 128>}, {pipeline_mode = #tpu.pipeline_mode<synchronous>, transform_indices = @transform_3, window_bounds = array<i64: 32, 96>}, {pipeline_mode = #tpu.pipeline_mode<synchronous>, transform_indices = @transform_4, window_bounds = array<i64: 1, 32>}, {pipeline_mode = #tpu.pipeline_mode<synchronous>, transform_indices = @transform_5, window_bounds = array<i64: 1, 32, 224>}, {pipeline_mode = #tpu.pipeline_mode<synchronous>, transform_indices = @transform_6, window_bounds = array<i64: 1, 1, 224>}, {pipeline_mode = #tpu.pipeline_mode<synchronous>, transform_indices = @transform_7, window_bounds = array<i64: 2, 8, 32>}, {pipeline_mode = #tpu.pipeline_mode<synchronous>, transform_indices = @transform_8, window_bounds = array<i64: 2, 1, 32>}, {pipeline_mode = #tpu.pipeline_mode<synchronous>, transform_indices = @transform_9, window_bounds = array<i64: 2, 1, 32>}, {pipeline_mode = #tpu.pipeline_mode<synchronous>, transform_indices = @transform_10, window_bounds = array<i64: 32, 8>}, {pipeline_mode = #tpu.pipeline_mode<synchronous>, transform_indices = @transform_11, window_bounds = array<i64: 1, 8>}, {transform_indices = @transform_12, window_bounds = array<i64: 8, 8>}]} {
    %c0_i32 = arith.constant 0 : i32
    %0 = arith.cmpi eq, %arg0, %c0_i32 : i32
    %1 = arith.extui %0 : i1 to i32
    %c0_i32_0 = arith.constant 0 : i32
    %2 = arith.cmpi ne, %1, %c0_i32_0 : i32
    scf.if %2 {
      %cst_193 = arith.constant 0.000000e+00 : f32
      %475 = vector.broadcast %cst_193 : f32 to vector<2x32xf32>
      %c0_194 = arith.constant 0 : index
      %c0_195 = arith.constant 0 : index
      %476 = vector.load %arg14[%c0_194, %c0_195] : memref<2x32xf32, #tpu.memory_space<vmem>>, vector<2x32xf32>
      tpu.vector_store %arg14[%c0_194, %c0_195], %475 {strides = array<i32>} : memref<2x32xf32, #tpu.memory_space<vmem>>, vector<2x32xf32>,
    } else {
    }
    %c0 = arith.constant 0 : index
    %c0_1 = arith.constant 0 : index
    %3 = vector.load %arg1[%c0, %c0_1] : memref<8x16xf32, #tpu.memory_space<vmem>>, vector<8x16xf32>
    %c0_2 = arith.constant 0 : index
    %c0_3 = arith.constant 0 : index
    %4 = vector.load %arg2[%c0_2, %c0_3] : memref<16x128xf32, #tpu.memory_space<vmem>>, vector<16x128xf32>
    %cst = arith.constant dense<0.000000e+00> : vector<8x128xf32>
    %5 = tpu.matmul %3, %4, %cst {dimension_numbers = #tpu.dot_dimension_numbers<[1], [0], [0], [1], [0, 0, 1, 1], [], []>} : vector<8x16xf32>, vector<16x128xf32>, vector<8x128xf32> -> vector<8x128xf32>
    %c0_4 = arith.constant 0 : index
    %c0_5 = arith.constant 0 : index
    %6 = vector.load %arg3[%c0_4, %c0_5] : memref<1x128xf32, #tpu.memory_space<vmem>>, vector<1x128xf32>
    %7 = vector.broadcast %6 : vector<1x128xf32> to vector<8x128xf32>
    %8 = arith.addf %5, %7 : vector<8x128xf32>
    %c0_6 = arith.constant 0 : index
    %c0_7 = arith.constant 0 : index
    %9 = vector.load %arg16[%c0_6, %c0_7] : memref<8x128xf32, #tpu.memory_space<vmem>>, vector<8x128xf32>
    tpu.vector_store %arg16[%c0_6, %c0_7], %8 {strides = array<i32>} : memref<8x128xf32, #tpu.memory_space<vmem>>, vector<8x128xf32>,
    %c0_8 = arith.constant 0 : index
    %c0_9 = arith.constant 0 : index
    %10 = vector.load %arg14[%c0_8, %c0_9] : memref<2x32xf32, #tpu.memory_space<vmem>>, vector<2x32xf32>
    %c0_10 = arith.constant 0 : index
    %c0_11 = arith.constant 0 : index
    %11 = vector.load %arg4[%c0_10, %c0_11] : memref<32x96xf32, #tpu.memory_space<vmem>>, vector<32x96xf32>
    %cst_12 = arith.constant dense<0.000000e+00> : vector<2x96xf32>
    %12 = tpu.matmul %10, %11, %cst_12 {dimension_numbers = #tpu.dot_dimension_numbers<[1], [0], [0], [1], [0, 0, 1, 1], [], []>} : vector<2x32xf32>, vector<32x96xf32>, vector<2x96xf32> -> vector<2x96xf32>
    %c0_13 = arith.constant 0 : index
    %c0_14 = arith.constant 0 : index
    %13 = vector.load %arg16[%c0_13, %c0_14] : memref<8x128xf32, #tpu.memory_space<vmem>>, vector<2x128xf32>
    %c0_15 = arith.constant 0 : index
    %c0_16 = arith.constant 0 : index
    %c0_17 = arith.constant 0 : index
    %14 = vector.load %arg9[%c0_15, %c0_16, %c0_17] : memref<2x1x32xf32, #tpu.memory_space<vmem>>, vector<1x1x32xf32>
    %15 = vector.shape_cast %14 : vector<1x1x32xf32> to vector<1x32xf32>
    %c0_18 = arith.constant 0 : index
    %c0_19 = arith.constant 0 : index
    %c0_20 = arith.constant 0 : index
    %16 = vector.load %arg8[%c0_18, %c0_19, %c0_20] : memref<2x8x32xf32, #tpu.memory_space<vmem>>, vector<1x8x32xf32>
    %17 = vector.shape_cast %16 : vector<1x8x32xf32> to vector<8x32xf32>
    %c0_21 = arith.constant 0 : index
    %c0_22 = arith.constant 0 : index
    %c0_23 = arith.constant 0 : index
    %18 = vector.load %arg10[%c0_21, %c0_22, %c0_23] : memref<2x1x32xf32, #tpu.memory_space<vmem>>, vector<1x1x32xf32>
    %19 = vector.shape_cast %18 : vector<1x1x32xf32> to vector<1x32xf32>
    %c0_24 = arith.constant 0 : index
    %c0_25 = arith.constant 0 : index
    %20 = vector.load %arg5[%c0_24, %c0_25] : memref<1x32xf32, #tpu.memory_space<vmem>>, vector<1x32xf32>
    %21 = vector.extract_strided_slice %13 {offsets = [0, 0], sizes = [2, 32], strides = [1, 1]} : vector<2x128xf32> to vector<2x32xf32>
    %22 = vector.extract_strided_slice %12 {offsets = [0, 0], sizes = [2, 32], strides = [1, 1]} : vector<2x96xf32> to vector<2x32xf32>
    %23 = arith.addf %21, %22 : vector<2x32xf32>
    %24 = arith.negf %23 : vector<2x32xf32>
    %25 = math.exp %24 : vector<2x32xf32>
    %cst_26 = arith.constant 1.000000e+00 : f32
    %26 = vector.broadcast %cst_26 : f32 to vector<2x32xf32>
    %27 = arith.addf %26, %25 : vector<2x32xf32>
    %28 = arith.divf %26, %27 : vector<2x32xf32>
    %29 = vector.extract_strided_slice %13 {offsets = [0, 32], sizes = [2, 32], strides = [1, 1]} : vector<2x128xf32> to vector<2x32xf32>
    %30 = vector.extract_strided_slice %12 {offsets = [0, 32], sizes = [2, 32], strides = [1, 1]} : vector<2x96xf32> to vector<2x32xf32>
    %31 = arith.addf %29, %30 : vector<2x32xf32>
    %32 = arith.negf %31 : vector<2x32xf32>
    %33 = math.exp %32 : vector<2x32xf32>
    %cst_27 = arith.constant 1.000000e+00 : f32
    %34 = vector.broadcast %cst_27 : f32 to vector<2x32xf32>
    %35 = arith.addf %34, %33 : vector<2x32xf32>
    %36 = arith.divf %34, %35 : vector<2x32xf32>
    %37 = vector.extract_strided_slice %12 {offsets = [0, 64], sizes = [2, 32], strides = [1, 1]} : vector<2x96xf32> to vector<2x32xf32>
    %38 = vector.broadcast %20 : vector<1x32xf32> to vector<2x32xf32>
    %39 = arith.addf %37, %38 : vector<2x32xf32>
    %40 = vector.extract_strided_slice %13 {offsets = [0, 64], sizes = [2, 32], strides = [1, 1]} : vector<2x128xf32> to vector<2x32xf32>
    %41 = arith.mulf %28, %39 : vector<2x32xf32>
    %42 = arith.addf %40, %41 : vector<2x32xf32>
    %43 = math.tanh %42 : vector<2x32xf32>
    %cst_28 = arith.constant 1.000000e+00 : f32
    %44 = vector.broadcast %cst_28 : f32 to vector<2x32xf32>
    %45 = arith.subf %44, %36 : vector<2x32xf32>
    %46 = arith.mulf %45, %43 : vector<2x32xf32>
    %47 = arith.mulf %36, %10 : vector<2x32xf32>
    %48 = arith.addf %46, %47 : vector<2x32xf32>
    %49 = vector.broadcast %15 : vector<1x32xf32> to vector<2x32xf32>
    %50 = arith.mulf %49, %48 : vector<2x32xf32>
    %51 = vector.extract_strided_slice %13 {offsets = [0, 96], sizes = [2, 32], strides = [1, 1]} : vector<2x128xf32> to vector<2x32xf32>
    %52 = arith.addf %50, %51 : vector<2x32xf32>
    %cst_29 = arith.constant 0.000000e+00 : f32
    %53 = vector.broadcast %cst_29 : f32 to vector<2x32xf32>
    %54 = arith.maximumf %52, %53 : vector<2x32xf32>
    %55 = vector.extract_strided_slice %54 {offsets = [0, 0], sizes = [2, 8], strides = [1, 1]} : vector<2x32xf32> to vector<2x8xf32>
    %56 = vector.extract_strided_slice %54 {offsets = [0, 8], sizes = [2, 8], strides = [1, 1]} : vector<2x32xf32> to vector<2x8xf32>
    %57 = arith.maximumf %55, %56 : vector<2x8xf32>
    %58 = vector.extract_strided_slice %54 {offsets = [0, 16], sizes = [2, 8], strides = [1, 1]} : vector<2x32xf32> to vector<2x8xf32>
    %59 = arith.maximumf %57, %58 : vector<2x8xf32>
    %60 = vector.extract_strided_slice %54 {offsets = [0, 24], sizes = [2, 8], strides = [1, 1]} : vector<2x32xf32> to vector<2x8xf32>
    %61 = arith.maximumf %59, %60 : vector<2x8xf32>
    %cst_30 = arith.constant dense<0.000000e+00> : vector<2x32xf32>
    %62 = tpu.matmul %61, %17, %cst_30 {dimension_numbers = #tpu.dot_dimension_numbers<[1], [0], [0], [1], [0, 0, 1, 1], [], []>} : vector<2x8xf32>, vector<8x32xf32>, vector<2x32xf32> -> vector<2x32xf32>
    %63 = vector.broadcast %19 : vector<1x32xf32> to vector<2x32xf32>
    %64 = arith.addf %62, %63 : vector<2x32xf32>
    %65 = math.tanh %64 : vector<2x32xf32>
    %c0_31 = arith.constant 0 : index
    %c0_32 = arith.constant 0 : index
    %c0_33 = arith.constant 0 : index
    %66 = vector.load %arg6[%c0_31, %c0_32, %c0_33] : memref<1x32x224xf32, #tpu.memory_space<vmem>>, vector<1x32x224xf32>
    %67 = vector.shape_cast %66 : vector<1x32x224xf32> to vector<32x224xf32>
    %cst_34 = arith.constant dense<0.000000e+00> : vector<2x224xf32>
    %68 = tpu.matmul %65, %67, %cst_34 {dimension_numbers = #tpu.dot_dimension_numbers<[1], [0], [0], [1], [0, 0, 1, 1], [], []>} : vector<2x32xf32>, vector<32x224xf32>, vector<2x224xf32> -> vector<2x224xf32>
    %c0_35 = arith.constant 0 : index
    %c0_36 = arith.constant 0 : index
    %c0_37 = arith.constant 0 : index
    %69 = vector.load %arg7[%c0_35, %c0_36, %c0_37] : memref<1x1x224xf32, #tpu.memory_space<vmem>>, vector<1x1x224xf32>
    %70 = vector.shape_cast %69 : vector<1x1x224xf32> to vector<1x224xf32>
    %71 = vector.broadcast %70 : vector<1x224xf32> to vector<2x224xf32>
    %72 = arith.addf %68, %71 : vector<2x224xf32>
    %73 = vector.extract_strided_slice %72 {offsets = [0, 0], sizes = [2, 128], strides = [1, 1]} : vector<2x224xf32> to vector<2x128xf32>
    %74 = vector.extract_strided_slice %72 {offsets = [0, 128], sizes = [2, 96], strides = [1, 1]} : vector<2x224xf32> to vector<2x96xf32>
    %c1 = arith.constant 1 : index
    %c0_38 = arith.constant 0 : index
    %c0_39 = arith.constant 0 : index
    %75 = vector.load %arg9[%c1, %c0_38, %c0_39] : memref<2x1x32xf32, #tpu.memory_space<vmem>>, vector<1x1x32xf32>
    %76 = vector.shape_cast %75 : vector<1x1x32xf32> to vector<1x32xf32>
    %c1_40 = arith.constant 1 : index
    %c0_41 = arith.constant 0 : index
    %c0_42 = arith.constant 0 : index
    %77 = vector.load %arg8[%c1_40, %c0_41, %c0_42] : memref<2x8x32xf32, #tpu.memory_space<vmem>>, vector<1x8x32xf32>
    %78 = vector.shape_cast %77 : vector<1x8x32xf32> to vector<8x32xf32>
    %c1_43 = arith.constant 1 : index
    %c0_44 = arith.constant 0 : index
    %c0_45 = arith.constant 0 : index
    %79 = vector.load %arg10[%c1_43, %c0_44, %c0_45] : memref<2x1x32xf32, #tpu.memory_space<vmem>>, vector<1x1x32xf32>
    %80 = vector.shape_cast %79 : vector<1x1x32xf32> to vector<1x32xf32>
    %81 = vector.extract_strided_slice %73 {offsets = [0, 0], sizes = [2, 32], strides = [1, 1]} : vector<2x128xf32> to vector<2x32xf32>
    %82 = vector.extract_strided_slice %74 {offsets = [0, 0], sizes = [2, 32], strides = [1, 1]} : vector<2x96xf32> to vector<2x32xf32>
    %83 = arith.addf %81, %82 : vector<2x32xf32>
    %84 = arith.negf %83 : vector<2x32xf32>
    %85 = math.exp %84 : vector<2x32xf32>
    %cst_46 = arith.constant 1.000000e+00 : f32
    %86 = vector.broadcast %cst_46 : f32 to vector<2x32xf32>
    %87 = arith.addf %86, %85 : vector<2x32xf32>
    %88 = arith.divf %86, %87 : vector<2x32xf32>
    %89 = vector.extract_strided_slice %73 {offsets = [0, 32], sizes = [2, 32], strides = [1, 1]} : vector<2x128xf32> to vector<2x32xf32>
    %90 = vector.extract_strided_slice %74 {offsets = [0, 32], sizes = [2, 32], strides = [1, 1]} : vector<2x96xf32> to vector<2x32xf32>
    %91 = arith.addf %89, %90 : vector<2x32xf32>
    %92 = arith.negf %91 : vector<2x32xf32>
    %93 = math.exp %92 : vector<2x32xf32>
    %cst_47 = arith.constant 1.000000e+00 : f32
    %94 = vector.broadcast %cst_47 : f32 to vector<2x32xf32>
    %95 = arith.addf %94, %93 : vector<2x32xf32>
    %96 = arith.divf %94, %95 : vector<2x32xf32>
    %97 = vector.extract_strided_slice %74 {offsets = [0, 64], sizes = [2, 32], strides = [1, 1]} : vector<2x96xf32> to vector<2x32xf32>
    %98 = vector.extract_strided_slice %73 {offsets = [0, 64], sizes = [2, 32], strides = [1, 1]} : vector<2x128xf32> to vector<2x32xf32>
    %99 = arith.mulf %88, %97 : vector<2x32xf32>
    %100 = arith.addf %98, %99 : vector<2x32xf32>
    %101 = math.tanh %100 : vector<2x32xf32>
    %cst_48 = arith.constant 1.000000e+00 : f32
    %102 = vector.broadcast %cst_48 : f32 to vector<2x32xf32>
    %103 = arith.subf %102, %96 : vector<2x32xf32>
    %104 = arith.mulf %103, %101 : vector<2x32xf32>
    %105 = arith.mulf %96, %65 : vector<2x32xf32>
    %106 = arith.addf %104, %105 : vector<2x32xf32>
    %107 = vector.broadcast %76 : vector<1x32xf32> to vector<2x32xf32>
    %108 = arith.mulf %107, %106 : vector<2x32xf32>
    %109 = vector.extract_strided_slice %73 {offsets = [0, 96], sizes = [2, 32], strides = [1, 1]} : vector<2x128xf32> to vector<2x32xf32>
    %110 = arith.addf %108, %109 : vector<2x32xf32>
    %cst_49 = arith.constant 0.000000e+00 : f32
    %111 = vector.broadcast %cst_49 : f32 to vector<2x32xf32>
    %112 = arith.maximumf %110, %111 : vector<2x32xf32>
    %113 = vector.extract_strided_slice %112 {offsets = [0, 0], sizes = [2, 8], strides = [1, 1]} : vector<2x32xf32> to vector<2x8xf32>
    %114 = vector.extract_strided_slice %112 {offsets = [0, 8], sizes = [2, 8], strides = [1, 1]} : vector<2x32xf32> to vector<2x8xf32>
    %115 = arith.maximumf %113, %114 : vector<2x8xf32>
    %116 = vector.extract_strided_slice %112 {offsets = [0, 16], sizes = [2, 8], strides = [1, 1]} : vector<2x32xf32> to vector<2x8xf32>
    %117 = arith.maximumf %115, %116 : vector<2x8xf32>
    %118 = vector.extract_strided_slice %112 {offsets = [0, 24], sizes = [2, 8], strides = [1, 1]} : vector<2x32xf32> to vector<2x8xf32>
    %119 = arith.maximumf %117, %118 : vector<2x8xf32>
    %cst_50 = arith.constant dense<0.000000e+00> : vector<2x32xf32>
    %120 = tpu.matmul %119, %78, %cst_50 {dimension_numbers = #tpu.dot_dimension_numbers<[1], [0], [0], [1], [0, 0, 1, 1], [], []>} : vector<2x8xf32>, vector<8x32xf32>, vector<2x32xf32> -> vector<2x32xf32>
    %121 = vector.broadcast %80 : vector<1x32xf32> to vector<2x32xf32>
    %122 = arith.addf %120, %121 : vector<2x32xf32>
    %123 = math.tanh %122 : vector<2x32xf32>
    %c0_51 = arith.constant 0 : index
    %c0_52 = arith.constant 0 : index
    %124 = vector.load %arg15[%c0_51, %c0_52] : memref<8x32xf32, #tpu.memory_space<vmem>>, vector<2x32xf32>
    tpu.vector_store %arg15[%c0_51, %c0_52], %123 {strides = array<i32>} : memref<8x32xf32, #tpu.memory_space<vmem>>, vector<2x32xf32>,
    %c0_53 = arith.constant 0 : index
    %c0_54 = arith.constant 0 : index
    %125 = vector.load %arg4[%c0_53, %c0_54] : memref<32x96xf32, #tpu.memory_space<vmem>>, vector<32x96xf32>
    %cst_55 = arith.constant dense<0.000000e+00> : vector<2x96xf32>
    %126 = tpu.matmul %123, %125, %cst_55 {dimension_numbers = #tpu.dot_dimension_numbers<[1], [0], [0], [1], [0, 0, 1, 1], [], []>} : vector<2x32xf32>, vector<32x96xf32>, vector<2x96xf32> -> vector<2x96xf32>
    %c2 = arith.constant 2 : index
    %c0_56 = arith.constant 0 : index
    %127 = vector.load %arg16[%c2, %c0_56] : memref<8x128xf32, #tpu.memory_space<vmem>>, vector<2x128xf32>
    %c0_57 = arith.constant 0 : index
    %c0_58 = arith.constant 0 : index
    %c0_59 = arith.constant 0 : index
    %128 = vector.load %arg9[%c0_57, %c0_58, %c0_59] : memref<2x1x32xf32, #tpu.memory_space<vmem>>, vector<1x1x32xf32>
    %129 = vector.shape_cast %128 : vector<1x1x32xf32> to vector<1x32xf32>
    %c0_60 = arith.constant 0 : index
    %c0_61 = arith.constant 0 : index
    %c0_62 = arith.constant 0 : index
    %130 = vector.load %arg8[%c0_60, %c0_61, %c0_62] : memref<2x8x32xf32, #tpu.memory_space<vmem>>, vector<1x8x32xf32>
    %131 = vector.shape_cast %130 : vector<1x8x32xf32> to vector<8x32xf32>
    %c0_63 = arith.constant 0 : index
    %c0_64 = arith.constant 0 : index
    %c0_65 = arith.constant 0 : index
    %132 = vector.load %arg10[%c0_63, %c0_64, %c0_65] : memref<2x1x32xf32, #tpu.memory_space<vmem>>, vector<1x1x32xf32>
    %133 = vector.shape_cast %132 : vector<1x1x32xf32> to vector<1x32xf32>
    %c0_66 = arith.constant 0 : index
    %c0_67 = arith.constant 0 : index
    %134 = vector.load %arg5[%c0_66, %c0_67] : memref<1x32xf32, #tpu.memory_space<vmem>>, vector<1x32xf32>
    %135 = vector.extract_strided_slice %127 {offsets = [0, 0], sizes = [2, 32], strides = [1, 1]} : vector<2x128xf32> to vector<2x32xf32>
    %136 = vector.extract_strided_slice %126 {offsets = [0, 0], sizes = [2, 32], strides = [1, 1]} : vector<2x96xf32> to vector<2x32xf32>
    %137 = arith.addf %135, %136 : vector<2x32xf32>
    %138 = arith.negf %137 : vector<2x32xf32>
    %139 = math.exp %138 : vector<2x32xf32>
    %cst_68 = arith.constant 1.000000e+00 : f32
    %140 = vector.broadcast %cst_68 : f32 to vector<2x32xf32>
    %141 = arith.addf %140, %139 : vector<2x32xf32>
    %142 = arith.divf %140, %141 : vector<2x32xf32>
    %143 = vector.extract_strided_slice %127 {offsets = [0, 32], sizes = [2, 32], strides = [1, 1]} : vector<2x128xf32> to vector<2x32xf32>
    %144 = vector.extract_strided_slice %126 {offsets = [0, 32], sizes = [2, 32], strides = [1, 1]} : vector<2x96xf32> to vector<2x32xf32>
    %145 = arith.addf %143, %144 : vector<2x32xf32>
    %146 = arith.negf %145 : vector<2x32xf32>
    %147 = math.exp %146 : vector<2x32xf32>
    %cst_69 = arith.constant 1.000000e+00 : f32
    %148 = vector.broadcast %cst_69 : f32 to vector<2x32xf32>
    %149 = arith.addf %148, %147 : vector<2x32xf32>
    %150 = arith.divf %148, %149 : vector<2x32xf32>
    %151 = vector.extract_strided_slice %126 {offsets = [0, 64], sizes = [2, 32], strides = [1, 1]} : vector<2x96xf32> to vector<2x32xf32>
    %152 = vector.broadcast %134 : vector<1x32xf32> to vector<2x32xf32>
    %153 = arith.addf %151, %152 : vector<2x32xf32>
    %154 = vector.extract_strided_slice %127 {offsets = [0, 64], sizes = [2, 32], strides = [1, 1]} : vector<2x128xf32> to vector<2x32xf32>
    %155 = arith.mulf %142, %153 : vector<2x32xf32>
    %156 = arith.addf %154, %155 : vector<2x32xf32>
    %157 = math.tanh %156 : vector<2x32xf32>
    %cst_70 = arith.constant 1.000000e+00 : f32
    %158 = vector.broadcast %cst_70 : f32 to vector<2x32xf32>
    %159 = arith.subf %158, %150 : vector<2x32xf32>
    %160 = arith.mulf %159, %157 : vector<2x32xf32>
    %161 = arith.mulf %150, %123 : vector<2x32xf32>
    %162 = arith.addf %160, %161 : vector<2x32xf32>
    %163 = vector.broadcast %129 : vector<1x32xf32> to vector<2x32xf32>
    %164 = arith.mulf %163, %162 : vector<2x32xf32>
    %165 = vector.extract_strided_slice %127 {offsets = [0, 96], sizes = [2, 32], strides = [1, 1]} : vector<2x128xf32> to vector<2x32xf32>
    %166 = arith.addf %164, %165 : vector<2x32xf32>
    %cst_71 = arith.constant 0.000000e+00 : f32
    %167 = vector.broadcast %cst_71 : f32 to vector<2x32xf32>
    %168 = arith.maximumf %166, %167 : vector<2x32xf32>
    %169 = vector.extract_strided_slice %168 {offsets = [0, 0], sizes = [2, 8], strides = [1, 1]} : vector<2x32xf32> to vector<2x8xf32>
    %170 = vector.extract_strided_slice %168 {offsets = [0, 8], sizes = [2, 8], strides = [1, 1]} : vector<2x32xf32> to vector<2x8xf32>
    %171 = arith.maximumf %169, %170 : vector<2x8xf32>
    %172 = vector.extract_strided_slice %168 {offsets = [0, 16], sizes = [2, 8], strides = [1, 1]} : vector<2x32xf32> to vector<2x8xf32>
    %173 = arith.maximumf %171, %172 : vector<2x8xf32>
    %174 = vector.extract_strided_slice %168 {offsets = [0, 24], sizes = [2, 8], strides = [1, 1]} : vector<2x32xf32> to vector<2x8xf32>
    %175 = arith.maximumf %173, %174 : vector<2x8xf32>
    %cst_72 = arith.constant dense<0.000000e+00> : vector<2x32xf32>
    %176 = tpu.matmul %175, %131, %cst_72 {dimension_numbers = #tpu.dot_dimension_numbers<[1], [0], [0], [1], [0, 0, 1, 1], [], []>} : vector<2x8xf32>, vector<8x32xf32>, vector<2x32xf32> -> vector<2x32xf32>
    %177 = vector.broadcast %133 : vector<1x32xf32> to vector<2x32xf32>
    %178 = arith.addf %176, %177 : vector<2x32xf32>
    %179 = math.tanh %178 : vector<2x32xf32>
    %c0_73 = arith.constant 0 : index
    %c0_74 = arith.constant 0 : index
    %c0_75 = arith.constant 0 : index
    %180 = vector.load %arg6[%c0_73, %c0_74, %c0_75] : memref<1x32x224xf32, #tpu.memory_space<vmem>>, vector<1x32x224xf32>
    %181 = vector.shape_cast %180 : vector<1x32x224xf32> to vector<32x224xf32>
    %cst_76 = arith.constant dense<0.000000e+00> : vector<2x224xf32>
    %182 = tpu.matmul %179, %181, %cst_76 {dimension_numbers = #tpu.dot_dimension_numbers<[1], [0], [0], [1], [0, 0, 1, 1], [], []>} : vector<2x32xf32>, vector<32x224xf32>, vector<2x224xf32> -> vector<2x224xf32>
    %c0_77 = arith.constant 0 : index
    %c0_78 = arith.constant 0 : index
    %c0_79 = arith.constant 0 : index
    %183 = vector.load %arg7[%c0_77, %c0_78, %c0_79] : memref<1x1x224xf32, #tpu.memory_space<vmem>>, vector<1x1x224xf32>
    %184 = vector.shape_cast %183 : vector<1x1x224xf32> to vector<1x224xf32>
    %185 = vector.broadcast %184 : vector<1x224xf32> to vector<2x224xf32>
    %186 = arith.addf %182, %185 : vector<2x224xf32>
    %187 = vector.extract_strided_slice %186 {offsets = [0, 0], sizes = [2, 128], strides = [1, 1]} : vector<2x224xf32> to vector<2x128xf32>
    %188 = vector.extract_strided_slice %186 {offsets = [0, 128], sizes = [2, 96], strides = [1, 1]} : vector<2x224xf32> to vector<2x96xf32>
    %c1_80 = arith.constant 1 : index
    %c0_81 = arith.constant 0 : index
    %c0_82 = arith.constant 0 : index
    %189 = vector.load %arg9[%c1_80, %c0_81, %c0_82] : memref<2x1x32xf32, #tpu.memory_space<vmem>>, vector<1x1x32xf32>
    %190 = vector.shape_cast %189 : vector<1x1x32xf32> to vector<1x32xf32>
    %c1_83 = arith.constant 1 : index
    %c0_84 = arith.constant 0 : index
    %c0_85 = arith.constant 0 : index
    %191 = vector.load %arg8[%c1_83, %c0_84, %c0_85] : memref<2x8x32xf32, #tpu.memory_space<vmem>>, vector<1x8x32xf32>
    %192 = vector.shape_cast %191 : vector<1x8x32xf32> to vector<8x32xf32>
    %c1_86 = arith.constant 1 : index
    %c0_87 = arith.constant 0 : index
    %c0_88 = arith.constant 0 : index
    %193 = vector.load %arg10[%c1_86, %c0_87, %c0_88] : memref<2x1x32xf32, #tpu.memory_space<vmem>>, vector<1x1x32xf32>
    %194 = vector.shape_cast %193 : vector<1x1x32xf32> to vector<1x32xf32>
    %195 = vector.extract_strided_slice %187 {offsets = [0, 0], sizes = [2, 32], strides = [1, 1]} : vector<2x128xf32> to vector<2x32xf32>
    %196 = vector.extract_strided_slice %188 {offsets = [0, 0], sizes = [2, 32], strides = [1, 1]} : vector<2x96xf32> to vector<2x32xf32>
    %197 = arith.addf %195, %196 : vector<2x32xf32>
    %198 = arith.negf %197 : vector<2x32xf32>
    %199 = math.exp %198 : vector<2x32xf32>
    %cst_89 = arith.constant 1.000000e+00 : f32
    %200 = vector.broadcast %cst_89 : f32 to vector<2x32xf32>
    %201 = arith.addf %200, %199 : vector<2x32xf32>
    %202 = arith.divf %200, %201 : vector<2x32xf32>
    %203 = vector.extract_strided_slice %187 {offsets = [0, 32], sizes = [2, 32], strides = [1, 1]} : vector<2x128xf32> to vector<2x32xf32>
    %204 = vector.extract_strided_slice %188 {offsets = [0, 32], sizes = [2, 32], strides = [1, 1]} : vector<2x96xf32> to vector<2x32xf32>
    %205 = arith.addf %203, %204 : vector<2x32xf32>
    %206 = arith.negf %205 : vector<2x32xf32>
    %207 = math.exp %206 : vector<2x32xf32>
    %cst_90 = arith.constant 1.000000e+00 : f32
    %208 = vector.broadcast %cst_90 : f32 to vector<2x32xf32>
    %209 = arith.addf %208, %207 : vector<2x32xf32>
    %210 = arith.divf %208, %209 : vector<2x32xf32>
    %211 = vector.extract_strided_slice %188 {offsets = [0, 64], sizes = [2, 32], strides = [1, 1]} : vector<2x96xf32> to vector<2x32xf32>
    %212 = vector.extract_strided_slice %187 {offsets = [0, 64], sizes = [2, 32], strides = [1, 1]} : vector<2x128xf32> to vector<2x32xf32>
    %213 = arith.mulf %202, %211 : vector<2x32xf32>
    %214 = arith.addf %212, %213 : vector<2x32xf32>
    %215 = math.tanh %214 : vector<2x32xf32>
    %cst_91 = arith.constant 1.000000e+00 : f32
    %216 = vector.broadcast %cst_91 : f32 to vector<2x32xf32>
    %217 = arith.subf %216, %210 : vector<2x32xf32>
    %218 = arith.mulf %217, %215 : vector<2x32xf32>
    %219 = arith.mulf %210, %179 : vector<2x32xf32>
    %220 = arith.addf %218, %219 : vector<2x32xf32>
    %221 = vector.broadcast %190 : vector<1x32xf32> to vector<2x32xf32>
    %222 = arith.mulf %221, %220 : vector<2x32xf32>
    %223 = vector.extract_strided_slice %187 {offsets = [0, 96], sizes = [2, 32], strides = [1, 1]} : vector<2x128xf32> to vector<2x32xf32>
    %224 = arith.addf %222, %223 : vector<2x32xf32>
    %cst_92 = arith.constant 0.000000e+00 : f32
    %225 = vector.broadcast %cst_92 : f32 to vector<2x32xf32>
    %226 = arith.maximumf %224, %225 : vector<2x32xf32>
    %227 = vector.extract_strided_slice %226 {offsets = [0, 0], sizes = [2, 8], strides = [1, 1]} : vector<2x32xf32> to vector<2x8xf32>
    %228 = vector.extract_strided_slice %226 {offsets = [0, 8], sizes = [2, 8], strides = [1, 1]} : vector<2x32xf32> to vector<2x8xf32>
    %229 = arith.maximumf %227, %228 : vector<2x8xf32>
    %230 = vector.extract_strided_slice %226 {offsets = [0, 16], sizes = [2, 8], strides = [1, 1]} : vector<2x32xf32> to vector<2x8xf32>
    %231 = arith.maximumf %229, %230 : vector<2x8xf32>
    %232 = vector.extract_strided_slice %226 {offsets = [0, 24], sizes = [2, 8], strides = [1, 1]} : vector<2x32xf32> to vector<2x8xf32>
    %233 = arith.maximumf %231, %232 : vector<2x8xf32>
    %cst_93 = arith.constant dense<0.000000e+00> : vector<2x32xf32>
    %234 = tpu.matmul %233, %192, %cst_93 {dimension_numbers = #tpu.dot_dimension_numbers<[1], [0], [0], [1], [0, 0, 1, 1], [], []>} : vector<2x8xf32>, vector<8x32xf32>, vector<2x32xf32> -> vector<2x32xf32>
    %235 = vector.broadcast %194 : vector<1x32xf32> to vector<2x32xf32>
    %236 = arith.addf %234, %235 : vector<2x32xf32>
    %237 = math.tanh %236 : vector<2x32xf32>
    %c2_94 = arith.constant 2 : index
    %c0_95 = arith.constant 0 : index
    %238 = vector.load %arg15[%c2_94, %c0_95] : memref<8x32xf32, #tpu.memory_space<vmem>>, vector<2x32xf32>
    tpu.vector_store %arg15[%c2_94, %c0_95], %237 {strides = array<i32>} : memref<8x32xf32, #tpu.memory_space<vmem>>, vector<2x32xf32>,
    %c0_96 = arith.constant 0 : index
    %c0_97 = arith.constant 0 : index
    %239 = vector.load %arg4[%c0_96, %c0_97] : memref<32x96xf32, #tpu.memory_space<vmem>>, vector<32x96xf32>
    %cst_98 = arith.constant dense<0.000000e+00> : vector<2x96xf32>
    %240 = tpu.matmul %237, %239, %cst_98 {dimension_numbers = #tpu.dot_dimension_numbers<[1], [0], [0], [1], [0, 0, 1, 1], [], []>} : vector<2x32xf32>, vector<32x96xf32>, vector<2x96xf32> -> vector<2x96xf32>
    %c4 = arith.constant 4 : index
    %c0_99 = arith.constant 0 : index
    %241 = vector.load %arg16[%c4, %c0_99] : memref<8x128xf32, #tpu.memory_space<vmem>>, vector<2x128xf32>
    %c0_100 = arith.constant 0 : index
    %c0_101 = arith.constant 0 : index
    %c0_102 = arith.constant 0 : index
    %242 = vector.load %arg9[%c0_100, %c0_101, %c0_102] : memref<2x1x32xf32, #tpu.memory_space<vmem>>, vector<1x1x32xf32>
    %243 = vector.shape_cast %242 : vector<1x1x32xf32> to vector<1x32xf32>
    %c0_103 = arith.constant 0 : index
    %c0_104 = arith.constant 0 : index
    %c0_105 = arith.constant 0 : index
    %244 = vector.load %arg8[%c0_103, %c0_104, %c0_105] : memref<2x8x32xf32, #tpu.memory_space<vmem>>, vector<1x8x32xf32>
    %245 = vector.shape_cast %244 : vector<1x8x32xf32> to vector<8x32xf32>
    %c0_106 = arith.constant 0 : index
    %c0_107 = arith.constant 0 : index
    %c0_108 = arith.constant 0 : index
    %246 = vector.load %arg10[%c0_106, %c0_107, %c0_108] : memref<2x1x32xf32, #tpu.memory_space<vmem>>, vector<1x1x32xf32>
    %247 = vector.shape_cast %246 : vector<1x1x32xf32> to vector<1x32xf32>
    %c0_109 = arith.constant 0 : index
    %c0_110 = arith.constant 0 : index
    %248 = vector.load %arg5[%c0_109, %c0_110] : memref<1x32xf32, #tpu.memory_space<vmem>>, vector<1x32xf32>
    %249 = vector.extract_strided_slice %241 {offsets = [0, 0], sizes = [2, 32], strides = [1, 1]} : vector<2x128xf32> to vector<2x32xf32>
    %250 = vector.extract_strided_slice %240 {offsets = [0, 0], sizes = [2, 32], strides = [1, 1]} : vector<2x96xf32> to vector<2x32xf32>
    %251 = arith.addf %249, %250 : vector<2x32xf32>
    %252 = arith.negf %251 : vector<2x32xf32>
    %253 = math.exp %252 : vector<2x32xf32>
    %cst_111 = arith.constant 1.000000e+00 : f32
    %254 = vector.broadcast %cst_111 : f32 to vector<2x32xf32>
    %255 = arith.addf %254, %253 : vector<2x32xf32>
    %256 = arith.divf %254, %255 : vector<2x32xf32>
    %257 = vector.extract_strided_slice %241 {offsets = [0, 32], sizes = [2, 32], strides = [1, 1]} : vector<2x128xf32> to vector<2x32xf32>
    %258 = vector.extract_strided_slice %240 {offsets = [0, 32], sizes = [2, 32], strides = [1, 1]} : vector<2x96xf32> to vector<2x32xf32>
    %259 = arith.addf %257, %258 : vector<2x32xf32>
    %260 = arith.negf %259 : vector<2x32xf32>
    %261 = math.exp %260 : vector<2x32xf32>
    %cst_112 = arith.constant 1.000000e+00 : f32
    %262 = vector.broadcast %cst_112 : f32 to vector<2x32xf32>
    %263 = arith.addf %262, %261 : vector<2x32xf32>
    %264 = arith.divf %262, %263 : vector<2x32xf32>
    %265 = vector.extract_strided_slice %240 {offsets = [0, 64], sizes = [2, 32], strides = [1, 1]} : vector<2x96xf32> to vector<2x32xf32>
    %266 = vector.broadcast %248 : vector<1x32xf32> to vector<2x32xf32>
    %267 = arith.addf %265, %266 : vector<2x32xf32>
    %268 = vector.extract_strided_slice %241 {offsets = [0, 64], sizes = [2, 32], strides = [1, 1]} : vector<2x128xf32> to vector<2x32xf32>
    %269 = arith.mulf %256, %267 : vector<2x32xf32>
    %270 = arith.addf %268, %269 : vector<2x32xf32>
    %271 = math.tanh %270 : vector<2x32xf32>
    %cst_113 = arith.constant 1.000000e+00 : f32
    %272 = vector.broadcast %cst_113 : f32 to vector<2x32xf32>
    %273 = arith.subf %272, %264 : vector<2x32xf32>
    %274 = arith.mulf %273, %271 : vector<2x32xf32>
    %275 = arith.mulf %264, %237 : vector<2x32xf32>
    %276 = arith.addf %274, %275 : vector<2x32xf32>
    %277 = vector.broadcast %243 : vector<1x32xf32> to vector<2x32xf32>
    %278 = arith.mulf %277, %276 : vector<2x32xf32>
    %279 = vector.extract_strided_slice %241 {offsets = [0, 96], sizes = [2, 32], strides = [1, 1]} : vector<2x128xf32> to vector<2x32xf32>
    %280 = arith.addf %278, %279 : vector<2x32xf32>
    %cst_114 = arith.constant 0.000000e+00 : f32
    %281 = vector.broadcast %cst_114 : f32 to vector<2x32xf32>
    %282 = arith.maximumf %280, %281 : vector<2x32xf32>
    %283 = vector.extract_strided_slice %282 {offsets = [0, 0], sizes = [2, 8], strides = [1, 1]} : vector<2x32xf32> to vector<2x8xf32>
    %284 = vector.extract_strided_slice %282 {offsets = [0, 8], sizes = [2, 8], strides = [1, 1]} : vector<2x32xf32> to vector<2x8xf32>
    %285 = arith.maximumf %283, %284 : vector<2x8xf32>
    %286 = vector.extract_strided_slice %282 {offsets = [0, 16], sizes = [2, 8], strides = [1, 1]} : vector<2x32xf32> to vector<2x8xf32>
    %287 = arith.maximumf %285, %286 : vector<2x8xf32>
    %288 = vector.extract_strided_slice %282 {offsets = [0, 24], sizes = [2, 8], strides = [1, 1]} : vector<2x32xf32> to vector<2x8xf32>
    %289 = arith.maximumf %287, %288 : vector<2x8xf32>
    %cst_115 = arith.constant dense<0.000000e+00> : vector<2x32xf32>
    %290 = tpu.matmul %289, %245, %cst_115 {dimension_numbers = #tpu.dot_dimension_numbers<[1], [0], [0], [1], [0, 0, 1, 1], [], []>} : vector<2x8xf32>, vector<8x32xf32>, vector<2x32xf32> -> vector<2x32xf32>
    %291 = vector.broadcast %247 : vector<1x32xf32> to vector<2x32xf32>
    %292 = arith.addf %290, %291 : vector<2x32xf32>
    %293 = math.tanh %292 : vector<2x32xf32>
    %c0_116 = arith.constant 0 : index
    %c0_117 = arith.constant 0 : index
    %c0_118 = arith.constant 0 : index
    %294 = vector.load %arg6[%c0_116, %c0_117, %c0_118] : memref<1x32x224xf32, #tpu.memory_space<vmem>>, vector<1x32x224xf32>
    %295 = vector.shape_cast %294 : vector<1x32x224xf32> to vector<32x224xf32>
    %cst_119 = arith.constant dense<0.000000e+00> : vector<2x224xf32>
    %296 = tpu.matmul %293, %295, %cst_119 {dimension_numbers = #tpu.dot_dimension_numbers<[1], [0], [0], [1], [0, 0, 1, 1], [], []>} : vector<2x32xf32>, vector<32x224xf32>, vector<2x224xf32> -> vector<2x224xf32>
    %c0_120 = arith.constant 0 : index
    %c0_121 = arith.constant 0 : index
    %c0_122 = arith.constant 0 : index
    %297 = vector.load %arg7[%c0_120, %c0_121, %c0_122] : memref<1x1x224xf32, #tpu.memory_space<vmem>>, vector<1x1x224xf32>
    %298 = vector.shape_cast %297 : vector<1x1x224xf32> to vector<1x224xf32>
    %299 = vector.broadcast %298 : vector<1x224xf32> to vector<2x224xf32>
    %300 = arith.addf %296, %299 : vector<2x224xf32>
    %301 = vector.extract_strided_slice %300 {offsets = [0, 0], sizes = [2, 128], strides = [1, 1]} : vector<2x224xf32> to vector<2x128xf32>
    %302 = vector.extract_strided_slice %300 {offsets = [0, 128], sizes = [2, 96], strides = [1, 1]} : vector<2x224xf32> to vector<2x96xf32>
    %c1_123 = arith.constant 1 : index
    %c0_124 = arith.constant 0 : index
    %c0_125 = arith.constant 0 : index
    %303 = vector.load %arg9[%c1_123, %c0_124, %c0_125] : memref<2x1x32xf32, #tpu.memory_space<vmem>>, vector<1x1x32xf32>
    %304 = vector.shape_cast %303 : vector<1x1x32xf32> to vector<1x32xf32>
    %c1_126 = arith.constant 1 : index
    %c0_127 = arith.constant 0 : index
    %c0_128 = arith.constant 0 : index
    %305 = vector.load %arg8[%c1_126, %c0_127, %c0_128] : memref<2x8x32xf32, #tpu.memory_space<vmem>>, vector<1x8x32xf32>
    %306 = vector.shape_cast %305 : vector<1x8x32xf32> to vector<8x32xf32>
    %c1_129 = arith.constant 1 : index
    %c0_130 = arith.constant 0 : index
    %c0_131 = arith.constant 0 : index
    %307 = vector.load %arg10[%c1_129, %c0_130, %c0_131] : memref<2x1x32xf32, #tpu.memory_space<vmem>>, vector<1x1x32xf32>
    %308 = vector.shape_cast %307 : vector<1x1x32xf32> to vector<1x32xf32>
    %309 = vector.extract_strided_slice %301 {offsets = [0, 0], sizes = [2, 32], strides = [1, 1]} : vector<2x128xf32> to vector<2x32xf32>
    %310 = vector.extract_strided_slice %302 {offsets = [0, 0], sizes = [2, 32], strides = [1, 1]} : vector<2x96xf32> to vector<2x32xf32>
    %311 = arith.addf %309, %310 : vector<2x32xf32>
    %312 = arith.negf %311 : vector<2x32xf32>
    %313 = math.exp %312 : vector<2x32xf32>
    %cst_132 = arith.constant 1.000000e+00 : f32
    %314 = vector.broadcast %cst_132 : f32 to vector<2x32xf32>
    %315 = arith.addf %314, %313 : vector<2x32xf32>
    %316 = arith.divf %314, %315 : vector<2x32xf32>
    %317 = vector.extract_strided_slice %301 {offsets = [0, 32], sizes = [2, 32], strides = [1, 1]} : vector<2x128xf32> to vector<2x32xf32>
    %318 = vector.extract_strided_slice %302 {offsets = [0, 32], sizes = [2, 32], strides = [1, 1]} : vector<2x96xf32> to vector<2x32xf32>
    %319 = arith.addf %317, %318 : vector<2x32xf32>
    %320 = arith.negf %319 : vector<2x32xf32>
    %321 = math.exp %320 : vector<2x32xf32>
    %cst_133 = arith.constant 1.000000e+00 : f32
    %322 = vector.broadcast %cst_133 : f32 to vector<2x32xf32>
    %323 = arith.addf %322, %321 : vector<2x32xf32>
    %324 = arith.divf %322, %323 : vector<2x32xf32>
    %325 = vector.extract_strided_slice %302 {offsets = [0, 64], sizes = [2, 32], strides = [1, 1]} : vector<2x96xf32> to vector<2x32xf32>
    %326 = vector.extract_strided_slice %301 {offsets = [0, 64], sizes = [2, 32], strides = [1, 1]} : vector<2x128xf32> to vector<2x32xf32>
    %327 = arith.mulf %316, %325 : vector<2x32xf32>
    %328 = arith.addf %326, %327 : vector<2x32xf32>
    %329 = math.tanh %328 : vector<2x32xf32>
    %cst_134 = arith.constant 1.000000e+00 : f32
    %330 = vector.broadcast %cst_134 : f32 to vector<2x32xf32>
    %331 = arith.subf %330, %324 : vector<2x32xf32>
    %332 = arith.mulf %331, %329 : vector<2x32xf32>
    %333 = arith.mulf %324, %293 : vector<2x32xf32>
    %334 = arith.addf %332, %333 : vector<2x32xf32>
    %335 = vector.broadcast %304 : vector<1x32xf32> to vector<2x32xf32>
    %336 = arith.mulf %335, %334 : vector<2x32xf32>
    %337 = vector.extract_strided_slice %301 {offsets = [0, 96], sizes = [2, 32], strides = [1, 1]} : vector<2x128xf32> to vector<2x32xf32>
    %338 = arith.addf %336, %337 : vector<2x32xf32>
    %cst_135 = arith.constant 0.000000e+00 : f32
    %339 = vector.broadcast %cst_135 : f32 to vector<2x32xf32>
    %340 = arith.maximumf %338, %339 : vector<2x32xf32>
    %341 = vector.extract_strided_slice %340 {offsets = [0, 0], sizes = [2, 8], strides = [1, 1]} : vector<2x32xf32> to vector<2x8xf32>
    %342 = vector.extract_strided_slice %340 {offsets = [0, 8], sizes = [2, 8], strides = [1, 1]} : vector<2x32xf32> to vector<2x8xf32>
    %343 = arith.maximumf %341, %342 : vector<2x8xf32>
    %344 = vector.extract_strided_slice %340 {offsets = [0, 16], sizes = [2, 8], strides = [1, 1]} : vector<2x32xf32> to vector<2x8xf32>
    %345 = arith.maximumf %343, %344 : vector<2x8xf32>
    %346 = vector.extract_strided_slice %340 {offsets = [0, 24], sizes = [2, 8], strides = [1, 1]} : vector<2x32xf32> to vector<2x8xf32>
    %347 = arith.maximumf %345, %346 : vector<2x8xf32>
    %cst_136 = arith.constant dense<0.000000e+00> : vector<2x32xf32>
    %348 = tpu.matmul %347, %306, %cst_136 {dimension_numbers = #tpu.dot_dimension_numbers<[1], [0], [0], [1], [0, 0, 1, 1], [], []>} : vector<2x8xf32>, vector<8x32xf32>, vector<2x32xf32> -> vector<2x32xf32>
    %349 = vector.broadcast %308 : vector<1x32xf32> to vector<2x32xf32>
    %350 = arith.addf %348, %349 : vector<2x32xf32>
    %351 = math.tanh %350 : vector<2x32xf32>
    %c4_137 = arith.constant 4 : index
    %c0_138 = arith.constant 0 : index
    %352 = vector.load %arg15[%c4_137, %c0_138] : memref<8x32xf32, #tpu.memory_space<vmem>>, vector<2x32xf32>
    tpu.vector_store %arg15[%c4_137, %c0_138], %351 {strides = array<i32>} : memref<8x32xf32, #tpu.memory_space<vmem>>, vector<2x32xf32>,
    %c0_139 = arith.constant 0 : index
    %c0_140 = arith.constant 0 : index
    %353 = vector.load %arg4[%c0_139, %c0_140] : memref<32x96xf32, #tpu.memory_space<vmem>>, vector<32x96xf32>
    %cst_141 = arith.constant dense<0.000000e+00> : vector<2x96xf32>
    %354 = tpu.matmul %351, %353, %cst_141 {dimension_numbers = #tpu.dot_dimension_numbers<[1], [0], [0], [1], [0, 0, 1, 1], [], []>} : vector<2x32xf32>, vector<32x96xf32>, vector<2x96xf32> -> vector<2x96xf32>
    %c6 = arith.constant 6 : index
    %c0_142 = arith.constant 0 : index
    %355 = vector.load %arg16[%c6, %c0_142] : memref<8x128xf32, #tpu.memory_space<vmem>>, vector<2x128xf32>
    %c0_143 = arith.constant 0 : index
    %c0_144 = arith.constant 0 : index
    %c0_145 = arith.constant 0 : index
    %356 = vector.load %arg9[%c0_143, %c0_144, %c0_145] : memref<2x1x32xf32, #tpu.memory_space<vmem>>, vector<1x1x32xf32>
    %357 = vector.shape_cast %356 : vector<1x1x32xf32> to vector<1x32xf32>
    %c0_146 = arith.constant 0 : index
    %c0_147 = arith.constant 0 : index
    %c0_148 = arith.constant 0 : index
    %358 = vector.load %arg8[%c0_146, %c0_147, %c0_148] : memref<2x8x32xf32, #tpu.memory_space<vmem>>, vector<1x8x32xf32>
    %359 = vector.shape_cast %358 : vector<1x8x32xf32> to vector<8x32xf32>
    %c0_149 = arith.constant 0 : index
    %c0_150 = arith.constant 0 : index
    %c0_151 = arith.constant 0 : index
    %360 = vector.load %arg10[%c0_149, %c0_150, %c0_151] : memref<2x1x32xf32, #tpu.memory_space<vmem>>, vector<1x1x32xf32>
    %361 = vector.shape_cast %360 : vector<1x1x32xf32> to vector<1x32xf32>
    %c0_152 = arith.constant 0 : index
    %c0_153 = arith.constant 0 : index
    %362 = vector.load %arg5[%c0_152, %c0_153] : memref<1x32xf32, #tpu.memory_space<vmem>>, vector<1x32xf32>
    %363 = vector.extract_strided_slice %355 {offsets = [0, 0], sizes = [2, 32], strides = [1, 1]} : vector<2x128xf32> to vector<2x32xf32>
    %364 = vector.extract_strided_slice %354 {offsets = [0, 0], sizes = [2, 32], strides = [1, 1]} : vector<2x96xf32> to vector<2x32xf32>
    %365 = arith.addf %363, %364 : vector<2x32xf32>
    %366 = arith.negf %365 : vector<2x32xf32>
    %367 = math.exp %366 : vector<2x32xf32>
    %cst_154 = arith.constant 1.000000e+00 : f32
    %368 = vector.broadcast %cst_154 : f32 to vector<2x32xf32>
    %369 = arith.addf %368, %367 : vector<2x32xf32>
    %370 = arith.divf %368, %369 : vector<2x32xf32>
    %371 = vector.extract_strided_slice %355 {offsets = [0, 32], sizes = [2, 32], strides = [1, 1]} : vector<2x128xf32> to vector<2x32xf32>
    %372 = vector.extract_strided_slice %354 {offsets = [0, 32], sizes = [2, 32], strides = [1, 1]} : vector<2x96xf32> to vector<2x32xf32>
    %373 = arith.addf %371, %372 : vector<2x32xf32>
    %374 = arith.negf %373 : vector<2x32xf32>
    %375 = math.exp %374 : vector<2x32xf32>
    %cst_155 = arith.constant 1.000000e+00 : f32
    %376 = vector.broadcast %cst_155 : f32 to vector<2x32xf32>
    %377 = arith.addf %376, %375 : vector<2x32xf32>
    %378 = arith.divf %376, %377 : vector<2x32xf32>
    %379 = vector.extract_strided_slice %354 {offsets = [0, 64], sizes = [2, 32], strides = [1, 1]} : vector<2x96xf32> to vector<2x32xf32>
    %380 = vector.broadcast %362 : vector<1x32xf32> to vector<2x32xf32>
    %381 = arith.addf %379, %380 : vector<2x32xf32>
    %382 = vector.extract_strided_slice %355 {offsets = [0, 64], sizes = [2, 32], strides = [1, 1]} : vector<2x128xf32> to vector<2x32xf32>
    %383 = arith.mulf %370, %381 : vector<2x32xf32>
    %384 = arith.addf %382, %383 : vector<2x32xf32>
    %385 = math.tanh %384 : vector<2x32xf32>
    %cst_156 = arith.constant 1.000000e+00 : f32
    %386 = vector.broadcast %cst_156 : f32 to vector<2x32xf32>
    %387 = arith.subf %386, %378 : vector<2x32xf32>
    %388 = arith.mulf %387, %385 : vector<2x32xf32>
    %389 = arith.mulf %378, %351 : vector<2x32xf32>
    %390 = arith.addf %388, %389 : vector<2x32xf32>
    %391 = vector.broadcast %357 : vector<1x32xf32> to vector<2x32xf32>
    %392 = arith.mulf %391, %390 : vector<2x32xf32>
    %393 = vector.extract_strided_slice %355 {offsets = [0, 96], sizes = [2, 32], strides = [1, 1]} : vector<2x128xf32> to vector<2x32xf32>
    %394 = arith.addf %392, %393 : vector<2x32xf32>
    %cst_157 = arith.constant 0.000000e+00 : f32
    %395 = vector.broadcast %cst_157 : f32 to vector<2x32xf32>
    %396 = arith.maximumf %394, %395 : vector<2x32xf32>
    %397 = vector.extract_strided_slice %396 {offsets = [0, 0], sizes = [2, 8], strides = [1, 1]} : vector<2x32xf32> to vector<2x8xf32>
    %398 = vector.extract_strided_slice %396 {offsets = [0, 8], sizes = [2, 8], strides = [1, 1]} : vector<2x32xf32> to vector<2x8xf32>
    %399 = arith.maximumf %397, %398 : vector<2x8xf32>
    %400 = vector.extract_strided_slice %396 {offsets = [0, 16], sizes = [2, 8], strides = [1, 1]} : vector<2x32xf32> to vector<2x8xf32>
    %401 = arith.maximumf %399, %400 : vector<2x8xf32>
    %402 = vector.extract_strided_slice %396 {offsets = [0, 24], sizes = [2, 8], strides = [1, 1]} : vector<2x32xf32> to vector<2x8xf32>
    %403 = arith.maximumf %401, %402 : vector<2x8xf32>
    %cst_158 = arith.constant dense<0.000000e+00> : vector<2x32xf32>
    %404 = tpu.matmul %403, %359, %cst_158 {dimension_numbers = #tpu.dot_dimension_numbers<[1], [0], [0], [1], [0, 0, 1, 1], [], []>} : vector<2x8xf32>, vector<8x32xf32>, vector<2x32xf32> -> vector<2x32xf32>
    %405 = vector.broadcast %361 : vector<1x32xf32> to vector<2x32xf32>
    %406 = arith.addf %404, %405 : vector<2x32xf32>
    %407 = math.tanh %406 : vector<2x32xf32>
    %c0_159 = arith.constant 0 : index
    %c0_160 = arith.constant 0 : index
    %c0_161 = arith.constant 0 : index
    %408 = vector.load %arg6[%c0_159, %c0_160, %c0_161] : memref<1x32x224xf32, #tpu.memory_space<vmem>>, vector<1x32x224xf32>
    %409 = vector.shape_cast %408 : vector<1x32x224xf32> to vector<32x224xf32>
    %cst_162 = arith.constant dense<0.000000e+00> : vector<2x224xf32>
    %410 = tpu.matmul %407, %409, %cst_162 {dimension_numbers = #tpu.dot_dimension_numbers<[1], [0], [0], [1], [0, 0, 1, 1], [], []>} : vector<2x32xf32>, vector<32x224xf32>, vector<2x224xf32> -> vector<2x224xf32>
    %c0_163 = arith.constant 0 : index
    %c0_164 = arith.constant 0 : index
    %c0_165 = arith.constant 0 : index
    %411 = vector.load %arg7[%c0_163, %c0_164, %c0_165] : memref<1x1x224xf32, #tpu.memory_space<vmem>>, vector<1x1x224xf32>
    %412 = vector.shape_cast %411 : vector<1x1x224xf32> to vector<1x224xf32>
    %413 = vector.broadcast %412 : vector<1x224xf32> to vector<2x224xf32>
    %414 = arith.addf %410, %413 : vector<2x224xf32>
    %415 = vector.extract_strided_slice %414 {offsets = [0, 0], sizes = [2, 128], strides = [1, 1]} : vector<2x224xf32> to vector<2x128xf32>
    %416 = vector.extract_strided_slice %414 {offsets = [0, 128], sizes = [2, 96], strides = [1, 1]} : vector<2x224xf32> to vector<2x96xf32>
    %c1_166 = arith.constant 1 : index
    %c0_167 = arith.constant 0 : index
    %c0_168 = arith.constant 0 : index
    %417 = vector.load %arg9[%c1_166, %c0_167, %c0_168] : memref<2x1x32xf32, #tpu.memory_space<vmem>>, vector<1x1x32xf32>
    %418 = vector.shape_cast %417 : vector<1x1x32xf32> to vector<1x32xf32>
    %c1_169 = arith.constant 1 : index
    %c0_170 = arith.constant 0 : index
    %c0_171 = arith.constant 0 : index
    %419 = vector.load %arg8[%c1_169, %c0_170, %c0_171] : memref<2x8x32xf32, #tpu.memory_space<vmem>>, vector<1x8x32xf32>
    %420 = vector.shape_cast %419 : vector<1x8x32xf32> to vector<8x32xf32>
    %c1_172 = arith.constant 1 : index
    %c0_173 = arith.constant 0 : index
    %c0_174 = arith.constant 0 : index
    %421 = vector.load %arg10[%c1_172, %c0_173, %c0_174] : memref<2x1x32xf32, #tpu.memory_space<vmem>>, vector<1x1x32xf32>
    %422 = vector.shape_cast %421 : vector<1x1x32xf32> to vector<1x32xf32>
    %423 = vector.extract_strided_slice %415 {offsets = [0, 0], sizes = [2, 32], strides = [1, 1]} : vector<2x128xf32> to vector<2x32xf32>
    %424 = vector.extract_strided_slice %416 {offsets = [0, 0], sizes = [2, 32], strides = [1, 1]} : vector<2x96xf32> to vector<2x32xf32>
    %425 = arith.addf %423, %424 : vector<2x32xf32>
    %426 = arith.negf %425 : vector<2x32xf32>
    %427 = math.exp %426 : vector<2x32xf32>
    %cst_175 = arith.constant 1.000000e+00 : f32
    %428 = vector.broadcast %cst_175 : f32 to vector<2x32xf32>
    %429 = arith.addf %428, %427 : vector<2x32xf32>
    %430 = arith.divf %428, %429 : vector<2x32xf32>
    %431 = vector.extract_strided_slice %415 {offsets = [0, 32], sizes = [2, 32], strides = [1, 1]} : vector<2x128xf32> to vector<2x32xf32>
    %432 = vector.extract_strided_slice %416 {offsets = [0, 32], sizes = [2, 32], strides = [1, 1]} : vector<2x96xf32> to vector<2x32xf32>
    %433 = arith.addf %431, %432 : vector<2x32xf32>
    %434 = arith.negf %433 : vector<2x32xf32>
    %435 = math.exp %434 : vector<2x32xf32>
    %cst_176 = arith.constant 1.000000e+00 : f32
    %436 = vector.broadcast %cst_176 : f32 to vector<2x32xf32>
    %437 = arith.addf %436, %435 : vector<2x32xf32>
    %438 = arith.divf %436, %437 : vector<2x32xf32>
    %439 = vector.extract_strided_slice %416 {offsets = [0, 64], sizes = [2, 32], strides = [1, 1]} : vector<2x96xf32> to vector<2x32xf32>
    %440 = vector.extract_strided_slice %415 {offsets = [0, 64], sizes = [2, 32], strides = [1, 1]} : vector<2x128xf32> to vector<2x32xf32>
    %441 = arith.mulf %430, %439 : vector<2x32xf32>
    %442 = arith.addf %440, %441 : vector<2x32xf32>
    %443 = math.tanh %442 : vector<2x32xf32>
    %cst_177 = arith.constant 1.000000e+00 : f32
    %444 = vector.broadcast %cst_177 : f32 to vector<2x32xf32>
    %445 = arith.subf %444, %438 : vector<2x32xf32>
    %446 = arith.mulf %445, %443 : vector<2x32xf32>
    %447 = arith.mulf %438, %407 : vector<2x32xf32>
    %448 = arith.addf %446, %447 : vector<2x32xf32>
    %449 = vector.broadcast %418 : vector<1x32xf32> to vector<2x32xf32>
    %450 = arith.mulf %449, %448 : vector<2x32xf32>
    %451 = vector.extract_strided_slice %415 {offsets = [0, 96], sizes = [2, 32], strides = [1, 1]} : vector<2x128xf32> to vector<2x32xf32>
    %452 = arith.addf %450, %451 : vector<2x32xf32>
    %cst_178 = arith.constant 0.000000e+00 : f32
    %453 = vector.broadcast %cst_178 : f32 to vector<2x32xf32>
    %454 = arith.maximumf %452, %453 : vector<2x32xf32>
    %455 = vector.extract_strided_slice %454 {offsets = [0, 0], sizes = [2, 8], strides = [1, 1]} : vector<2x32xf32> to vector<2x8xf32>
    %456 = vector.extract_strided_slice %454 {offsets = [0, 8], sizes = [2, 8], strides = [1, 1]} : vector<2x32xf32> to vector<2x8xf32>
    %457 = arith.maximumf %455, %456 : vector<2x8xf32>
    %458 = vector.extract_strided_slice %454 {offsets = [0, 16], sizes = [2, 8], strides = [1, 1]} : vector<2x32xf32> to vector<2x8xf32>
    %459 = arith.maximumf %457, %458 : vector<2x8xf32>
    %460 = vector.extract_strided_slice %454 {offsets = [0, 24], sizes = [2, 8], strides = [1, 1]} : vector<2x32xf32> to vector<2x8xf32>
    %461 = arith.maximumf %459, %460 : vector<2x8xf32>
    %cst_179 = arith.constant dense<0.000000e+00> : vector<2x32xf32>
    %462 = tpu.matmul %461, %420, %cst_179 {dimension_numbers = #tpu.dot_dimension_numbers<[1], [0], [0], [1], [0, 0, 1, 1], [], []>} : vector<2x8xf32>, vector<8x32xf32>, vector<2x32xf32> -> vector<2x32xf32>
    %463 = vector.broadcast %422 : vector<1x32xf32> to vector<2x32xf32>
    %464 = arith.addf %462, %463 : vector<2x32xf32>
    %465 = math.tanh %464 : vector<2x32xf32>
    %c6_180 = arith.constant 6 : index
    %c0_181 = arith.constant 0 : index
    %466 = vector.load %arg15[%c6_180, %c0_181] : memref<8x32xf32, #tpu.memory_space<vmem>>, vector<2x32xf32>
    tpu.vector_store %arg15[%c6_180, %c0_181], %465 {strides = array<i32>} : memref<8x32xf32, #tpu.memory_space<vmem>>, vector<2x32xf32>,
    %c0_182 = arith.constant 0 : index
    %c0_183 = arith.constant 0 : index
    %467 = vector.load %arg14[%c0_182, %c0_183] : memref<2x32xf32, #tpu.memory_space<vmem>>, vector<2x32xf32>
    tpu.vector_store %arg14[%c0_182, %c0_183], %465 {strides = array<i32>} : memref<2x32xf32, #tpu.memory_space<vmem>>, vector<2x32xf32>,
    %c0_184 = arith.constant 0 : index
    %c0_185 = arith.constant 0 : index
    %468 = vector.load %arg15[%c0_184, %c0_185] : memref<8x32xf32, #tpu.memory_space<vmem>>, vector<8x32xf32>
    %c0_186 = arith.constant 0 : index
    %c0_187 = arith.constant 0 : index
    %469 = vector.load %arg11[%c0_186, %c0_187] : memref<32x8xf32, #tpu.memory_space<vmem>>, vector<32x8xf32>
    %cst_188 = arith.constant dense<0.000000e+00> : vector<8x8xf32>
    %470 = tpu.matmul %468, %469, %cst_188 {dimension_numbers = #tpu.dot_dimension_numbers<[1], [0], [0], [1], [0, 0, 1, 1], [], []>} : vector<8x32xf32>, vector<32x8xf32>, vector<8x8xf32> -> vector<8x8xf32>
    %c0_189 = arith.constant 0 : index
    %c0_190 = arith.constant 0 : index
    %471 = vector.load %arg12[%c0_189, %c0_190] : memref<1x8xf32, #tpu.memory_space<vmem>>, vector<1x8xf32>
    %472 = vector.broadcast %471 : vector<1x8xf32> to vector<8x8xf32>
    %473 = arith.addf %470, %472 : vector<8x8xf32>
    %c0_191 = arith.constant 0 : index
    %c0_192 = arith.constant 0 : index
    %474 = vector.load %arg13[%c0_191, %c0_192] : memref<8x8xf32, #tpu.memory_space<vmem>>, vector<8x8xf32>
    tpu.vector_store %arg13[%c0_191, %c0_192], %473 {strides = array<i32>} : memref<8x8xf32, #tpu.memory_space<vmem>>, vector<8x8xf32>,
    return
  }
  func.func @transform_0(%arg0: i32) -> (i32, i32) {
    %c0_i32 = arith.constant 0 : i32
    %c0_i32_0 = arith.constant 0 : i32
    return %arg0, %c0_i32 : i32, i32
  }
  func.func @transform_1(%arg0: i32) -> (i32, i32) {
    %c0_i32 = arith.constant 0 : i32
    %c0_i32_0 = arith.constant 0 : i32
    %c0_i32_1 = arith.constant 0 : i32
    return %c0_i32, %c0_i32_0 : i32, i32
  }
  func.func @transform_2(%arg0: i32) -> (i32, i32) {
    %c0_i32 = arith.constant 0 : i32
    %c0_i32_0 = arith.constant 0 : i32
    %c0_i32_1 = arith.constant 0 : i32
    return %c0_i32, %c0_i32_0 : i32, i32
  }
  func.func @transform_3(%arg0: i32) -> (i32, i32) {
    %c0_i32 = arith.constant 0 : i32
    %c0_i32_0 = arith.constant 0 : i32
    %c0_i32_1 = arith.constant 0 : i32
    return %c0_i32, %c0_i32_0 : i32, i32
  }
  func.func @transform_4(%arg0: i32) -> (i32, i32) {
    %c0_i32 = arith.constant 0 : i32
    %c0_i32_0 = arith.constant 0 : i32
    %c0_i32_1 = arith.constant 0 : i32
    return %c0_i32, %c0_i32_0 : i32, i32
  }
  func.func @transform_5(%arg0: i32) -> (i32, i32, i32) {
    %c0_i32 = arith.constant 0 : i32
    %c0_i32_0 = arith.constant 0 : i32
    %c0_i32_1 = arith.constant 0 : i32
    %c0_i32_2 = arith.constant 0 : i32
    return %c0_i32, %c0_i32_0, %c0_i32_1 : i32, i32, i32
  }
  func.func @transform_6(%arg0: i32) -> (i32, i32, i32) {
    %c0_i32 = arith.constant 0 : i32
    %c0_i32_0 = arith.constant 0 : i32
    %c0_i32_1 = arith.constant 0 : i32
    %c0_i32_2 = arith.constant 0 : i32
    return %c0_i32, %c0_i32_0, %c0_i32_1 : i32, i32, i32
  }
  func.func @transform_7(%arg0: i32) -> (i32, i32, i32) {
    %c0_i32 = arith.constant 0 : i32
    %c0_i32_0 = arith.constant 0 : i32
    %c0_i32_1 = arith.constant 0 : i32
    %c0_i32_2 = arith.constant 0 : i32
    return %c0_i32, %c0_i32_0, %c0_i32_1 : i32, i32, i32
  }
  func.func @transform_8(%arg0: i32) -> (i32, i32, i32) {
    %c0_i32 = arith.constant 0 : i32
    %c0_i32_0 = arith.constant 0 : i32
    %c0_i32_1 = arith.constant 0 : i32
    %c0_i32_2 = arith.constant 0 : i32
    return %c0_i32, %c0_i32_0, %c0_i32_1 : i32, i32, i32
  }
  func.func @transform_9(%arg0: i32) -> (i32, i32, i32) {
    %c0_i32 = arith.constant 0 : i32
    %c0_i32_0 = arith.constant 0 : i32
    %c0_i32_1 = arith.constant 0 : i32
    %c0_i32_2 = arith.constant 0 : i32
    return %c0_i32, %c0_i32_0, %c0_i32_1 : i32, i32, i32
  }
  func.func @transform_10(%arg0: i32) -> (i32, i32) {
    %c0_i32 = arith.constant 0 : i32
    %c0_i32_0 = arith.constant 0 : i32
    %c0_i32_1 = arith.constant 0 : i32
    return %c0_i32, %c0_i32_0 : i32, i32
  }
  func.func @transform_11(%arg0: i32) -> (i32, i32) {
    %c0_i32 = arith.constant 0 : i32
    %c0_i32_0 = arith.constant 0 : i32
    %c0_i32_1 = arith.constant 0 : i32
    return %c0_i32, %c0_i32_0 : i32, i32
  }
  func.func @transform_12(%arg0: i32) -> (i32, i32) {
    %c0_i32 = arith.constant 0 : i32
    %c0_i32_0 = arith.constant 0 : i32
    return %arg0, %c0_i32 : i32, i32
  }
}

</mosaic_0001>

<llo_original>
// kernel: tpu_custom_call.1
$region0: #{tpu_custom_call.1}
  #allocation0 [shape = 'u32[]', space=smem, size = 0x4, offset = 0x4, fixed_abs, tag = 'smem constant byte address 0x4 - core index']
  #allocation1 [shape = 'u32[144,128]{1,0:T(1,128)}', space=vmem, size = 0x12000, scoped, tag = 'internal scratch']
  #allocation2 [shape = 'f32[2,32]{1,0:T(2,128)}', space=vmem, size = 0x400, scoped, tag = 'scratch operand']
  #allocation3 [shape = 'f32[8,32]{1,0:T(8,128)}', space=vmem, size = 0x1000, scoped, tag = 'scratch operand']
  #allocation4 [shape = 'f32[8,128]{1,0:T(8,128)}', space=vmem, size = 0x1000, scoped, tag = 'scratch operand']
  %s0 = inlined_call_operand.vmem [shape: f32[16,16], index: 0, kind: input, shape index: {}]
  %s1 = inlined_call_operand.hbm [shape: f32[16,128], index: 1, kind: input, shape index: {}]
  %s2 = inlined_call_operand.hbm [shape: f32[1,128], index: 2, kind: input, shape index: {}]
  %s3 = inlined_call_operand.vmem [shape: f32[32,96], index: 3, kind: input, shape index: {}]
  %s4 = inlined_call_operand.hbm [shape: f32[1,32], index: 4, kind: input, shape index: {}]
  %s5 = inlined_call_operand.hbm [shape: f32[1,32,224], index: 5, kind: input, shape index: {}]
  %s6 = inlined_call_operand.vmem [shape: f32[1,1,224], index: 6, kind: input, shape index: {}]
  %s7 = inlined_call_operand.vmem [shape: f32[2,8,32], index: 7, kind: input, shape index: {}]
  %s8 = inlined_call_operand.hbm [shape: f32[2,1,32], index: 8, kind: input, shape index: {}]
  %s9 = inlined_call_operand.hbm [shape: f32[2,1,32], index: 9, kind: input, shape index: {}]
  %s10 = inlined_call_operand.vmem [shape: f32[32,8], index: 10, kind: input, shape index: {}]
  %s11 = inlined_call_operand.vmem [shape: f32[1,8], index: 11, kind: input, shape index: {}]
  %s12 = inlined_call_operand.vmem [shape: f32[16,8], index: 12, kind: output, shape index: {}]
  %s13 = sld [smem:[#allocation0]]
  $region109: #{tpu_custom_call.1} parent=0
    _
  %s15 = ssub.s32 1, %s13
  %s16 = scalar_select 0, %s15, %s13
  $region1: #{tpu_custom_call.1} parent=0
    #allocation5 [shape = 'u8[8192]{0}', space=vmem, size = 0x2000, scoped, tag = 'input window, operand 1, single buffered']
    #allocation6 [shape = 's32[2]{0}', space=sflag, size = 0x8, scoped, tag = 'scoped memory for tpu_custom_call.1']
    #allocation7 [shape = 'u8[512]{0}', space=vmem, size = 0x400, scoped, tag = 'input window, operand 2, single buffered']
    #allocation8 [shape = 's32[1]{0}', space=sflag, size = 0x4, scoped, tag = 'scoped memory for tpu_custom_call.1']
    #allocation9 [shape = 'u8[512]{0}', space=vmem, size = 0x400, scoped, tag = 'input window, operand 4, single buffered']
    #allocation10 [shape = 'u8[32768]{0}', space=vmem, size = 0x8000, scoped, tag = 'input window, operand 5, single buffered']
    #allocation11 [shape = 's32[1]{0}', space=sflag, size = 0x4, scoped, tag = 'scoped memory for tpu_custom_call.1']
    #allocation12 [shape = 'u8[1024]{0}', space=vmem, size = 0x400, scoped, tag = 'input window, operand 8, single buffered']
    #allocation13 [shape = 'u8[1024]{0}', space=vmem, size = 0x400, scoped, tag = 'input window, operand 9, single buffered']
    #allocation14 [shape = 's32[1]{0}', space=sflag, size = 0x4, scoped, tag = 'scoped memory for tpu_custom_call.1']
    %17 = vsyncpa [#allocation6], 0
    %18 = vsyncpa [#allocation8], 0
    %19 = vsyncpa [#allocation11], 0
    %20 = vsyncpa [#allocation14], 0
    loop: start=0, step=1, limit=4
    $region2: #{tpu_custom_call.1} parent=1 // loop_pre_header
      _
    $region3: #{tpu_custom_call.1} parent=1 // loop_header
      %s22 = sphi 0, %s26
      %p23 = scmp.ge.s32.totalorder %s22, 4
      %s32 = sphi 0, %s34
      %s35 = sphi 0, %s32
      %s36 = sphi 0, %s35
      %s52 = sphi 0, %s36
      %s56 = sphi 0, %s56
      %s58 = sphi 0, %s56
      %s59 = sphi 0, %s58
      %s73 = sphi 0, %s59
      %s77 = sphi 0, %s77
      %s79 = sphi 0, %s77
      %s80 = sphi 0, %s79
      %s94 = sphi 0, %s80
      %s98 = sphi 0, %s98
      %s100 = sphi 0, %s98
      %s101 = sphi 0, %s100
      %s115 = sphi 0, %s101
      %s119 = sphi 0, %s119
      %s121 = sphi 0, %s119
      %s122 = sphi 0, %s121
      %s136 = sphi 0, %s122
      %s140 = sphi 0, %s140
      %s142 = sphi 0, %s140
      %s143 = sphi 0, %s142
      %s157 = sphi 0, %s143
      %s161 = sphi 0, %s161
      %s163 = sphi 0, %s161
      %s164 = sphi 0, %s163
      %s178 = sphi 0, %s164
      %s182 = sphi 0, %s182
      %s184 = sphi 0, %s182
      %s185 = sphi 0, %s184
      %s199 = sphi 0, %s185
      %s203 = sphi 0, %s203
      %s205 = sphi 0, %s203
      %s206 = sphi 0, %s205
      %s220 = sphi 0, %s206
      %s224 = sphi 0, %s224
      %s226 = sphi 0, %s224
      %s227 = sphi 0, %s226
      %s241 = sphi 0, %s227
      %s245 = sphi 0, %s245
      %s247 = sphi 0, %s245
      %s248 = sphi 0, %s247
      %s262 = sphi 0, %s248
      %s266 = sphi 0, %s266
      %s268 = sphi 0, %s266
      %s269 = sphi 0, %s268
      %s283 = sphi 0, %s269
      %s289 = sphi 0, %s291
      %s292 = sphi 0, %s289
      %s293 = sphi 0, %s292
      %s309 = sphi 0, %s293
    $region4: #{tpu_custom_call.1} parent=1 // loop_header_branch
      %25 = sbr.rel (%p23) target = $region8
    $region5: #{tpu_custom_call.1} parent=1 // loop_body
      %s27 = ssub.s32 %s22, 1
      %s28 = ssub.s32 %s22, 2
      %s29 = sadd.s32 %s22, 1
      %s30 = ssub.s32 %s22, %s29
      %p31 = scmp.eq.s32.totalorder %s30, 0
      %s33 = sadd.s32 %s32, 1
      %s34 = scalar_select %p31, %s32, %s33
      %p37 = pneg %p31
      %p38 = scmp.eq.s32.totalorder %s22, 1
      %p39 = por %p37, %p38
      %p40 = scmp.ne.s32.totalorder %s32, %s35
      %p41 = scmp.eq.s32.totalorder %s22, 0
      %p42 = por %p40, %p41
      %p43 = scmp.ne.s32.totalorder %s32, %s35
      %p44 = scmp.eq.s32.totalorder %s27, 1
      %p45 = por %p43, %p44
      %p46 = scmp.ne.s32.totalorder %s35, %s36
      %p47 = scmp.eq.s32.totalorder %s27, 0
      %p48 = por %p46, %p47
      %p49 = scmp.ne.s32.totalorder %s35, %s36
      %p50 = scmp.eq.s32.totalorder %s28, 1
      %p51 = por %p49, %p50
      %p53 = scmp.ne.s32.totalorder %s36, %s52
      %p54 = scmp.eq.s32.totalorder %s28, 0
      %p55 = por %p53, %p54
      %s57 = sadd.s32 %s56, 1
      %p60 = scmp.eq.s32.totalorder %s22, 1
      %p61 = scmp.ne.s32.totalorder %s56, %s58
      %p62 = scmp.eq.s32.totalorder %s22, 0
      %p63 = por %p61, %p62
      %p64 = scmp.ne.s32.totalorder %s56, %s58
      %p65 = scmp.eq.s32.totalorder %s27, 1
      %p66 = por %p64, %p65
      %p67 = scmp.ne.s32.totalorder %s58, %s59
      %p68 = scmp.eq.s32.totalorder %s27, 0
      %p69 = por %p67, %p68
      %p70 = scmp.ne.s32.totalorder %s58, %s59
      %p71 = scmp.eq.s32.totalorder %s28, 1
      %p72 = por %p70, %p71
      %p74 = scmp.ne.s32.totalorder %s59, %s73
      %p75 = scmp.eq.s32.totalorder %s28, 0
      %p76 = por %p74, %p75
      %s78 = sadd.s32 %s77, 1
      %p81 = scmp.eq.s32.totalorder %s22, 1
      %p82 = scmp.ne.s32.totalorder %s77, %s79
      %p83 = scmp.eq.s32.totalorder %s22, 0
      %p84 = por %p82, %p83
      %p85 = scmp.ne.s32.totalorder %s77, %s79
      %p86 = scmp.eq.s32.totalorder %s27, 1
      %p87 = por %p85, %p86
      %p88 = scmp.ne.s32.totalorder %s79, %s80
      %p89 = scmp.eq.s32.totalorder %s27, 0
      %p90 = por %p88, %p89
      %p91 = scmp.ne.s32.totalorder %s79, %s80
      %p92 = scmp.eq.s32.totalorder %s28, 1
      %p93 = por %p91, %p92
      %p95 = scmp.ne.s32.totalorder %s80, %s94
      %p96 = scmp.eq.s32.totalorder %s28, 0
      %p97 = por %p95, %p96
      %s99 = sadd.s32 %s98, 1
      %p102 = scmp.eq.s32.totalorder %s22, 1
      %p103 = scmp.ne.s32.totalorder %s98, %s100
      %p104 = scmp.eq.s32.totalorder %s22, 0
      %p105 = por %p103, %p104
      %p106 = scmp.ne.s32.totalorder %s98, %s100
      %p107 = scmp.eq.s32.totalorder %s27, 1
      %p108 = por %p106, %p107
      %p109 = scmp.ne.s32.totalorder %s100, %s101
      %p110 = scmp.eq.s32.totalorder %s27, 0
      %p111 = por %p109, %p110
      %p112 = scmp.ne.s32.totalorder %s100, %s101
      %p113 = scmp.eq.s32.totalorder %s28, 1
      %p114 = por %p112, %p113
      %p116 = scmp.ne.s32.totalorder %s101, %s115
      %p117 = scmp.eq.s32.totalorder %s28, 0
      %p118 = por %p116, %p117
      %s120 = sadd.s32 %s119, 1
      %p123 = scmp.eq.s32.totalorder %s22, 1
      %p124 = scmp.ne.s32.totalorder %s119, %s121
      %p125 = scmp.eq.s32.totalorder %s22, 0
      %p126 = por %p124, %p125
      %p127 = scmp.ne.s32.totalorder %s119, %s121
      %p128 = scmp.eq.s32.totalorder %s27, 1
      %p129 = por %p127, %p128
      %p130 = scmp.ne.s32.totalorder %s121, %s122
      %p131 = scmp.eq.s32.totalorder %s27, 0
      %p132 = por %p130, %p131
      %p133 = scmp.ne.s32.totalorder %s121, %s122
      %p134 = scmp.eq.s32.totalorder %s28, 1
      %p135 = por %p133, %p134
      %p137 = scmp.ne.s32.totalorder %s122, %s136
      %p138 = scmp.eq.s32.totalorder %s28, 0
      %p139 = por %p137, %p138
      %s141 = sadd.s32 %s140, 1
      %p144 = scmp.eq.s32.totalorder %s22, 1
      %p145 = scmp.ne.s32.totalorder %s140, %s142
      %p146 = scmp.eq.s32.totalorder %s22, 0
      %p147 = por %p145, %p146
      %p148 = scmp.ne.s32.totalorder %s140, %s142
      %p149 = scmp.eq.s32.totalorder %s27, 1
      %p150 = por %p148, %p149
      %p151 = scmp.ne.s32.totalorder %s142, %s143
      %p152 = scmp.eq.s32.totalorder %s27, 0
      %p153 = por %p151, %p152
      %p154 = scmp.ne.s32.totalorder %s142, %s143
      %p155 = scmp.eq.s32.totalorder %s28, 1
      %p156 = por %p154, %p155
      %p158 = scmp.ne.s32.totalorder %s143, %s157
      %p159 = scmp.eq.s32.totalorder %s28, 0
      %p160 = por %p158, %p159
      %s162 = sadd.s32 %s161, 1
      %p165 = scmp.eq.s32.totalorder %s22, 1
      %p166 = scmp.ne.s32.totalorder %s161, %s163
      %p167 = scmp.eq.s32.totalorder %s22, 0
      %p168 = por %p166, %p167
      %p169 = scmp.ne.s32.totalorder %s161, %s163
      %p170 = scmp.eq.s32.totalorder %s27, 1
      %p171 = por %p169, %p170
      %p172 = scmp.ne.s32.totalorder %s163, %s164
      %p173 = scmp.eq.s32.totalorder %s27, 0
      %p174 = por %p172, %p173
      %p175 = scmp.ne.s32.totalorder %s163, %s164
      %p176 = scmp.eq.s32.totalorder %s28, 1
      %p177 = por %p175, %p176
      %p179 = scmp.ne.s32.totalorder %s164, %s178
      %p180 = scmp.eq.s32.totalorder %s28, 0
      %p181 = por %p179, %p180
      %s183 = sadd.s32 %s182, 1
      %p186 = scmp.eq.s32.totalorder %s22, 1
      %p187 = scmp.ne.s32.totalorder %s182, %s184
      %p188 = scmp.eq.s32.totalorder %s22, 0
      %p189 = por %p187, %p188
      %p190 = scmp.ne.s32.totalorder %s182, %s184
      %p191 = scmp.eq.s32.totalorder %s27, 1
      %p192 = por %p190, %p191
      %p193 = scmp.ne.s32.totalorder %s184, %s185
      %p194 = scmp.eq.s32.totalorder %s27, 0
      %p195 = por %p193, %p194
      %p196 = scmp.ne.s32.totalorder %s184, %s185
      %p197 = scmp.eq.s32.totalorder %s28, 1
      %p198 = por %p196, %p197
      %p200 = scmp.ne.s32.totalorder %s185, %s199
      %p201 = scmp.eq.s32.totalorder %s28, 0
      %p202 = por %p200, %p201
      %s204 = sadd.s32 %s203, 1
      %p207 = scmp.eq.s32.totalorder %s22, 1
      %p208 = scmp.ne.s32.totalorder %s203, %s205
      %p209 = scmp.eq.s32.totalorder %s22, 0
      %p210 = por %p208, %p209
      %p211 = scmp.ne.s32.totalorder %s203, %s205
      %p212 = scmp.eq.s32.totalorder %s27, 1
      %p213 = por %p211, %p212
      %p214 = scmp.ne.s32.totalorder %s205, %s206
      %p215 = scmp.eq.s32.totalorder %s27, 0
      %p216 = por %p214, %p215
      %p217 = scmp.ne.s32.totalorder %s205, %s206
      %p218 = scmp.eq.s32.totalorder %s28, 1
      %p219 = por %p217, %p218
      %p221 = scmp.ne.s32.totalorder %s206, %s220
      %p222 = scmp.eq.s32.totalorder %s28, 0
      %p223 = por %p221, %p222
      %s225 = sadd.s32 %s224, 1
      %p228 = scmp.eq.s32.totalorder %s22, 1
      %p229 = scmp.ne.s32.totalorder %s224, %s226
      %p230 = scmp.eq.s32.totalorder %s22, 0
      %p231 = por %p229, %p230
      %p232 = scmp.ne.s32.totalorder %s224, %s226
      %p233 = scmp.eq.s32.totalorder %s27, 1
      %p234 = por %p232, %p233
      %p235 = scmp.ne.s32.totalorder %s226, %s227
      %p236 = scmp.eq.s32.totalorder %s27, 0
      %p237 = por %p235, %p236
      %p238 = scmp.ne.s32.totalorder %s226, %s227
      %p239 = scmp.eq.s32.totalorder %s28, 1
      %p240 = por %p238, %p239
      %p242 = scmp.ne.s32.totalorder %s227, %s241
      %p243 = scmp.eq.s32.totalorder %s28, 0
      %p244 = por %p242, %p243
      %s246 = sadd.s32 %s245, 1
      %p249 = scmp.eq.s32.totalorder %s22, 1
      %p250 = scmp.ne.s32.totalorder %s245, %s247
      %p251 = scmp.eq.s32.totalorder %s22, 0
      %p252 = por %p250, %p251
      %p253 = scmp.ne.s32.totalorder %s245, %s247
      %p254 = scmp.eq.s32.totalorder %s27, 1
      %p255 = por %p253, %p254
      %p256 = scmp.ne.s32.totalorder %s247, %s248
      %p257 = scmp.eq.s32.totalorder %s27, 0
      %p258 = por %p256, %p257
      %p259 = scmp.ne.s32.totalorder %s247, %s248
      %p260 = scmp.eq.s32.totalorder %s28, 1
      %p261 = por %p259, %p260
      %p263 = scmp.ne.s32.totalorder %s248, %s262
      %p264 = scmp.eq.s32.totalorder %s28, 0
      %p265 = por %p263, %p264
      %s267 = sadd.s32 %s266, 1
      %p270 = scmp.eq.s32.totalorder %s22, 1
      %p271 = scmp.ne.s32.totalorder %s266, %s268
      %p272 = scmp.eq.s32.totalorder %s22, 0
      %p273 = por %p271, %p272
      %p274 = scmp.ne.s32.totalorder %s266, %s268
      %p275 = scmp.eq.s32.totalorder %s27, 1
      %p276 = por %p274, %p275
      %p277 = scmp.ne.s32.totalorder %s268, %s269
      %p278 = scmp.eq.s32.totalorder %s27, 0
      %p279 = por %p277, %p278
      %p280 = scmp.ne.s32.totalorder %s268, %s269
      %p281 = scmp.eq.s32.totalorder %s28, 1
      %p282 = por %p280, %p281
      %p284 = scmp.ne.s32.totalorder %s269, %s283
      %p285 = scmp.eq.s32.totalorder %s28, 0
      %p286 = por %p284, %p285
      %s287 = ssub.s32 %s22, %s29
      %p288 = scmp.eq.s32.totalorder %s287, 0
      %s290 = sadd.s32 %s289, 1
      %s291 = scalar_select %p288, %s289, %s290
      %p294 = pneg %p288
      %p295 = scmp.eq.s32.totalorder %s22, 1
      %p296 = por %p294, %p295
      %p297 = scmp.ne.s32.totalorder %s289, %s292
      %p298 = scmp.eq.s32.totalorder %s22, 0
      %p299 = por %p297, %p298
      %p300 = scmp.ne.s32.totalorder %s289, %s292
      %p301 = scmp.eq.s32.totalorder %s27, 1
      %p302 = por %p300, %p301
      %p303 = scmp.ne.s32.totalorder %s292, %s293
      %p304 = scmp.eq.s32.totalorder %s27, 0
      %p305 = por %p303, %p304
      %p306 = scmp.ne.s32.totalorder %s292, %s293
      %p307 = scmp.eq.s32.totalorder %s28, 1
      %p308 = por %p306, %p307
      %p310 = scmp.ne.s32.totalorder %s293, %s309
      %p311 = scmp.eq.s32.totalorder %s28, 0
      %p312 = por %p310, %p311
      %p313 = scmp.le.s32.totalorder 1, %s22
      %p314 = scmp.lt.s32.totalorder %s22, 3
      %p315 = pnand %p313, %p314
      %p316 = pneg %p315
      // Predicated region
      $region9: #{tpu_custom_call.1} parent=5 // pred_check
        _
      $region10: #{tpu_custom_call.1} parent=5 // pred_check_branch
        %318 = sbr.rel (%p315) target = $region12
      $region11: #{tpu_custom_call.1} parent=5 // pred_region
        %s319 = ssub.s32 %s22, 1
        // Predicated region
        $region13: #{tpu_custom_call.1} parent=11 // pred_check
          %p320 = pneg %p69
        $region14: #{tpu_custom_call.1} parent=11 // pred_check_branch
          %322 = sbr.rel (%p320) target = $region16
        $region15: #{tpu_custom_call.1} parent=11 // pred_region
          %s324 = ssub.s32 256, 256
          %325 = vsyncadd [#allocation6], %s324
          %s326 = sshll.u32 [#allocation5], 4
          %s327 = int_to_ptr.vmem [resolvable:$true] %s326
          %332 = dma.hbm_to_vmem [thread:$0]  %s1, 256, %s327, [#allocation6], 128, 128, 8
        $region16: #{tpu_custom_call.1} parent=11 // pred_fallthru
          _
        // Predicated region
        $region17: #{tpu_custom_call.1} parent=11 // pred_check
          %p333 = pneg %p90
        $region18: #{tpu_custom_call.1} parent=11 // pred_check_branch
          %335 = sbr.rel (%p333) target = $region20
        $region19: #{tpu_custom_call.1} parent=11 // pred_region
          %s337 = ssub.s32 16, 16
          %338 = vsyncadd [#allocation8], %s337
          %s340 = sshll.u32 [#allocation7], 4
          %s341 = int_to_ptr.vmem [resolvable:$true] %s340
          %343 = dma.hbm_to_vmem [thread:$0]  %s2, 16, %s341, [#allocation8]
        $region20: #{tpu_custom_call.1} parent=11 // pred_fallthru
          _
        // Predicated region
        $region21: #{tpu_custom_call.1} parent=11 // pred_check
          %p344 = pneg %p111
        $region22: #{tpu_custom_call.1} parent=11 // pred_check_branch
          %346 = sbr.rel (%p344) target = $region24
        $region23: #{tpu_custom_call.1} parent=11 // pred_region
          _
        $region24: #{tpu_custom_call.1} parent=11 // pred_fallthru
          _
        // Predicated region
        $region25: #{tpu_custom_call.1} parent=11 // pred_check
          %p347 = pneg %p132
        $region26: #{tpu_custom_call.1} parent=11 // pred_check_branch
          %349 = sbr.rel (%p347) target = $region28
        $region27: #{tpu_custom_call.1} parent=11 // pred_region
          %s351 = ssub.s32 16, 16
          %352 = vsyncadd [#allocation8], %s351
          %s354 = sshll.u32 [#allocation9], 4
          %s355 = int_to_ptr.vmem [resolvable:$true] %s354
          %357 = dma.hbm_to_vmem [thread:$0]  %s4, 16, %s355, [#allocation8]
        $region28: #{tpu_custom_call.1} parent=11 // pred_fallthru
          _
        // Predicated region
        $region29: #{tpu_custom_call.1} parent=11 // pred_check
          %p358 = pneg %p153
        $region30: #{tpu_custom_call.1} parent=11 // pred_check_branch
          %360 = sbr.rel (%p358) target = $region32
        $region31: #{tpu_custom_call.1} parent=11 // pred_region
          %s362 = ssub.s32 1024, 1024
          %363 = vsyncadd [#allocation11], %s362
          %s364 = sshll.u32 [#allocation10], 4
          %s365 = int_to_ptr.vmem [resolvable:$true] %s364
          %370 = dma.hbm_to_vmem [thread:$0]  %s5, 1024, %s365, [#allocation11], 256, 256, 16
        $region32: #{tpu_custom_call.1} parent=11 // pred_fallthru
          _
        // Predicated region
        $region33: #{tpu_custom_call.1} parent=11 // pred_check
          %p371 = pneg %p174
        $region34: #{tpu_custom_call.1} parent=11 // pred_check_branch
          %373 = sbr.rel (%p371) target = $region36
        $region35: #{tpu_custom_call.1} parent=11 // pred_region
          _
        $region36: #{tpu_custom_call.1} parent=11 // pred_fallthru
          _
        // Predicated region
        $region37: #{tpu_custom_call.1} parent=11 // pred_check
          %p374 = pneg %p195
        $region38: #{tpu_custom_call.1} parent=11 // pred_check_branch
          %376 = sbr.rel (%p374) target = $region40
        $region39: #{tpu_custom_call.1} parent=11 // pred_region
          _
        $region40: #{tpu_custom_call.1} parent=11 // pred_fallthru
          _
        // Predicated region
        $region41: #{tpu_custom_call.1} parent=11 // pred_check
          %p377 = pneg %p216
        $region42: #{tpu_custom_call.1} parent=11 // pred_check_branch
          %379 = sbr.rel (%p377) target = $region44
        $region43: #{tpu_custom_call.1} parent=11 // pred_region
          %s381 = ssub.s32 32, 32
          %382 = vsyncadd [#allocation11], %s381
          %s383 = sshll.u32 [#allocation12], 4
          %s384 = int_to_ptr.vmem [resolvable:$true] %s383
          %389 = dma.hbm_to_vmem [thread:$0]  %s8, 32, %s384, [#allocation11], 16, 16, 1
        $region44: #{tpu_custom_call.1} parent=11 // pred_fallthru
          _
        // Predicated region
        $region45: #{tpu_custom_call.1} parent=11 // pred_check
          %p390 = pneg %p237
        $region46: #{tpu_custom_call.1} parent=11 // pred_check_branch
          %392 = sbr.rel (%p390) target = $region48
        $region47: #{tpu_custom_call.1} parent=11 // pred_region
          %s394 = ssub.s32 32, 32
          %395 = vsyncadd [#allocation14], %s394
          %s396 = sshll.u32 [#allocation13], 4
          %s397 = int_to_ptr.vmem [resolvable:$true] %s396
          %402 = dma.hbm_to_vmem [thread:$0]  %s9, 32, %s397, [#allocation14], 16, 16, 1
        $region48: #{tpu_custom_call.1} parent=11 // pred_fallthru
          _
        // Predicated region
        $region49: #{tpu_custom_call.1} parent=11 // pred_check
          %p403 = pneg %p258
        $region50: #{tpu_custom_call.1} parent=11 // pred_check_branch
          %405 = sbr.rel (%p403) target = $region52
        $region51: #{tpu_custom_call.1} parent=11 // pred_region
          _
        $region52: #{tpu_custom_call.1} parent=11 // pred_fallthru
          _
        // Predicated region
        $region53: #{tpu_custom_call.1} parent=11 // pred_check
          %p406 = pneg %p279
        $region54: #{tpu_custom_call.1} parent=11 // pred_check_branch
          %408 = sbr.rel (%p406) target = $region56
        $region55: #{tpu_custom_call.1} parent=11 // pred_region
          _
        $region56: #{tpu_custom_call.1} parent=11 // pred_fallthru
          _
      $region12: #{tpu_custom_call.1} parent=5 // pred_fallthru
        _
      %p409 = scmp.lt.s32.totalorder %s22, 2
      // Predicated region
      $region57: #{tpu_custom_call.1} parent=5 // pred_check
        %p410 = pneg %p409
      $region58: #{tpu_custom_call.1} parent=5 // pred_check_branch
        %412 = sbr.rel (%p410) target = $region60
      $region59: #{tpu_custom_call.1} parent=5 // pred_region
        // Predicated region
        $region61: #{tpu_custom_call.1} parent=59 // pred_check
          %p413 = pneg %p42
        $region62: #{tpu_custom_call.1} parent=59 // pred_check_branch
          %415 = sbr.rel (%p413) target = $region64
        $region63: #{tpu_custom_call.1} parent=59 // pred_region
          %p416 = scmp.lt.s32.totalorder %s22, 1
          %s417 = scalar_select %p416, %s22, 1
          %s418 = smul.addr %s417, 8
          %s419 = scalar_lea.vmem %s0, %s418
        $region64: #{tpu_custom_call.1} parent=59 // pred_fallthru
          _
      $region60: #{tpu_custom_call.1} parent=5 // pred_fallthru
        _
      %p420 = scmp.le.s32.totalorder 1, %s22
      %p421 = scmp.lt.s32.totalorder %s22, 3
      %p422 = pnand %p420, %p421
      %p423 = pneg %p422
      // Predicated region
      $region65: #{tpu_custom_call.1} parent=5 // pred_check
        _
      $region66: #{tpu_custom_call.1} parent=5 // pred_check_branch
        %425 = sbr.rel (%p422) target = $region68
      $region67: #{tpu_custom_call.1} parent=5 // pred_region
        %s426 = ssub.s32 %s22, 1
        // Predicated region
        $region69: #{tpu_custom_call.1} parent=67 // pred_check
          %p427 = pneg %p69
        $region70: #{tpu_custom_call.1} parent=67 // pred_check_branch
          %429 = sbr.rel (%p427) target = $region72
        $region71: #{tpu_custom_call.1} parent=67 // pred_region
          %430 = dma.done [#allocation6], 256
        $region72: #{tpu_custom_call.1} parent=67 // pred_fallthru
          _
        // Predicated region
        $region73: #{tpu_custom_call.1} parent=67 // pred_check
          %p431 = pneg %p90
        $region74: #{tpu_custom_call.1} parent=67 // pred_check_branch
          %433 = sbr.rel (%p431) target = $region76
        $region75: #{tpu_custom_call.1} parent=67 // pred_region
          %434 = dma.done [#allocation8], 16
        $region76: #{tpu_custom_call.1} parent=67 // pred_fallthru
          _
        // Predicated region
        $region77: #{tpu_custom_call.1} parent=67 // pred_check
          %p435 = pneg %p132
        $region78: #{tpu_custom_call.1} parent=67 // pred_check_branch
          %437 = sbr.rel (%p435) target = $region80
        $region79: #{tpu_custom_call.1} parent=67 // pred_region
          %438 = dma.done [#allocation8], 16
        $region80: #{tpu_custom_call.1} parent=67 // pred_fallthru
          _
        // Predicated region
        $region81: #{tpu_custom_call.1} parent=67 // pred_check
          %p439 = pneg %p153
        $region82: #{tpu_custom_call.1} parent=67 // pred_check_branch
          %441 = sbr.rel (%p439) target = $region84
        $region83: #{tpu_custom_call.1} parent=67 // pred_region
          %442 = dma.done [#allocation11], 1024
        $region84: #{tpu_custom_call.1} parent=67 // pred_fallthru
          _
        // Predicated region
        $region85: #{tpu_custom_call.1} parent=67 // pred_check
          %p443 = pneg %p216
        $region86: #{tpu_custom_call.1} parent=67 // pred_check_branch
          %445 = sbr.rel (%p443) target = $region88
        $region87: #{tpu_custom_call.1} parent=67 // pred_region
          %446 = dma.done [#allocation11], 32
        $region88: #{tpu_custom_call.1} parent=67 // pred_fallthru
          _
        // Predicated region
        $region89: #{tpu_custom_call.1} parent=67 // pred_check
          %p447 = pneg %p237
        $region90: #{tpu_custom_call.1} parent=67 // pred_check_branch
          %449 = sbr.rel (%p447) target = $region92
        $region91: #{tpu_custom_call.1} parent=67 // pred_region
          %450 = dma.done [#allocation14], 32
        $region92: #{tpu_custom_call.1} parent=67 // pred_fallthru
          _
        %p451 = scmp.lt.s32.totalorder %s27, 1
        %s452 = scalar_select %p451, %s27, 1
        %s453 = smul.addr %s452, 8
        %s454 = scalar_lea.vmem %s0, %s453
        %p455 = pneg %p48
        %p456 = pneg %p45
        %p457 = pneg %p69
        %p458 = pneg %p66
        %p459 = pneg %p90
        %p460 = pneg %p87
        %p461 = pneg %p111
        %p462 = pneg %p108
        %p463 = pneg %p132
        %p464 = pneg %p129
        %p465 = pneg %p153
        %p466 = pneg %p150
        %p467 = pneg %p174
        %p468 = pneg %p171
        %p469 = pneg %p195
        %p470 = pneg %p192
        %p471 = pneg %p216
        %p472 = pneg %p213
        %p473 = pneg %p237
        %p474 = pneg %p234
        %p475 = pneg %p258
        %p476 = pneg %p255
        %p477 = pneg %p279
        %p478 = pneg %p276
        %p479 = pneg %p305
        %p480 = pneg %p302
        %p481 = scmp.lt.s32.totalorder %s27, 1
        %s482 = scalar_select %p481, %s27, 1
        %s483 = smul.addr %s482, 8
        %s484 = scalar_lea.vmem %s12, %s483
        %p485 = scmp.lt.s32.totalorder %s27, 1
        %s486 = scalar_select %p485, %s27, 1
        %s487 = smul.addr %s486, 8
        %s488 = scalar_lea.vmem %s0, %s487
        %p489 = scmp.lt.s32.totalorder %s27, 1
        %s490 = scalar_select %p489, %s27, 1
        %s491 = smul.addr %s490, 8
        %s492 = scalar_lea.vmem %s12, %s491
        %p493 = scmp.eq.s32.totalorder %s27, 0
        // Predicated region
        $region93: #{tpu_custom_call.1} parent=67 // pred_check
          %p494 = pneg %p493
        $region94: #{tpu_custom_call.1} parent=67 // pred_check_branch
          %496 = sbr.rel (%p494) target = $region96
        $region95: #{tpu_custom_call.1} parent=67 // pred_region
          %vm497 = vcmask 254976
          %498 = vst.msk [vmem:[#allocation2] sm:$0x3] %vm497, 0.0
        $region96: #{tpu_custom_call.1} parent=67 // pred_fallthru
          _
        %v499 = vld [vmem:[%s488] sm:$0xff]
        %v500 = vld [vmem:[#allocation5] sm:$0xff]
        %v501 = vld [vmem:[#allocation5 + $0x8] sm:$0xff]
        %v502 = vld [vmem:[#allocation7] sm:$0x1]
        %v504 = vlaneseq
        %v505 = vshrl.u32 %v504, 7
        %v506 = vsub.s32 0, %v505
        %v507 = vrot.slane %v502, %v506
        %vm509 = vcmask 130048
        %v511 = vsel %vm509, %v499, 0
        %513 = vmatprep.subr.mxu0 0.0
        %514 = vmatpush1.msra.mxu0 %v500
        %515 = vmatprep.subr.mxu0 0.0
        %516 = vmatpush1.msra.mxu0 %v501
        %517 = vmatprep.subr.mxu0 0.0
        %518 = vmatpush1.msra.mxu0 0.0
        %519 = vmatprep.subr.mxu0 0.0
        %520 = vmatpush1.msra.mxu0 0.0
        %521 = vmatprep.subr.mxu0 0.0
        %522 = vmatpush1.msra.mxu0 0.0
        %523 = vmatprep.subr.mxu0 0.0
        %524 = vmatpush1.msra.mxu0 0.0
        %525 = vmatprep.subr.mxu0 0.0
        %526 = vmatpush1.msra.mxu0 0.0
        %527 = vmatprep.subr.mxu0 0.0
        %528 = vmatpush1.msra.mxu0 0.0
        %529 = vmatprep.subr.mxu0 0.0
        %530 = vmatpush1.msra.mxu0 0.0
        %531 = vmatprep.subr.mxu0 0.0
        %532 = vmatpush1.msra.mxu0 0.0
        %533 = vmatprep.subr.mxu0 0.0
        %534 = vmatpush1.msra.mxu0 0.0
        %535 = vmatprep.subr.mxu0 0.0
        %536 = vmatpush1.msra.mxu0 0.0
        %537 = vmatprep.subr.mxu0 0.0
        %538 = vmatpush1.msra.mxu0 0.0
        %539 = vmatprep.subr.mxu0 0.0
        %540 = vmatpush1.msra.mxu0 0.0
        %541 = vmatprep.subr.mxu0 0.0
        %542 = vmatpush1.msra.mxu0 0.0
        %543 = vmatprep.subr.mxu0 0.0
        %544 = vmatpush1.msra.mxu0 0.0
        %545 = vmatprep.subr.mxu0 0.0
        %546 = vmatpush1.msra.mxu0 0.0
        %547 = vmatprep.subr.mxu0 0.0
        %548 = vmatpush1.msra.mxu0 0.0
        %549 = vmatprep.subr.mxu0 0.0
        %550 = vmatpush1.msra.mxu0 0.0
        %551 = vmatprep.subr.mxu0 0.0
        %552 = vmatpush1.msra.mxu0 0.0
        %553 = vmatprep.subr.mxu0 0.0
        %554 = vmatpush1.msra.mxu0 0.0
        %555 = vmatprep.subr.mxu0 0.0
        %556 = vmatpush1.msra.mxu0 0.0
        %557 = vmatprep.subr.mxu0 0.0
        %558 = vmatpush1.msra.mxu0 0.0
        %559 = vmatprep.subr.mxu0 0.0
        %560 = vmatpush1.msra.mxu0 0.0
        %561 = vmatprep.subr.mxu0 0.0
        %562 = vmatpush1.msra.mxu0 0.0
        %563 = vmatprep.subr.mxu0 0.0
        %564 = vmatpush1.msra.mxu0 0.0
        %565 = vmatprep.subr.mxu0 0.0
        %566 = vmatpush1.msra.mxu0 0.0
        %567 = vmatprep.subr.mxu0 0.0
        %568 = vmatpush1.msra.mxu0 0.0
        %569 = vmatprep.subr.mxu0 0.0
        %570 = vmatpush1.msra.mxu0 0.0
        %571 = vmatprep.subr.mxu0 0.0
        %572 = vmatpush1.msra.mxu0 0.0
        %573 = vmatprep.subr.mxu0 0.0
        %574 = vmatpush1.msra.mxu0 0.0
        %575 = vmatprep.subr.mxu0 0.0
        %576 = vmatpush1.msra.mxu0 0.0
        %577 = vmatprep.mubr.f32.mxu0 0.0
        %578 = vmatmul.mubr.f32.gmra.mrb[0].mxu0 %v511
        %v579 = vpop.f32.mrb[0].mxu0
        %v580 = vadd.f32 %v507, %v579
        %v581 = vpop.f32.mrb[0].mxu0
        %582 = vdwg.mxu0
        %583 = vst [vmem:[#allocation4] sm:$0xff] %v580
        %v584 = vld [vmem:[#allocation2] sm:$0x3]
        %v585 = vld [vmem:[%s3] sm:$0xff]
        %v586 = vld [vmem:[%s3 + $0x8] sm:$0xff]
        %v587 = vld [vmem:[%s3 + $0x10] sm:$0xff]
        %v588 = vld [vmem:[%s3 + $0x18] sm:$0xff]
        %vm589 = vcmask 261120
        %v591 = vsel %vm589, %v584, 0
        %593 = vmatprep.subr.mxu0 0.0
        %594 = vmatpush1.msra.mxu0 %v585
        %595 = vmatprep.subr.mxu0 0.0
        %596 = vmatpush1.msra.mxu0 %v586
        %597 = vmatprep.subr.mxu0 0.0
        %598 = vmatpush1.msra.mxu0 %v587
        %599 = vmatprep.subr.mxu0 0.0
        %600 = vmatpush1.msra.mxu0 %v588
        %601 = vmatprep.subr.mxu0 0.0
        %602 = vmatpush1.msra.mxu0 0.0
        %603 = vmatprep.subr.mxu0 0.0
        %604 = vmatpush1.msra.mxu0 0.0
        %605 = vmatprep.subr.mxu0 0.0
        %606 = vmatpush1.msra.mxu0 0.0
        %607 = vmatprep.subr.mxu0 0.0
        %608 = vmatpush1.msra.mxu0 0.0
        %609 = vmatprep.subr.mxu0 0.0
        %610 = vmatpush1.msra.mxu0 0.0
        %611 = vmatprep.subr.mxu0 0.0
        %612 = vmatpush1.msra.mxu0 0.0
        %613 = vmatprep.subr.mxu0 0.0
        %614 = vmatpush1.msra.mxu0 0.0
        %615 = vmatprep.subr.mxu0 0.0
        %616 = vmatpush1.msra.mxu0 0.0
        %617 = vmatprep.subr.mxu0 0.0
        %618 = vmatpush1.msra.mxu0 0.0
        %619 = vmatprep.subr.mxu0 0.0
        %620 = vmatpush1.msra.mxu0 0.0
        %621 = vmatprep.subr.mxu0 0.0
        %622 = vmatpush1.msra.mxu0 0.0
        %623 = vmatprep.subr.mxu0 0.0
        %624 = vmatpush1.msra.mxu0 0.0
        %625 = vmatprep.subr.mxu0 0.0
        %626 = vmatpush1.msra.mxu0 0.0
        %627 = vmatprep.subr.mxu0 0.0
        %628 = vmatpush1.msra.mxu0 0.0
        %629 = vmatprep.subr.mxu0 0.0
        %630 = vmatpush1.msra.mxu0 0.0
        %631 = vmatprep.subr.mxu0 0.0
        %632 = vmatpush1.msra.mxu0 0.0
        %633 = vmatprep.subr.mxu0 0.0
        %634 = vmatpush1.msra.mxu0 0.0
        %635 = vmatprep.subr.mxu0 0.0
        %636 = vmatpush1.msra.mxu0 0.0
        %637 = vmatprep.subr.mxu0 0.0
        %638 = vmatpush1.msra.mxu0 0.0
        %639 = vmatprep.subr.mxu0 0.0
        %640 = vmatpush1.msra.mxu0 0.0
        %641 = vmatprep.subr.mxu0 0.0
        %642 = vmatpush1.msra.mxu0 0.0
        %643 = vmatprep.subr.mxu0 0.0
        %644 = vmatpush1.msra.mxu0 0.0
        %645 = vmatprep.subr.mxu0 0.0
        %646 = vmatpush1.msra.mxu0 0.0
        %647 = vmatprep.subr.mxu0 0.0
        %648 = vmatpush1.msra.mxu0 0.0
        %649 = vmatprep.subr.mxu0 0.0
        %650 = vmatpush1.msra.mxu0 0.0
        %651 = vmatprep.subr.mxu0 0.0
        %652 = vmatpush1.msra.mxu0 0.0
        %653 = vmatprep.subr.mxu0 0.0
        %654 = vmatpush1.msra.mxu0 0.0
        %655 = vmatprep.subr.mxu0 0.0
        %656 = vmatpush1.msra.mxu0 0.0
        %657 = vmatprep.mubr.f32.mxu0 0.0
        %658 = vmatmul.mubr.f32.gmra.mrb[0].mxu0 %v591
        %v659 = vpop.f32.mrb[0].mxu0
        %v660 = vadd.f32 0.0, %v659
        %v661 = vpop.f32.mrb[0].mxu0
        %662 = vdwg.mxu0
        %v663 = vld [vmem:[#allocation4] sm:$0x3]
        %v664 = vld [vmem:[#allocation12] sm:$0x1]
        %v665 = vld [vmem:[%s7] sm:$0xff]
        %v666 = vld [vmem:[#allocation13] sm:$0x1]
        %v667 = vld [vmem:[#allocation9] sm:$0x1]
        %v668 = vadd.f32 %v663, %v660
        %v669 = vxor.u32 %v668, 2147483648
        %v670 = vmul.f32 %v669, 1.442695
        %v671 = vpow.pop %v670
        %v672 = vadd.f32 %v671, 1.0
        %v673 = vrcp.pop %v672
        %v674 = vmul.f32 1.0, %v673
        %v676 = vlaneseq
        %v677 = vshrl.u32 %v676, 7
        %v678 = vsub.s32 0, %v677
        %v679 = vrot.slane %v667, %v678
        %680 = vrot.lane.b32.xlu0 %v679, 64
        %v681 = vpop.permute.xlu0 %680
        %v683 = vadd.f32 %v660, %v681
        %685 = vrot.lane.b32.xlu0 %v683, 64
        %v686 = vpop.permute.xlu0 %685
        %v688 = vmul.f32 %v674, %v686
        %690 = vrot.lane.b32.xlu0 %v688, 64
        %v691 = vpop.permute.xlu0 %690
        %v693 = vadd.f32 %v663, %v691
        %v694 = vtanh.pop %v693
        %v695 = vsub.f32 1.0, %v674
        %697 = vrot.lane.b32.xlu0 %v694, 96
        %v698 = vpop.permute.xlu0 %697
        %v700 = vmul.f32 %v695, %v698
        %701 = vrot.lane.b32.xlu0 %v584, 32
        %v702 = vpop.permute.xlu0 %701
        %v704 = vmul.f32 %v674, %v702
        %v705 = vadd.f32 %v700, %v704
        %v707 = vlaneseq
        %v708 = vshrl.u32 %v707, 7
        %v709 = vsub.s32 0, %v708
        %v710 = vrot.slane %v664, %v709
        %713 = vrot.lane.b32.xlu0 %v705, 96
        %v714 = vpop.permute.xlu0 %713
        %v716 = vmul.f32 %v710, %v714
        %718 = vrot.lane.b32.xlu0 %v663, 32
        %v719 = vpop.permute.xlu0 %718
        %v721 = vadd.f32 %v716, %v719
        %v722 = vmax.f32 %v721, 0.0
        %724 = vrot.lane.b32.xlu0 %v722, 120
        %v725 = vpop.permute.xlu0 %724
        %v727 = vmax.f32 %v722, %v725
        %728 = vrot.lane.b32.xlu0 %v722, 112
        %v729 = vpop.permute.xlu0 %728
        %v731 = vmax.f32 %v727, %v729
        %732 = vrot.lane.b32.xlu0 %v722, 104
        %v733 = vpop.permute.xlu0 %732
        %v735 = vmax.f32 %v731, %v733
        %v737 = vlaneseq
        %v738 = vshrl.u32 %v737, 7
        %v739 = vsub.s32 0, %v738
        %v740 = vrot.slane %v666, %v739
        %vm742 = vcmask 64512
        %v744 = vsel %vm742, %v735, 0
        %746 = vmatprep.subr.mxu0 0.0
        %747 = vmatpush1.msra.mxu0 %v665
        %748 = vmatprep.subr.mxu0 0.0
        %749 = vmatpush1.msra.mxu0 0.0
        %750 = vmatprep.subr.mxu0 0.0
        %751 = vmatpush1.msra.mxu0 0.0
        %752 = vmatprep.subr.mxu0 0.0
        %753 = vmatpush1.msra.mxu0 0.0
        %754 = vmatprep.subr.mxu0 0.0
        %755 = vmatpush1.msra.mxu0 0.0
        %756 = vmatprep.subr.mxu0 0.0
        %757 = vmatpush1.msra.mxu0 0.0
        %758 = vmatprep.subr.mxu0 0.0
        %759 = vmatpush1.msra.mxu0 0.0
        %760 = vmatprep.subr.mxu0 0.0
        %761 = vmatpush1.msra.mxu0 0.0
        %762 = vmatprep.subr.mxu0 0.0
        %763 = vmatpush1.msra.mxu0 0.0
        %764 = vmatprep.subr.mxu0 0.0
        %765 = vmatpush1.msra.mxu0 0.0
        %766 = vmatprep.subr.mxu0 0.0
        %767 = vmatpush1.msra.mxu0 0.0
        %768 = vmatprep.subr.mxu0 0.0
        %769 = vmatpush1.msra.mxu0 0.0
        %770 = vmatprep.subr.mxu0 0.0
        %771 = vmatpush1.msra.mxu0 0.0
        %772 = vmatprep.subr.mxu0 0.0
        %773 = vmatpush1.msra.mxu0 0.0
        %774 = vmatprep.subr.mxu0 0.0
        %775 = vmatpush1.msra.mxu0 0.0
        %776 = vmatprep.subr.mxu0 0.0
        %777 = vmatpush1.msra.mxu0 0.0
        %778 = vmatprep.subr.mxu0 0.0
        %779 = vmatpush1.msra.mxu0 0.0
        %780 = vmatprep.subr.mxu0 0.0
        %781 = vmatpush1.msra.mxu0 0.0
        %782 = vmatprep.subr.mxu0 0.0
        %783 = vmatpush1.msra.mxu0 0.0
        %784 = vmatprep.subr.mxu0 0.0
        %785 = vmatpush1.msra.mxu0 0.0
        %786 = vmatprep.subr.mxu0 0.0
        %787 = vmatpush1.msra.mxu0 0.0
        %788 = vmatprep.subr.mxu0 0.0
        %789 = vmatpush1.msra.mxu0 0.0
        %790 = vmatprep.subr.mxu0 0.0
        %791 = vmatpush1.msra.mxu0 0.0
        %792 = vmatprep.subr.mxu0 0.0
        %793 = vmatpush1.msra.mxu0 0.0
        %794 = vmatprep.subr.mxu0 0.0
        %795 = vmatpush1.msra.mxu0 0.0
        %796 = vmatprep.subr.mxu0 0.0
        %797 = vmatpush1.msra.mxu0 0.0
        %798 = vmatprep.subr.mxu0 0.0
        %799 = vmatpush1.msra.mxu0 0.0
        %800 = vmatprep.subr.mxu0 0.0
        %801 = vmatpush1.msra.mxu0 0.0
        %802 = vmatprep.subr.mxu0 0.0
        %803 = vmatpush1.msra.mxu0 0.0
        %804 = vmatprep.subr.mxu0 0.0
        %805 = vmatpush1.msra.mxu0 0.0
        %806 = vmatprep.subr.mxu0 0.0
        %807 = vmatpush1.msra.mxu0 0.0
        %808 = vmatprep.subr.mxu0 0.0
        %809 = vmatpush1.msra.mxu0 0.0
        %810 = vmatprep.mubr.f32.mxu0 0.0
        %811 = vmatmul.mubr.f32.gmra.mrb[0].mxu0 %v744
        %v812 = vpop.f32.mrb[0].mxu0
        %v813 = vadd.f32 %v740, %v812
        %v814 = vpop.f32.mrb[0].mxu0
        %815 = vdwg.mxu0
        %v816 = vtanh.pop %v813
        %v817 = vld [vmem:[#allocation10] sm:$0xff]
        %v818 = vld [vmem:[#allocation10 + $0x8] sm:$0xff]
        %v819 = vld [vmem:[#allocation10 + $0x10] sm:$0xff]
        %v820 = vld [vmem:[#allocation10 + $0x18] sm:$0xff]
        %v821 = vld [vmem:[#allocation10 + $0x20] sm:$0xff]
        %v822 = vld [vmem:[#allocation10 + $0x28] sm:$0xff]
        %v823 = vld [vmem:[#allocation10 + $0x30] sm:$0xff]
        %v824 = vld [vmem:[#allocation10 + $0x38] sm:$0xff]
        %v825 = vld [vmem:[%s6] sm:$0x3]
        %v827 = vlaneseq
        %v828 = vshrl.u32 %v827, 7
        %v829 = vsub.s32 0, %v828
        %v830 = vrot.slane %v825, %v829
        %v831 = vlaneseq
        %v832 = vshrl.u32 %v831, 7
        %v833 = vsub.s32 1, %v832
        %v834 = vrot.slane %v825, %v833
        %v838 = vsel %vm589, %v816, 0
        %840 = vmatprep.subr.mxu0 %v818
        %841 = vmatpush1.msra.mxu0 %v817
        %842 = vmatprep.subr.mxu0 %v820
        %843 = vmatpush1.msra.mxu0 %v819
        %844 = vmatprep.subr.mxu0 %v822
        %845 = vmatpush1.msra.mxu0 %v821
        %846 = vmatprep.subr.mxu0 %v824
        %847 = vmatpush1.msra.mxu0 %v823
        %848 = vmatprep.subr.mxu0 0.0
        %849 = vmatpush1.msra.mxu0 0.0
        %850 = vmatprep.subr.mxu0 0.0
        %851 = vmatpush1.msra.mxu0 0.0
        %852 = vmatprep.subr.mxu0 0.0
        %853 = vmatpush1.msra.mxu0 0.0
        %854 = vmatprep.subr.mxu0 0.0
        %855 = vmatpush1.msra.mxu0 0.0
        %856 = vmatprep.subr.mxu0 0.0
        %857 = vmatpush1.msra.mxu0 0.0
        %858 = vmatprep.subr.mxu0 0.0
        %859 = vmatpush1.msra.mxu0 0.0
        %860 = vmatprep.subr.mxu0 0.0
        %861 = vmatpush1.msra.mxu0 0.0
        %862 = vmatprep.subr.mxu0 0.0
        %863 = vmatpush1.msra.mxu0 0.0
        %864 = vmatprep.subr.mxu0 0.0
        %865 = vmatpush1.msra.mxu0 0.0
        %866 = vmatprep.subr.mxu0 0.0
        %867 = vmatpush1.msra.mxu0 0.0
        %868 = vmatprep.subr.mxu0 0.0
        %869 = vmatpush1.msra.mxu0 0.0
        %870 = vmatprep.subr.mxu0 0.0
        %871 = vmatpush1.msra.mxu0 0.0
        %872 = vmatprep.subr.mxu0 0.0
        %873 = vmatpush1.msra.mxu0 0.0
        %874 = vmatprep.subr.mxu0 0.0
        %875 = vmatpush1.msra.mxu0 0.0
        %876 = vmatprep.subr.mxu0 0.0
        %877 = vmatpush1.msra.mxu0 0.0
        %878 = vmatprep.subr.mxu0 0.0
        %879 = vmatpush1.msra.mxu0 0.0
        %880 = vmatprep.subr.mxu0 0.0
        %881 = vmatpush1.msra.mxu0 0.0
        %882 = vmatprep.subr.mxu0 0.0
        %883 = vmatpush1.msra.mxu0 0.0
        %884 = vmatprep.subr.mxu0 0.0
        %885 = vmatpush1.msra.mxu0 0.0
        %886 = vmatprep.subr.mxu0 0.0
        %887 = vmatpush1.msra.mxu0 0.0
        %888 = vmatprep.subr.mxu0 0.0
        %889 = vmatpush1.msra.mxu0 0.0
        %890 = vmatprep.subr.mxu0 0.0
        %891 = vmatpush1.msra.mxu0 0.0
        %892 = vmatprep.subr.mxu0 0.0
        %893 = vmatpush1.msra.mxu0 0.0
        %894 = vmatprep.subr.mxu0 0.0
        %895 = vmatpush1.msra.mxu0 0.0
        %896 = vmatprep.subr.mxu0 0.0
        %897 = vmatpush1.msra.mxu0 0.0
        %898 = vmatprep.subr.mxu0 0.0
        %899 = vmatpush1.msra.mxu0 0.0
        %900 = vmatprep.subr.mxu0 0.0
        %901 = vmatpush1.msra.mxu0 0.0
        %902 = vmatprep.subr.mxu0 0.0
        %903 = vmatpush1.msra.mxu0 0.0
        %904 = vmatprep.mubr.f32.mxu0 0.0
        %905 = vmatmul.mubr.f32.gmra.mrb[0].mxu0 %v838
        %v906 = vpop.f32.mrb[0].mxu0
        %v907 = vadd.f32 %v830, %v906
        %v908 = vpop.f32.mrb[0].mxu0
        %v909 = vadd.f32 %v834, %v908
        %910 = vdwg.mxu0
        %s911 = scalar_lea.vmem [#allocation12], 1
        %v912 = vld [vmem:[%s911] sm:$0x1]
        %s913 = scalar_lea.vmem %s7, 8
        %v914 = vld [vmem:[%s913] sm:$0xff]
        %s915 = scalar_lea.vmem [#allocation13], 1
        %v916 = vld [vmem:[%s915] sm:$0x1]
        %v917 = vadd.f32 %v907, %v909
        %v918 = vxor.u32 %v917, 2147483648
        %v919 = vmul.f32 %v918, 1.442695
        %v920 = vpow.pop %v919
        %v921 = vadd.f32 %v920, 1.0
        %v922 = vrcp.pop %v921
        %v923 = vmul.f32 1.0, %v922
        %925 = vrot.lane.b32.xlu0 %v909, 64
        %v926 = vpop.permute.xlu0 %925
        %v928 = vmul.f32 %v923, %v926
        %930 = vrot.lane.b32.xlu0 %v928, 64
        %v931 = vpop.permute.xlu0 %930
        %v933 = vadd.f32 %v907, %v931
        %v934 = vtanh.pop %v933
        %v935 = vsub.f32 1.0, %v923
        %937 = vrot.lane.b32.xlu0 %v934, 96
        %v938 = vpop.permute.xlu0 %937
        %v940 = vmul.f32 %v935, %v938
        %941 = vrot.lane.b32.xlu0 %v816, 32
        %v942 = vpop.permute.xlu0 %941
        %v944 = vmul.f32 %v923, %v942
        %v945 = vadd.f32 %v940, %v944
        %v947 = vlaneseq
        %v948 = vshrl.u32 %v947, 7
        %v949 = vsub.s32 0, %v948
        %v950 = vrot.slane %v912, %v949
        %953 = vrot.lane.b32.xlu0 %v945, 96
        %v954 = vpop.permute.xlu0 %953
        %v956 = vmul.f32 %v950, %v954
        %958 = vrot.lane.b32.xlu0 %v907, 32
        %v959 = vpop.permute.xlu0 %958
        %v961 = vadd.f32 %v956, %v959
        %v962 = vmax.f32 %v961, 0.0
        %964 = vrot.lane.b32.xlu0 %v962, 120
        %v965 = vpop.permute.xlu0 %964
        %v967 = vmax.f32 %v962, %v965
        %968 = vrot.lane.b32.xlu0 %v962, 112
        %v969 = vpop.permute.xlu0 %968
        %v971 = vmax.f32 %v967, %v969
        %972 = vrot.lane.b32.xlu0 %v962, 104
        %v973 = vpop.permute.xlu0 %972
        %v975 = vmax.f32 %v971, %v973
        %v977 = vlaneseq
        %v978 = vshrl.u32 %v977, 7
        %v979 = vsub.s32 0, %v978
        %v980 = vrot.slane %v916, %v979
        %v983 = vsel %vm742, %v975, 0
        %985 = vmatprep.subr.mxu0 0.0
        %986 = vmatpush1.msra.mxu0 %v914
        %987 = vmatprep.subr.mxu0 0.0
        %988 = vmatpush1.msra.mxu0 0.0
        %989 = vmatprep.subr.mxu0 0.0
        %990 = vmatpush1.msra.mxu0 0.0
        %991 = vmatprep.subr.mxu0 0.0
        %992 = vmatpush1.msra.mxu0 0.0
        %993 = vmatprep.subr.mxu0 0.0
        %994 = vmatpush1.msra.mxu0 0.0
        %995 = vmatprep.subr.mxu0 0.0
        %996 = vmatpush1.msra.mxu0 0.0
        %997 = vmatprep.subr.mxu0 0.0
        %998 = vmatpush1.msra.mxu0 0.0
        %999 = vmatprep.subr.mxu0 0.0
        %1000 = vmatpush1.msra.mxu0 0.0
        %1001 = vmatprep.subr.mxu0 0.0
        %1002 = vmatpush1.msra.mxu0 0.0
        %1003 = vmatprep.subr.mxu0 0.0
        %1004 = vmatpush1.msra.mxu0 0.0
        %1005 = vmatprep.subr.mxu0 0.0
        %1006 = vmatpush1.msra.mxu0 0.0
        %1007 = vmatprep.subr.mxu0 0.0
        %1008 = vmatpush1.msra.mxu0 0.0
        %1009 = vmatprep.subr.mxu0 0.0
        %1010 = vmatpush1.msra.mxu0 0.0
        %1011 = vmatprep.subr.mxu0 0.0
        %1012 = vmatpush1.msra.mxu0 0.0
        %1013 = vmatprep.subr.mxu0 0.0
        %1014 = vmatpush1.msra.mxu0 0.0
        %1015 = vmatprep.subr.mxu0 0.0
        %1016 = vmatpush1.msra.mxu0 0.0
        %1017 = vmatprep.subr.mxu0 0.0
        %1018 = vmatpush1.msra.mxu0 0.0
        %1019 = vmatprep.subr.mxu0 0.0
        %1020 = vmatpush1.msra.mxu0 0.0
        %1021 = vmatprep.subr.mxu0 0.0
        %1022 = vmatpush1.msra.mxu0 0.0
        %1023 = vmatprep.subr.mxu0 0.0
        %1024 = vmatpush1.msra.mxu0 0.0
        %1025 = vmatprep.subr.mxu0 0.0
        %1026 = vmatpush1.msra.mxu0 0.0
        %1027 = vmatprep.subr.mxu0 0.0
        %1028 = vmatpush1.msra.mxu0 0.0
        %1029 = vmatprep.subr.mxu0 0.0
        %1030 = vmatpush1.msra.mxu0 0.0
        %1031 = vmatprep.subr.mxu0 0.0
        %1032 = vmatpush1.msra.mxu0 0.0
        %1033 = vmatprep.subr.mxu0 0.0
        %1034 = vmatpush1.msra.mxu0 0.0
        %1035 = vmatprep.subr.mxu0 0.0
        %1036 = vmatpush1.msra.mxu0 0.0
        %1037 = vmatprep.subr.mxu0 0.0
        %1038 = vmatpush1.msra.mxu0 0.0
        %1039 = vmatprep.subr.mxu0 0.0
        %1040 = vmatpush1.msra.mxu0 0.0
        %1041 = vmatprep.subr.mxu0 0.0
        %1042 = vmatpush1.msra.mxu0 0.0
        %1043 = vmatprep.subr.mxu0 0.0
        %1044 = vmatpush1.msra.mxu0 0.0
        %1045 = vmatprep.subr.mxu0 0.0
        %1046 = vmatpush1.msra.mxu0 0.0
        %1047 = vmatprep.subr.mxu0 0.0
        %1048 = vmatpush1.msra.mxu0 0.0
        %1049 = vmatprep.mubr.f32.mxu0 0.0
        %1050 = vmatmul.mubr.f32.gmra.mrb[0].mxu0 %v983
        %v1051 = vpop.f32.mrb[0].mxu0
        %v1052 = vadd.f32 %v980, %v1051
        %v1053 = vpop.f32.mrb[0].mxu0
        %1054 = vdwg.mxu0
        %v1055 = vtanh.pop %v1052
        %vm1056 = vcmask 254976
        %1057 = vst.msk [vmem:[#allocation3] sm:$0x3] %vm1056, %v1055
        %v1058 = vld [vmem:[%s3] sm:$0xff]
        %v1059 = vld [vmem:[%s3 + $0x8] sm:$0xff]
        %v1060 = vld [vmem:[%s3 + $0x10] sm:$0xff]
        %v1061 = vld [vmem:[%s3 + $0x18] sm:$0xff]
        %v1063 = vsel %vm589, %v1055, 0
        %1065 = vmatprep.subr.mxu0 0.0
        %1066 = vmatpush1.msra.mxu0 %v1058
        %1067 = vmatprep.subr.mxu0 0.0
        %1068 = vmatpush1.msra.mxu0 %v1059
        %1069 = vmatprep.subr.mxu0 0.0
        %1070 = vmatpush1.msra.mxu0 %v1060
        %1071 = vmatprep.subr.mxu0 0.0
        %1072 = vmatpush1.msra.mxu0 %v1061
        %1073 = vmatprep.subr.mxu0 0.0
        %1074 = vmatpush1.msra.mxu0 0.0
        %1075 = vmatprep.subr.mxu0 0.0
        %1076 = vmatpush1.msra.mxu0 0.0
        %1077 = vmatprep.subr.mxu0 0.0
        %1078 = vmatpush1.msra.mxu0 0.0
        %1079 = vmatprep.subr.mxu0 0.0
        %1080 = vmatpush1.msra.mxu0 0.0
        %1081 = vmatprep.subr.mxu0 0.0
        %1082 = vmatpush1.msra.mxu0 0.0
        %1083 = vmatprep.subr.mxu0 0.0
        %1084 = vmatpush1.msra.mxu0 0.0
        %1085 = vmatprep.subr.mxu0 0.0
        %1086 = vmatpush1.msra.mxu0 0.0
        %1087 = vmatprep.subr.mxu0 0.0
        %1088 = vmatpush1.msra.mxu0 0.0
        %1089 = vmatprep.subr.mxu0 0.0
        %1090 = vmatpush1.msra.mxu0 0.0
        %1091 = vmatprep.subr.mxu0 0.0
        %1092 = vmatpush1.msra.mxu0 0.0
        %1093 = vmatprep.subr.mxu0 0.0
        %1094 = vmatpush1.msra.mxu0 0.0
        %1095 = vmatprep.subr.mxu0 0.0
        %1096 = vmatpush1.msra.mxu0 0.0
        %1097 = vmatprep.subr.mxu0 0.0
        %1098 = vmatpush1.msra.mxu0 0.0
        %1099 = vmatprep.subr.mxu0 0.0
        %1100 = vmatpush1.msra.mxu0 0.0
        %1101 = vmatprep.subr.mxu0 0.0
        %1102 = vmatpush1.msra.mxu0 0.0
        %1103 = vmatprep.subr.mxu0 0.0
        %1104 = vmatpush1.msra.mxu0 0.0
        %1105 = vmatprep.subr.mxu0 0.0
        %1106 = vmatpush1.msra.mxu0 0.0
        %1107 = vmatprep.subr.mxu0 0.0
        %1108 = vmatpush1.msra.mxu0 0.0
        %1109 = vmatprep.subr.mxu0 0.0
        %1110 = vmatpush1.msra.mxu0 0.0
        %1111 = vmatprep.subr.mxu0 0.0
        %1112 = vmatpush1.msra.mxu0 0.0
        %1113 = vmatprep.subr.mxu0 0.0
        %1114 = vmatpush1.msra.mxu0 0.0
        %1115 = vmatprep.subr.mxu0 0.0
        %1116 = vmatpush1.msra.mxu0 0.0
        %1117 = vmatprep.subr.mxu0 0.0
        %1118 = vmatpush1.msra.mxu0 0.0
        %1119 = vmatprep.subr.mxu0 0.0
        %1120 = vmatpush1.msra.mxu0 0.0
        %1121 = vmatprep.subr.mxu0 0.0
        %1122 = vmatpush1.msra.mxu0 0.0
        %1123 = vmatprep.subr.mxu0 0.0
        %1124 = vmatpush1.msra.mxu0 0.0
        %1125 = vmatprep.subr.mxu0 0.0
        %1126 = vmatpush1.msra.mxu0 0.0
        %1127 = vmatprep.subr.mxu0 0.0
        %1128 = vmatpush1.msra.mxu0 0.0
        %1129 = vmatprep.mubr.f32.mxu0 0.0
        %1130 = vmatmul.mubr.f32.gmra.mrb[0].mxu0 %v1063
        %v1131 = vpop.f32.mrb[0].mxu0
        %v1132 = vadd.f32 0.0, %v1131
        %v1133 = vpop.f32.mrb[0].mxu0
        %1134 = vdwg.mxu0
        %v1135 = vld [vmem:[#allocation4 + $0x2] sm:$0x3]
        %v1136 = vld [vmem:[#allocation12] sm:$0x1]
        %v1137 = vld [vmem:[%s7] sm:$0xff]
        %v1138 = vld [vmem:[#allocation13] sm:$0x1]
        %v1139 = vld [vmem:[#allocation9] sm:$0x1]
        %v1140 = vadd.f32 %v1135, %v1132
        %v1141 = vxor.u32 %v1140, 2147483648
        %v1142 = vmul.f32 %v1141, 1.442695
        %v1143 = vpow.pop %v1142
        %v1144 = vadd.f32 %v1143, 1.0
        %v1145 = vrcp.pop %v1144
        %v1146 = vmul.f32 1.0, %v1145
        %v1148 = vlaneseq
        %v1149 = vshrl.u32 %v1148, 7
        %v1150 = vsub.s32 0, %v1149
        %v1151 = vrot.slane %v1139, %v1150
        %1152 = vrot.lane.b32.xlu0 %v1151, 64
        %v1153 = vpop.permute.xlu0 %1152
        %v1155 = vadd.f32 %v1132, %v1153
        %1157 = vrot.lane.b32.xlu0 %v1155, 64
        %v1158 = vpop.permute.xlu0 %1157
        %v1160 = vmul.f32 %v1146, %v1158
        %1162 = vrot.lane.b32.xlu0 %v1160, 64
        %v1163 = vpop.permute.xlu0 %1162
        %v1165 = vadd.f32 %v1135, %v1163
        %v1166 = vtanh.pop %v1165
        %v1167 = vsub.f32 1.0, %v1146
        %1169 = vrot.lane.b32.xlu0 %v1166, 96
        %v1170 = vpop.permute.xlu0 %1169
        %v1172 = vmul.f32 %v1167, %v1170
        %1173 = vrot.lane.b32.xlu0 %v1055, 32
        %v1174 = vpop.permute.xlu0 %1173
        %v1176 = vmul.f32 %v1146, %v1174
        %v1177 = vadd.f32 %v1172, %v1176
        %v1179 = vlaneseq
        %v1180 = vshrl.u32 %v1179, 7
        %v1181 = vsub.s32 0, %v1180
        %v1182 = vrot.slane %v1136, %v1181
        %1185 = vrot.lane.b32.xlu0 %v1177, 96
        %v1186 = vpop.permute.xlu0 %1185
        %v1188 = vmul.f32 %v1182, %v1186
        %1190 = vrot.lane.b32.xlu0 %v1135, 32
        %v1191 = vpop.permute.xlu0 %1190
        %v1193 = vadd.f32 %v1188, %v1191
        %v1194 = vmax.f32 %v1193, 0.0
        %1196 = vrot.lane.b32.xlu0 %v1194, 120
        %v1197 = vpop.permute.xlu0 %1196
        %v1199 = vmax.f32 %v1194, %v1197
        %1200 = vrot.lane.b32.xlu0 %v1194, 112
        %v1201 = vpop.permute.xlu0 %1200
        %v1203 = vmax.f32 %v1199, %v1201
        %1204 = vrot.lane.b32.xlu0 %v1194, 104
        %v1205 = vpop.permute.xlu0 %1204
        %v1207 = vmax.f32 %v1203, %v1205
        %v1209 = vlaneseq
        %v1210 = vshrl.u32 %v1209, 7
        %v1211 = vsub.s32 0, %v1210
        %v1212 = vrot.slane %v1138, %v1211
        %v1215 = vsel %vm742, %v1207, 0
        %1217 = vmatprep.subr.mxu0 0.0
        %1218 = vmatpush1.msra.mxu0 %v1137
        %1219 = vmatprep.subr.mxu0 0.0
        %1220 = vmatpush1.msra.mxu0 0.0
        %1221 = vmatprep.subr.mxu0 0.0
        %1222 = vmatpush1.msra.mxu0 0.0
        %1223 = vmatprep.subr.mxu0 0.0
        %1224 = vmatpush1.msra.mxu0 0.0
        %1225 = vmatprep.subr.mxu0 0.0
        %1226 = vmatpush1.msra.mxu0 0.0
        %1227 = vmatprep.subr.mxu0 0.0
        %1228 = vmatpush1.msra.mxu0 0.0
        %1229 = vmatprep.subr.mxu0 0.0
        %1230 = vmatpush1.msra.mxu0 0.0
        %1231 = vmatprep.subr.mxu0 0.0
        %1232 = vmatpush1.msra.mxu0 0.0
        %1233 = vmatprep.subr.mxu0 0.0
        %1234 = vmatpush1.msra.mxu0 0.0
        %1235 = vmatprep.subr.mxu0 0.0
        %1236 = vmatpush1.msra.mxu0 0.0
        %1237 = vmatprep.subr.mxu0 0.0
        %1238 = vmatpush1.msra.mxu0 0.0
        %1239 = vmatprep.subr.mxu0 0.0
        %1240 = vmatpush1.msra.mxu0 0.0
        %1241 = vmatprep.subr.mxu0 0.0
        %1242 = vmatpush1.msra.mxu0 0.0
        %1243 = vmatprep.subr.mxu0 0.0
        %1244 = vmatpush1.msra.mxu0 0.0
        %1245 = vmatprep.subr.mxu0 0.0
        %1246 = vmatpush1.msra.mxu0 0.0
        %1247 = vmatprep.subr.mxu0 0.0
        %1248 = vmatpush1.msra.mxu0 0.0
        %1249 = vmatprep.subr.mxu0 0.0
        %1250 = vmatpush1.msra.mxu0 0.0
        %1251 = vmatprep.subr.mxu0 0.0
        %1252 = vmatpush1.msra.mxu0 0.0
        %1253 = vmatprep.subr.mxu0 0.0
        %1254 = vmatpush1.msra.mxu0 0.0
        %1255 = vmatprep.subr.mxu0 0.0
        %1256 = vmatpush1.msra.mxu0 0.0
        %1257 = vmatprep.subr.mxu0 0.0
        %1258 = vmatpush1.msra.mxu0 0.0
        %1259 = vmatprep.subr.mxu0 0.0
        %1260 = vmatpush1.msra.mxu0 0.0
        %1261 = vmatprep.subr.mxu0 0.0
        %1262 = vmatpush1.msra.mxu0 0.0
        %1263 = vmatprep.subr.mxu0 0.0
        %1264 = vmatpush1.msra.mxu0 0.0
        %1265 = vmatprep.subr.mxu0 0.0
        %1266 = vmatpush1.msra.mxu0 0.0
        %1267 = vmatprep.subr.mxu0 0.0
        %1268 = vmatpush1.msra.mxu0 0.0
        %1269 = vmatprep.subr.mxu0 0.0
        %1270 = vmatpush1.msra.mxu0 0.0
        %1271 = vmatprep.subr.mxu0 0.0
        %1272 = vmatpush1.msra.mxu0 0.0
        %1273 = vmatprep.subr.mxu0 0.0
        %1274 = vmatpush1.msra.mxu0 0.0
        %1275 = vmatprep.subr.mxu0 0.0
        %1276 = vmatpush1.msra.mxu0 0.0
        %1277 = vmatprep.subr.mxu0 0.0
        %1278 = vmatpush1.msra.mxu0 0.0
        %1279 = vmatprep.subr.mxu0 0.0
        %1280 = vmatpush1.msra.mxu0 0.0
        %1281 = vmatprep.mubr.f32.mxu0 0.0
        %1282 = vmatmul.mubr.f32.gmra.mrb[0].mxu0 %v1215
        %v1283 = vpop.f32.mrb[0].mxu0
        %v1284 = vadd.f32 %v1212, %v1283
        %v1285 = vpop.f32.mrb[0].mxu0
        %1286 = vdwg.mxu0
        %v1287 = vtanh.pop %v1284
        %v1288 = vld [vmem:[#allocation10] sm:$0xff]
        %v1289 = vld [vmem:[#allocation10 + $0x8] sm:$0xff]
        %v1290 = vld [vmem:[#allocation10 + $0x10] sm:$0xff]
        %v1291 = vld [vmem:[#allocation10 + $0x18] sm:$0xff]
        %v1292 = vld [vmem:[#allocation10 + $0x20] sm:$0xff]
        %v1293 = vld [vmem:[#allocation10 + $0x28] sm:$0xff]
        %v1294 = vld [vmem:[#allocation10 + $0x30] sm:$0xff]
        %v1295 = vld [vmem:[#allocation10 + $0x38] sm:$0xff]
        %v1296 = vld [vmem:[%s6] sm:$0x3]
        %v1298 = vlaneseq
        %v1299 = vshrl.u32 %v1298, 7
        %v1300 = vsub.s32 0, %v1299
        %v1301 = vrot.slane %v1296, %v1300
        %v1302 = vlaneseq
        %v1303 = vshrl.u32 %v1302, 7
        %v1304 = vsub.s32 1, %v1303
        %v1305 = vrot.slane %v1296, %v1304
        %v1309 = vsel %vm589, %v1287, 0
        %1311 = vmatprep.subr.mxu0 %v1289
        %1312 = vmatpush1.msra.mxu0 %v1288
        %1313 = vmatprep.subr.mxu0 %v1291
        %1314 = vmatpush1.msra.mxu0 %v1290
        %1315 = vmatprep.subr.mxu0 %v1293
        %1316 = vmatpush1.msra.mxu0 %v1292
        %1317 = vmatprep.subr.mxu0 %v1295
        %1318 = vmatpush1.msra.mxu0 %v1294
        %1319 = vmatprep.subr.mxu0 0.0
        %1320 = vmatpush1.msra.mxu0 0.0
        %1321 = vmatprep.subr.mxu0 0.0
        %1322 = vmatpush1.msra.mxu0 0.0
        %1323 = vmatprep.subr.mxu0 0.0
        %1324 = vmatpush1.msra.mxu0 0.0
        %1325 = vmatprep.subr.mxu0 0.0
        %1326 = vmatpush1.msra.mxu0 0.0
        %1327 = vmatprep.subr.mxu0 0.0
        %1328 = vmatpush1.msra.mxu0 0.0
        %1329 = vmatprep.subr.mxu0 0.0
        %1330 = vmatpush1.msra.mxu0 0.0
        %1331 = vmatprep.subr.mxu0 0.0
        %1332 = vmatpush1.msra.mxu0 0.0
        %1333 = vmatprep.subr.mxu0 0.0
        %1334 = vmatpush1.msra.mxu0 0.0
        %1335 = vmatprep.subr.mxu0 0.0
        %1336 = vmatpush1.msra.mxu0 0.0
        %1337 = vmatprep.subr.mxu0 0.0
        %1338 = vmatpush1.msra.mxu0 0.0
        %1339 = vmatprep.subr.mxu0 0.0
        %1340 = vmatpush1.msra.mxu0 0.0
        %1341 = vmatprep.subr.mxu0 0.0
        %1342 = vmatpush1.msra.mxu0 0.0
        %1343 = vmatprep.subr.mxu0 0.0
        %1344 = vmatpush1.msra.mxu0 0.0
        %1345 = vmatprep.subr.mxu0 0.0
        %1346 = vmatpush1.msra.mxu0 0.0
        %1347 = vmatprep.subr.mxu0 0.0
        %1348 = vmatpush1.msra.mxu0 0.0
        %1349 = vmatprep.subr.mxu0 0.0
        %1350 = vmatpush1.msra.mxu0 0.0
        %1351 = vmatprep.subr.mxu0 0.0
        %1352 = vmatpush1.msra.mxu0 0.0
        %1353 = vmatprep.subr.mxu0 0.0
        %1354 = vmatpush1.msra.mxu0 0.0
        %1355 = vmatprep.subr.mxu0 0.0
        %1356 = vmatpush1.msra.mxu0 0.0
        %1357 = vmatprep.subr.mxu0 0.0
        %1358 = vmatpush1.msra.mxu0 0.0
        %1359 = vmatprep.subr.mxu0 0.0
        %1360 = vmatpush1.msra.mxu0 0.0
        %1361 = vmatprep.subr.mxu0 0.0
        %1362 = vmatpush1.msra.mxu0 0.0
        %1363 = vmatprep.subr.mxu0 0.0
        %1364 = vmatpush1.msra.mxu0 0.0
        %1365 = vmatprep.subr.mxu0 0.0
        %1366 = vmatpush1.msra.mxu0 0.0
        %1367 = vmatprep.subr.mxu0 0.0
        %1368 = vmatpush1.msra.mxu0 0.0
        %1369 = vmatprep.subr.mxu0 0.0
        %1370 = vmatpush1.msra.mxu0 0.0
        %1371 = vmatprep.subr.mxu0 0.0
        %1372 = vmatpush1.msra.mxu0 0.0
        %1373 = vmatprep.subr.mxu0 0.0
        %1374 = vmatpush1.msra.mxu0 0.0
        %1375 = vmatprep.mubr.f32.mxu0 0.0
        %1376 = vmatmul.mubr.f32.gmra.mrb[0].mxu0 %v1309
        %v1377 = vpop.f32.mrb[0].mxu0
        %v1378 = vadd.f32 %v1301, %v1377
        %v1379 = vpop.f32.mrb[0].mxu0
        %v1380 = vadd.f32 %v1305, %v1379
        %1381 = vdwg.mxu0
        %v1382 = vld [vmem:[%s911] sm:$0x1]
        %v1383 = vld [vmem:[%s913] sm:$0xff]
        %v1384 = vld [vmem:[%s915] sm:$0x1]
        %v1385 = vadd.f32 %v1378, %v1380
        %v1386 = vxor.u32 %v1385, 2147483648
        %v1387 = vmul.f32 %v1386, 1.442695
        %v1388 = vpow.pop %v1387
        %v1389 = vadd.f32 %v1388, 1.0
        %v1390 = vrcp.pop %v1389
        %v1391 = vmul.f32 1.0, %v1390
        %1393 = vrot.lane.b32.xlu0 %v1380, 64
        %v1394 = vpop.permute.xlu0 %1393
        %v1396 = vmul.f32 %v1391, %v1394
        %1398 = vrot.lane.b32.xlu0 %v1396, 64
        %v1399 = vpop.permute.xlu0 %1398
        %v1401 = vadd.f32 %v1378, %v1399
        %v1402 = vtanh.pop %v1401
        %v1403 = vsub.f32 1.0, %v1391
        %1405 = vrot.lane.b32.xlu0 %v1402, 96
        %v1406 = vpop.permute.xlu0 %1405
        %v1408 = vmul.f32 %v1403, %v1406
        %1409 = vrot.lane.b32.xlu0 %v1287, 32
        %v1410 = vpop.permute.xlu0 %1409
        %v1412 = vmul.f32 %v1391, %v1410
        %v1413 = vadd.f32 %v1408, %v1412
        %v1415 = vlaneseq
        %v1416 = vshrl.u32 %v1415, 7
        %v1417 = vsub.s32 0, %v1416
        %v1418 = vrot.slane %v1382, %v1417
        %1421 = vrot.lane.b32.xlu0 %v1413, 96
        %v1422 = vpop.permute.xlu0 %1421
        %v1424 = vmul.f32 %v1418, %v1422
        %1426 = vrot.lane.b32.xlu0 %v1378, 32
        %v1427 = vpop.permute.xlu0 %1426
        %v1429 = vadd.f32 %v1424, %v1427
        %v1430 = vmax.f32 %v1429, 0.0
        %1432 = vrot.lane.b32.xlu0 %v1430, 120
        %v1433 = vpop.permute.xlu0 %1432
        %v1435 = vmax.f32 %v1430, %v1433
        %1436 = vrot.lane.b32.xlu0 %v1430, 112
        %v1437 = vpop.permute.xlu0 %1436
        %v1439 = vmax.f32 %v1435, %v1437
        %1440 = vrot.lane.b32.xlu0 %v1430, 104
        %v1441 = vpop.permute.xlu0 %1440
        %v1443 = vmax.f32 %v1439, %v1441
        %v1445 = vlaneseq
        %v1446 = vshrl.u32 %v1445, 7
        %v1447 = vsub.s32 0, %v1446
        %v1448 = vrot.slane %v1384, %v1447
        %v1451 = vsel %vm742, %v1443, 0
        %1453 = vmatprep.subr.mxu0 0.0
        %1454 = vmatpush1.msra.mxu0 %v1383
        %1455 = vmatprep.subr.mxu0 0.0
        %1456 = vmatpush1.msra.mxu0 0.0
        %1457 = vmatprep.subr.mxu0 0.0
        %1458 = vmatpush1.msra.mxu0 0.0
        %1459 = vmatprep.subr.mxu0 0.0
        %1460 = vmatpush1.msra.mxu0 0.0
        %1461 = vmatprep.subr.mxu0 0.0
        %1462 = vmatpush1.msra.mxu0 0.0
        %1463 = vmatprep.subr.mxu0 0.0
        %1464 = vmatpush1.msra.mxu0 0.0
        %1465 = vmatprep.subr.mxu0 0.0
        %1466 = vmatpush1.msra.mxu0 0.0
        %1467 = vmatprep.subr.mxu0 0.0
        %1468 = vmatpush1.msra.mxu0 0.0
        %1469 = vmatprep.subr.mxu0 0.0
        %1470 = vmatpush1.msra.mxu0 0.0
        %1471 = vmatprep.subr.mxu0 0.0
        %1472 = vmatpush1.msra.mxu0 0.0
        %1473 = vmatprep.subr.mxu0 0.0
        %1474 = vmatpush1.msra.mxu0 0.0
        %1475 = vmatprep.subr.mxu0 0.0
        %1476 = vmatpush1.msra.mxu0 0.0
        %1477 = vmatprep.subr.mxu0 0.0
        %1478 = vmatpush1.msra.mxu0 0.0
        %1479 = vmatprep.subr.mxu0 0.0
        %1480 = vmatpush1.msra.mxu0 0.0
        %1481 = vmatprep.subr.mxu0 0.0
        %1482 = vmatpush1.msra.mxu0 0.0
        %1483 = vmatprep.subr.mxu0 0.0
        %1484 = vmatpush1.msra.mxu0 0.0
        %1485 = vmatprep.subr.mxu0 0.0
        %1486 = vmatpush1.msra.mxu0 0.0
        %1487 = vmatprep.subr.mxu0 0.0
        %1488 = vmatpush1.msra.mxu0 0.0
        %1489 = vmatprep.subr.mxu0 0.0
        %1490 = vmatpush1.msra.mxu0 0.0
        %1491 = vmatprep.subr.mxu0 0.0
        %1492 = vmatpush1.msra.mxu0 0.0
        %1493 = vmatprep.subr.mxu0 0.0
        %1494 = vmatpush1.msra.mxu0 0.0
        %1495 = vmatprep.subr.mxu0 0.0
        %1496 = vmatpush1.msra.mxu0 0.0
        %1497 = vmatprep.subr.mxu0 0.0
        %1498 = vmatpush1.msra.mxu0 0.0
        %1499 = vmatprep.subr.mxu0 0.0
        %1500 = vmatpush1.msra.mxu0 0.0
        %1501 = vmatprep.subr.mxu0 0.0
        %1502 = vmatpush1.msra.mxu0 0.0
        %1503 = vmatprep.subr.mxu0 0.0
        %1504 = vmatpush1.msra.mxu0 0.0
        %1505 = vmatprep.subr.mxu0 0.0
        %1506 = vmatpush1.msra.mxu0 0.0
        %1507 = vmatprep.subr.mxu0 0.0
        %1508 = vmatpush1.msra.mxu0 0.0
        %1509 = vmatprep.subr.mxu0 0.0
        %1510 = vmatpush1.msra.mxu0 0.0
        %1511 = vmatprep.subr.mxu0 0.0
        %1512 = vmatpush1.msra.mxu0 0.0
        %1513 = vmatprep.subr.mxu0 0.0
        %1514 = vmatpush1.msra.mxu0 0.0
        %1515 = vmatprep.subr.mxu0 0.0
        %1516 = vmatpush1.msra.mxu0 0.0
        %1517 = vmatprep.mubr.f32.mxu0 0.0
        %1518 = vmatmul.mubr.f32.gmra.mrb[0].mxu0 %v1451
        %v1519 = vpop.f32.mrb[0].mxu0
        %v1520 = vadd.f32 %v1448, %v1519
        %v1521 = vpop.f32.mrb[0].mxu0
        %1522 = vdwg.mxu0
        %v1523 = vtanh.pop %v1520
        %1524 = vst.msk [vmem:[#allocation3 + $0x2] sm:$0x3] %vm1056, %v1523
        %v1525 = vld [vmem:[%s3] sm:$0xff]
        %v1526 = vld [vmem:[%s3 + $0x8] sm:$0xff]
        %v1527 = vld [vmem:[%s3 + $0x10] sm:$0xff]
        %v1528 = vld [vmem:[%s3 + $0x18] sm:$0xff]
        %v1530 = vsel %vm589, %v1523, 0
        %1532 = vmatprep.subr.mxu0 0.0
        %1533 = vmatpush1.msra.mxu0 %v1525
        %1534 = vmatprep.subr.mxu0 0.0
        %1535 = vmatpush1.msra.mxu0 %v1526
        %1536 = vmatprep.subr.mxu0 0.0
        %1537 = vmatpush1.msra.mxu0 %v1527
        %1538 = vmatprep.subr.mxu0 0.0
        %1539 = vmatpush1.msra.mxu0 %v1528
        %1540 = vmatprep.subr.mxu0 0.0
        %1541 = vmatpush1.msra.mxu0 0.0
        %1542 = vmatprep.subr.mxu0 0.0
        %1543 = vmatpush1.msra.mxu0 0.0
        %1544 = vmatprep.subr.mxu0 0.0
        %1545 = vmatpush1.msra.mxu0 0.0
        %1546 = vmatprep.subr.mxu0 0.0
        %1547 = vmatpush1.msra.mxu0 0.0
        %1548 = vmatprep.subr.mxu0 0.0
        %1549 = vmatpush1.msra.mxu0 0.0
        %1550 = vmatprep.subr.mxu0 0.0
        %1551 = vmatpush1.msra.mxu0 0.0
        %1552 = vmatprep.subr.mxu0 0.0
        %1553 = vmatpush1.msra.mxu0 0.0
        %1554 = vmatprep.subr.mxu0 0.0
        %1555 = vmatpush1.msra.mxu0 0.0
        %1556 = vmatprep.subr.mxu0 0.0
        %1557 = vmatpush1.msra.mxu0 0.0
        %1558 = vmatprep.subr.mxu0 0.0
        %1559 = vmatpush1.msra.mxu0 0.0
        %1560 = vmatprep.subr.mxu0 0.0
        %1561 = vmatpush1.msra.mxu0 0.0
        %1562 = vmatprep.subr.mxu0 0.0
        %1563 = vmatpush1.msra.mxu0 0.0
        %1564 = vmatprep.subr.mxu0 0.0
        %1565 = vmatpush1.msra.mxu0 0.0
        %1566 = vmatprep.subr.mxu0 0.0
        %1567 = vmatpush1.msra.mxu0 0.0
        %1568 = vmatprep.subr.mxu0 0.0
        %1569 = vmatpush1.msra.mxu0 0.0
        %1570 = vmatprep.subr.mxu0 0.0
        %1571 = vmatpush1.msra.mxu0 0.0
        %1572 = vmatprep.subr.mxu0 0.0
        %1573 = vmatpush1.msra.mxu0 0.0
        %1574 = vmatprep.subr.mxu0 0.0
        %1575 = vmatpush1.msra.mxu0 0.0
        %1576 = vmatprep.subr.mxu0 0.0
        %1577 = vmatpush1.msra.mxu0 0.0
        %1578 = vmatprep.subr.mxu0 0.0
        %1579 = vmatpush1.msra.mxu0 0.0
        %1580 = vmatprep.subr.mxu0 0.0
        %1581 = vmatpush1.msra.mxu0 0.0
        %1582 = vmatprep.subr.mxu0 0.0
        %1583 = vmatpush1.msra.mxu0 0.0
        %1584 = vmatprep.subr.mxu0 0.0
        %1585 = vmatpush1.msra.mxu0 0.0
        %1586 = vmatprep.subr.mxu0 0.0
        %1587 = vmatpush1.msra.mxu0 0.0
        %1588 = vmatprep.subr.mxu0 0.0
        %1589 = vmatpush1.msra.mxu0 0.0
        %1590 = vmatprep.subr.mxu0 0.0
        %1591 = vmatpush1.msra.mxu0 0.0
        %1592 = vmatprep.subr.mxu0 0.0
        %1593 = vmatpush1.msra.mxu0 0.0
        %1594 = vmatprep.subr.mxu0 0.0
        %1595 = vmatpush1.msra.mxu0 0.0
        %1596 = vmatprep.mubr.f32.mxu0 0.0
        %1597 = vmatmul.mubr.f32.gmra.mrb[0].mxu0 %v1530
        %v1598 = vpop.f32.mrb[0].mxu0
        %v1599 = vadd.f32 0.0, %v1598
        %v1600 = vpop.f32.mrb[0].mxu0
        %1601 = vdwg.mxu0
        %v1602 = vld [vmem:[#allocation4 + $0x4] sm:$0x3]
        %v1603 = vld [vmem:[#allocation12] sm:$0x1]
        %v1604 = vld [vmem:[%s7] sm:$0xff]
        %v1605 = vld [vmem:[#allocation13] sm:$0x1]
        %v1606 = vld [vmem:[#allocation9] sm:$0x1]
        %v1607 = vadd.f32 %v1602, %v1599
        %v1608 = vxor.u32 %v1607, 2147483648
        %v1609 = vmul.f32 %v1608, 1.442695
        %v1610 = vpow.pop %v1609
        %v1611 = vadd.f32 %v1610, 1.0
        %v1612 = vrcp.pop %v1611
        %v1613 = vmul.f32 1.0, %v1612
        %v1615 = vlaneseq
        %v1616 = vshrl.u32 %v1615, 7
        %v1617 = vsub.s32 0, %v1616
        %v1618 = vrot.slane %v1606, %v1617
        %1619 = vrot.lane.b32.xlu0 %v1618, 64
        %v1620 = vpop.permute.xlu0 %1619
        %v1622 = vadd.f32 %v1599, %v1620
        %1624 = vrot.lane.b32.xlu0 %v1622, 64
        %v1625 = vpop.permute.xlu0 %1624
        %v1627 = vmul.f32 %v1613, %v1625
        %1629 = vrot.lane.b32.xlu0 %v1627, 64
        %v1630 = vpop.permute.xlu0 %1629
        %v1632 = vadd.f32 %v1602, %v1630
        %v1633 = vtanh.pop %v1632
        %v1634 = vsub.f32 1.0, %v1613
        %1636 = vrot.lane.b32.xlu0 %v1633, 96
        %v1637 = vpop.permute.xlu0 %1636
        %v1639 = vmul.f32 %v1634, %v1637
        %1640 = vrot.lane.b32.xlu0 %v1523, 32
        %v1641 = vpop.permute.xlu0 %1640
        %v1643 = vmul.f32 %v1613, %v1641
        %v1644 = vadd.f32 %v1639, %v1643
        %v1646 = vlaneseq
        %v1647 = vshrl.u32 %v1646, 7
        %v1648 = vsub.s32 0, %v1647
        %v1649 = vrot.slane %v1603, %v1648
        %1652 = vrot.lane.b32.xlu0 %v1644, 96
        %v1653 = vpop.permute.xlu0 %1652
        %v1655 = vmul.f32 %v1649, %v1653
        %1657 = vrot.lane.b32.xlu0 %v1602, 32
        %v1658 = vpop.permute.xlu0 %1657
        %v1660 = vadd.f32 %v1655, %v1658
        %v1661 = vmax.f32 %v1660, 0.0
        %1663 = vrot.lane.b32.xlu0 %v1661, 120
        %v1664 = vpop.permute.xlu0 %1663
        %v1666 = vmax.f32 %v1661, %v1664
        %1667 = vrot.lane.b32.xlu0 %v1661, 112
        %v1668 = vpop.permute.xlu0 %1667
        %v1670 = vmax.f32 %v1666, %v1668
        %1671 = vrot.lane.b32.xlu0 %v1661, 104
        %v1672 = vpop.permute.xlu0 %1671
        %v1674 = vmax.f32 %v1670, %v1672
        %v1676 = vlaneseq
        %v1677 = vshrl.u32 %v1676, 7
        %v1678 = vsub.s32 0, %v1677
        %v1679 = vrot.slane %v1605, %v1678
        %v1682 = vsel %vm742, %v1674, 0
        %1684 = vmatprep.subr.mxu0 0.0
        %1685 = vmatpush1.msra.mxu0 %v1604
        %1686 = vmatprep.subr.mxu0 0.0
        %1687 = vmatpush1.msra.mxu0 0.0
        %1688 = vmatprep.subr.mxu0 0.0
        %1689 = vmatpush1.msra.mxu0 0.0
        %1690 = vmatprep.subr.mxu0 0.0
        %1691 = vmatpush1.msra.mxu0 0.0
        %1692 = vmatprep.subr.mxu0 0.0
        %1693 = vmatpush1.msra.mxu0 0.0
        %1694 = vmatprep.subr.mxu0 0.0
        %1695 = vmatpush1.msra.mxu0 0.0
        %1696 = vmatprep.subr.mxu0 0.0
        %1697 = vmatpush1.msra.mxu0 0.0
        %1698 = vmatprep.subr.mxu0 0.0
        %1699 = vmatpush1.msra.mxu0 0.0
        %1700 = vmatprep.subr.mxu0 0.0
        %1701 = vmatpush1.msra.mxu0 0.0
        %1702 = vmatprep.subr.mxu0 0.0
        %1703 = vmatpush1.msra.mxu0 0.0
        %1704 = vmatprep.subr.mxu0 0.0
        %1705 = vmatpush1.msra.mxu0 0.0
        %1706 = vmatprep.subr.mxu0 0.0
        %1707 = vmatpush1.msra.mxu0 0.0
        %1708 = vmatprep.subr.mxu0 0.0
        %1709 = vmatpush1.msra.mxu0 0.0
        %1710 = vmatprep.subr.mxu0 0.0
        %1711 = vmatpush1.msra.mxu0 0.0
        %1712 = vmatprep.subr.mxu0 0.0
        %1713 = vmatpush1.msra.mxu0 0.0
        %1714 = vmatprep.subr.mxu0 0.0
        %1715 = vmatpush1.msra.mxu0 0.0
        %1716 = vmatprep.subr.mxu0 0.0
        %1717 = vmatpush1.msra.mxu0 0.0
        %1718 = vmatprep.subr.mxu0 0.0
        %1719 = vmatpush1.msra.mxu0 0.0
        %1720 = vmatprep.subr.mxu0 0.0
        %1721 = vmatpush1.msra.mxu0 0.0
        %1722 = vmatprep.subr.mxu0 0.0
        %1723 = vmatpush1.msra.mxu0 0.0
        %1724 = vmatprep.subr.mxu0 0.0
        %1725 = vmatpush1.msra.mxu0 0.0
        %1726 = vmatprep.subr.mxu0 0.0
        %1727 = vmatpush1.msra.mxu0 0.0
        %1728 = vmatprep.subr.mxu0 0.0
        %1729 = vmatpush1.msra.mxu0 0.0
        %1730 = vmatprep.subr.mxu0 0.0
        %1731 = vmatpush1.msra.mxu0 0.0
        %1732 = vmatprep.subr.mxu0 0.0
        %1733 = vmatpush1.msra.mxu0 0.0
        %1734 = vmatprep.subr.mxu0 0.0
        %1735 = vmatpush1.msra.mxu0 0.0
        %1736 = vmatprep.subr.mxu0 0.0
        %1737 = vmatpush1.msra.mxu0 0.0
        %1738 = vmatprep.subr.mxu0 0.0
        %1739 = vmatpush1.msra.mxu0 0.0
        %1740 = vmatprep.subr.mxu0 0.0
        %1741 = vmatpush1.msra.mxu0 0.0
        %1742 = vmatprep.subr.mxu0 0.0
        %1743 = vmatpush1.msra.mxu0 0.0
        %1744 = vmatprep.subr.mxu0 0.0
        %1745 = vmatpush1.msra.mxu0 0.0
        %1746 = vmatprep.subr.mxu0 0.0
        %1747 = vmatpush1.msra.mxu0 0.0
        %1748 = vmatprep.mubr.f32.mxu0 0.0
        %1749 = vmatmul.mubr.f32.gmra.mrb[0].mxu0 %v1682
        %v1750 = vpop.f32.mrb[0].mxu0
        %v1751 = vadd.f32 %v1679, %v1750
        %v1752 = vpop.f32.mrb[0].mxu0
        %1753 = vdwg.mxu0
        %v1754 = vtanh.pop %v1751
        %v1755 = vld [vmem:[#allocation10] sm:$0xff]
        %v1756 = vld [vmem:[#allocation10 + $0x8] sm:$0xff]
        %v1757 = vld [vmem:[#allocation10 + $0x10] sm:$0xff]
        %v1758 = vld [vmem:[#allocation10 + $0x18] sm:$0xff]
        %v1759 = vld [vmem:[#allocation10 + $0x20] sm:$0xff]
        %v1760 = vld [vmem:[#allocation10 + $0x28] sm:$0xff]
        %v1761 = vld [vmem:[#allocation10 + $0x30] sm:$0xff]
        %v1762 = vld [vmem:[#allocation10 + $0x38] sm:$0xff]
        %v1763 = vld [vmem:[%s6] sm:$0x3]
        %v1765 = vlaneseq
        %v1766 = vshrl.u32 %v1765, 7
        %v1767 = vsub.s32 0, %v1766
        %v1768 = vrot.slane %v1763, %v1767
        %v1769 = vlaneseq
        %v1770 = vshrl.u32 %v1769, 7
        %v1771 = vsub.s32 1, %v1770
        %v1772 = vrot.slane %v1763, %v1771
        %v1776 = vsel %vm589, %v1754, 0
        %1778 = vmatprep.subr.mxu0 %v1756
        %1779 = vmatpush1.msra.mxu0 %v1755
        %1780 = vmatprep.subr.mxu0 %v1758
        %1781 = vmatpush1.msra.mxu0 %v1757
        %1782 = vmatprep.subr.mxu0 %v1760
        %1783 = vmatpush1.msra.mxu0 %v1759
        %1784 = vmatprep.subr.mxu0 %v1762
        %1785 = vmatpush1.msra.mxu0 %v1761
        %1786 = vmatprep.subr.mxu0 0.0
        %1787 = vmatpush1.msra.mxu0 0.0
        %1788 = vmatprep.subr.mxu0 0.0
        %1789 = vmatpush1.msra.mxu0 0.0
        %1790 = vmatprep.subr.mxu0 0.0
        %1791 = vmatpush1.msra.mxu0 0.0
        %1792 = vmatprep.subr.mxu0 0.0
        %1793 = vmatpush1.msra.mxu0 0.0
        %1794 = vmatprep.subr.mxu0 0.0
        %1795 = vmatpush1.msra.mxu0 0.0
        %1796 = vmatprep.subr.mxu0 0.0
        %1797 = vmatpush1.msra.mxu0 0.0
        %1798 = vmatprep.subr.mxu0 0.0
        %1799 = vmatpush1.msra.mxu0 0.0
        %1800 = vmatprep.subr.mxu0 0.0
        %1801 = vmatpush1.msra.mxu0 0.0
        %1802 = vmatprep.subr.mxu0 0.0
        %1803 = vmatpush1.msra.mxu0 0.0
        %1804 = vmatprep.subr.mxu0 0.0
        %1805 = vmatpush1.msra.mxu0 0.0
        %1806 = vmatprep.subr.mxu0 0.0
        %1807 = vmatpush1.msra.mxu0 0.0
        %1808 = vmatprep.subr.mxu0 0.0
        %1809 = vmatpush1.msra.mxu0 0.0
        %1810 = vmatprep.subr.mxu0 0.0
        %1811 = vmatpush1.msra.mxu0 0.0
        %1812 = vmatprep.subr.mxu0 0.0
        %1813 = vmatpush1.msra.mxu0 0.0
        %1814 = vmatprep.subr.mxu0 0.0
        %1815 = vmatpush1.msra.mxu0 0.0
        %1816 = vmatprep.subr.mxu0 0.0
        %1817 = vmatpush1.msra.mxu0 0.0
        %1818 = vmatprep.subr.mxu0 0.0
        %1819 = vmatpush1.msra.mxu0 0.0
        %1820 = vmatprep.subr.mxu0 0.0
        %1821 = vmatpush1.msra.mxu0 0.0
        %1822 = vmatprep.subr.mxu0 0.0
        %1823 = vmatpush1.msra.mxu0 0.0
        %1824 = vmatprep.subr.mxu0 0.0
        %1825 = vmatpush1.msra.mxu0 0.0
        %1826 = vmatprep.subr.mxu0 0.0
        %1827 = vmatpush1.msra.mxu0 0.0
        %1828 = vmatprep.subr.mxu0 0.0
        %1829 = vmatpush1.msra.mxu0 0.0
        %1830 = vmatprep.subr.mxu0 0.0
        %1831 = vmatpush1.msra.mxu0 0.0
        %1832 = vmatprep.subr.mxu0 0.0
        %1833 = vmatpush1.msra.mxu0 0.0
        %1834 = vmatprep.subr.mxu0 0.0
        %1835 = vmatpush1.msra.mxu0 0.0
        %1836 = vmatprep.subr.mxu0 0.0
        %1837 = vmatpush1.msra.mxu0 0.0
        %1838 = vmatprep.subr.mxu0 0.0
        %1839 = vmatpush1.msra.mxu0 0.0
        %1840 = vmatprep.subr.mxu0 0.0
        %1841 = vmatpush1.msra.mxu0 0.0
        %1842 = vmatprep.mubr.f32.mxu0 0.0
        %1843 = vmatmul.mubr.f32.gmra.mrb[0].mxu0 %v1776
        %v1844 = vpop.f32.mrb[0].mxu0
        %v1845 = vadd.f32 %v1768, %v1844
        %v1846 = vpop.f32.mrb[0].mxu0
        %v1847 = vadd.f32 %v1772, %v1846
        %1848 = vdwg.mxu0
        %v1849 = vld [vmem:[%s911] sm:$0x1]
        %v1850 = vld [vmem:[%s913] sm:$0xff]
        %v1851 = vld [vmem:[%s915] sm:$0x1]
        %v1852 = vadd.f32 %v1845, %v1847
        %v1853 = vxor.u32 %v1852, 2147483648
        %v1854 = vmul.f32 %v1853, 1.442695
        %v1855 = vpow.pop %v1854
        %v1856 = vadd.f32 %v1855, 1.0
        %v1857 = vrcp.pop %v1856
        %v1858 = vmul.f32 1.0, %v1857
        %1860 = vrot.lane.b32.xlu0 %v1847, 64
        %v1861 = vpop.permute.xlu0 %1860
        %v1863 = vmul.f32 %v1858, %v1861
        %1865 = vrot.lane.b32.xlu0 %v1863, 64
        %v1866 = vpop.permute.xlu0 %1865
        %v1868 = vadd.f32 %v1845, %v1866
        %v1869 = vtanh.pop %v1868
        %v1870 = vsub.f32 1.0, %v1858
        %1872 = vrot.lane.b32.xlu0 %v1869, 96
        %v1873 = vpop.permute.xlu0 %1872
        %v1875 = vmul.f32 %v1870, %v1873
        %1876 = vrot.lane.b32.xlu0 %v1754, 32
        %v1877 = vpop.permute.xlu0 %1876
        %v1879 = vmul.f32 %v1858, %v1877
        %v1880 = vadd.f32 %v1875, %v1879
        %v1882 = vlaneseq
        %v1883 = vshrl.u32 %v1882, 7
        %v1884 = vsub.s32 0, %v1883
        %v1885 = vrot.slane %v1849, %v1884
        %1888 = vrot.lane.b32.xlu0 %v1880, 96
        %v1889 = vpop.permute.xlu0 %1888
        %v1891 = vmul.f32 %v1885, %v1889
        %1893 = vrot.lane.b32.xlu0 %v1845, 32
        %v1894 = vpop.permute.xlu0 %1893
        %v1896 = vadd.f32 %v1891, %v1894
        %v1897 = vmax.f32 %v1896, 0.0
        %1899 = vrot.lane.b32.xlu0 %v1897, 120
        %v1900 = vpop.permute.xlu0 %1899
        %v1902 = vmax.f32 %v1897, %v1900
        %1903 = vrot.lane.b32.xlu0 %v1897, 112
        %v1904 = vpop.permute.xlu0 %1903
        %v1906 = vmax.f32 %v1902, %v1904
        %1907 = vrot.lane.b32.xlu0 %v1897, 104
        %v1908 = vpop.permute.xlu0 %1907
        %v1910 = vmax.f32 %v1906, %v1908
        %v1912 = vlaneseq
        %v1913 = vshrl.u32 %v1912, 7
        %v1914 = vsub.s32 0, %v1913
        %v1915 = vrot.slane %v1851, %v1914
        %v1918 = vsel %vm742, %v1910, 0
        %1920 = vmatprep.subr.mxu0 0.0
        %1921 = vmatpush1.msra.mxu0 %v1850
        %1922 = vmatprep.subr.mxu0 0.0
        %1923 = vmatpush1.msra.mxu0 0.0
        %1924 = vmatprep.subr.mxu0 0.0
        %1925 = vmatpush1.msra.mxu0 0.0
        %1926 = vmatprep.subr.mxu0 0.0
        %1927 = vmatpush1.msra.mxu0 0.0
        %1928 = vmatprep.subr.mxu0 0.0
        %1929 = vmatpush1.msra.mxu0 0.0
        %1930 = vmatprep.subr.mxu0 0.0
        %1931 = vmatpush1.msra.mxu0 0.0
        %1932 = vmatprep.subr.mxu0 0.0
        %1933 = vmatpush1.msra.mxu0 0.0
        %1934 = vmatprep.subr.mxu0 0.0
        %1935 = vmatpush1.msra.mxu0 0.0
        %1936 = vmatprep.subr.mxu0 0.0
        %1937 = vmatpush1.msra.mxu0 0.0
        %1938 = vmatprep.subr.mxu0 0.0
        %1939 = vmatpush1.msra.mxu0 0.0
        %1940 = vmatprep.subr.mxu0 0.0
        %1941 = vmatpush1.msra.mxu0 0.0
        %1942 = vmatprep.subr.mxu0 0.0
        %1943 = vmatpush1.msra.mxu0 0.0
        %1944 = vmatprep.subr.mxu0 0.0
        %1945 = vmatpush1.msra.mxu0 0.0
        %1946 = vmatprep.subr.mxu0 0.0
        %1947 = vmatpush1.msra.mxu0 0.0
        %1948 = vmatprep.subr.mxu0 0.0
        %1949 = vmatpush1.msra.mxu0 0.0
        %1950 = vmatprep.subr.mxu0 0.0
        %1951 = vmatpush1.msra.mxu0 0.0
        %1952 = vmatprep.subr.mxu0 0.0
        %1953 = vmatpush1.msra.mxu0 0.0
        %1954 = vmatprep.subr.mxu0 0.0
        %1955 = vmatpush1.msra.mxu0 0.0
        %1956 = vmatprep.subr.mxu0 0.0
        %1957 = vmatpush1.msra.mxu0 0.0
        %1958 = vmatprep.subr.mxu0 0.0
        %1959 = vmatpush1.msra.mxu0 0.0
        %1960 = vmatprep.subr.mxu0 0.0
        %1961 = vmatpush1.msra.mxu0 0.0
        %1962 = vmatprep.subr.mxu0 0.0
        %1963 = vmatpush1.msra.mxu0 0.0
        %1964 = vmatprep.subr.mxu0 0.0
        %1965 = vmatpush1.msra.mxu0 0.0
        %1966 = vmatprep.subr.mxu0 0.0
        %1967 = vmatpush1.msra.mxu0 0.0
        %1968 = vmatprep.subr.mxu0 0.0
        %1969 = vmatpush1.msra.mxu0 0.0
        %1970 = vmatprep.subr.mxu0 0.0
        %1971 = vmatpush1.msra.mxu0 0.0
        %1972 = vmatprep.subr.mxu0 0.0
        %1973 = vmatpush1.msra.mxu0 0.0
        %1974 = vmatprep.subr.mxu0 0.0
        %1975 = vmatpush1.msra.mxu0 0.0
        %1976 = vmatprep.subr.mxu0 0.0
        %1977 = vmatpush1.msra.mxu0 0.0
        %1978 = vmatprep.subr.mxu0 0.0
        %1979 = vmatpush1.msra.mxu0 0.0
        %1980 = vmatprep.subr.mxu0 0.0
        %1981 = vmatpush1.msra.mxu0 0.0
        %1982 = vmatprep.subr.mxu0 0.0
        %1983 = vmatpush1.msra.mxu0 0.0
        %1984 = vmatprep.mubr.f32.mxu0 0.0
        %1985 = vmatmul.mubr.f32.gmra.mrb[0].mxu0 %v1918
        %v1986 = vpop.f32.mrb[0].mxu0
        %v1987 = vadd.f32 %v1915, %v1986
        %v1988 = vpop.f32.mrb[0].mxu0
        %1989 = vdwg.mxu0
        %v1990 = vtanh.pop %v1987
        %1991 = vst.msk [vmem:[#allocation3 + $0x4] sm:$0x3] %vm1056, %v1990
        %v1992 = vld [vmem:[%s3] sm:$0xff]
        %v1993 = vld [vmem:[%s3 + $0x8] sm:$0xff]
        %v1994 = vld [vmem:[%s3 + $0x10] sm:$0xff]
        %v1995 = vld [vmem:[%s3 + $0x18] sm:$0xff]
        %v1997 = vsel %vm589, %v1990, 0
        %1999 = vmatprep.subr.mxu0 0.0
        %2000 = vmatpush1.msra.mxu0 %v1992
        %2001 = vmatprep.subr.mxu0 0.0
        %2002 = vmatpush1.msra.mxu0 %v1993
        %2003 = vmatprep.subr.mxu0 0.0
        %2004 = vmatpush1.msra.mxu0 %v1994
        %2005 = vmatprep.subr.mxu0 0.0
        %2006 = vmatpush1.msra.mxu0 %v1995
        %2007 = vmatprep.subr.mxu0 0.0
        %2008 = vmatpush1.msra.mxu0 0.0
        %2009 = vmatprep.subr.mxu0 0.0
        %2010 = vmatpush1.msra.mxu0 0.0
        %2011 = vmatprep.subr.mxu0 0.0
        %2012 = vmatpush1.msra.mxu0 0.0
        %2013 = vmatprep.subr.mxu0 0.0
        %2014 = vmatpush1.msra.mxu0 0.0
        %2015 = vmatprep.subr.mxu0 0.0
        %2016 = vmatpush1.msra.mxu0 0.0
        %2017 = vmatprep.subr.mxu0 0.0
        %2018 = vmatpush1.msra.mxu0 0.0
        %2019 = vmatprep.subr.mxu0 0.0
        %2020 = vmatpush1.msra.mxu0 0.0
        %2021 = vmatprep.subr.mxu0 0.0
        %2022 = vmatpush1.msra.mxu0 0.0
        %2023 = vmatprep.subr.mxu0 0.0
        %2024 = vmatpush1.msra.mxu0 0.0
        %2025 = vmatprep.subr.mxu0 0.0
        %2026 = vmatpush1.msra.mxu0 0.0
        %2027 = vmatprep.subr.mxu0 0.0
        %2028 = vmatpush1.msra.mxu0 0.0
        %2029 = vmatprep.subr.mxu0 0.0
        %2030 = vmatpush1.msra.mxu0 0.0
        %2031 = vmatprep.subr.mxu0 0.0
        %2032 = vmatpush1.msra.mxu0 0.0
        %2033 = vmatprep.subr.mxu0 0.0
        %2034 = vmatpush1.msra.mxu0 0.0
        %2035 = vmatprep.subr.mxu0 0.0
        %2036 = vmatpush1.msra.mxu0 0.0
        %2037 = vmatprep.subr.mxu0 0.0
        %2038 = vmatpush1.msra.mxu0 0.0
        %2039 = vmatprep.subr.mxu0 0.0
        %2040 = vmatpush1.msra.mxu0 0.0
        %2041 = vmatprep.subr.mxu0 0.0
        %2042 = vmatpush1.msra.mxu0 0.0
        %2043 = vmatprep.subr.mxu0 0.0
        %2044 = vmatpush1.msra.mxu0 0.0
        %2045 = vmatprep.subr.mxu0 0.0
        %2046 = vmatpush1.msra.mxu0 0.0
        %2047 = vmatprep.subr.mxu0 0.0
        %2048 = vmatpush1.msra.mxu0 0.0
        %2049 = vmatprep.subr.mxu0 0.0
        %2050 = vmatpush1.msra.mxu0 0.0
        %2051 = vmatprep.subr.mxu0 0.0
        %2052 = vmatpush1.msra.mxu0 0.0
        %2053 = vmatprep.subr.mxu0 0.0
        %2054 = vmatpush1.msra.mxu0 0.0
        %2055 = vmatprep.subr.mxu0 0.0
        %2056 = vmatpush1.msra.mxu0 0.0
        %2057 = vmatprep.subr.mxu0 0.0
        %2058 = vmatpush1.msra.mxu0 0.0
        %2059 = vmatprep.subr.mxu0 0.0
        %2060 = vmatpush1.msra.mxu0 0.0
        %2061 = vmatprep.subr.mxu0 0.0
        %2062 = vmatpush1.msra.mxu0 0.0
        %2063 = vmatprep.mubr.f32.mxu0 0.0
        %2064 = vmatmul.mubr.f32.gmra.mrb[0].mxu0 %v1997
        %v2065 = vpop.f32.mrb[0].mxu0
        %v2066 = vadd.f32 0.0, %v2065
        %v2067 = vpop.f32.mrb[0].mxu0
        %2068 = vdwg.mxu0
        %v2069 = vld [vmem:[#allocation4 + $0x6] sm:$0x3]
        %v2070 = vld [vmem:[#allocation12] sm:$0x1]
        %v2071 = vld [vmem:[%s7] sm:$0xff]
        %v2072 = vld [vmem:[#allocation13] sm:$0x1]
        %v2073 = vld [vmem:[#allocation9] sm:$0x1]
        %v2074 = vadd.f32 %v2069, %v2066
        %v2075 = vxor.u32 %v2074, 2147483648
        %v2076 = vmul.f32 %v2075, 1.442695
        %v2077 = vpow.pop %v2076
        %v2078 = vadd.f32 %v2077, 1.0
        %v2079 = vrcp.pop %v2078
        %v2080 = vmul.f32 1.0, %v2079
        %v2082 = vlaneseq
        %v2083 = vshrl.u32 %v2082, 7
        %v2084 = vsub.s32 0, %v2083
        %v2085 = vrot.slane %v2073, %v2084
        %2086 = vrot.lane.b32.xlu0 %v2085, 64
        %v2087 = vpop.permute.xlu0 %2086
        %v2089 = vadd.f32 %v2066, %v2087
        %2091 = vrot.lane.b32.xlu0 %v2089, 64
        %v2092 = vpop.permute.xlu0 %2091
        %v2094 = vmul.f32 %v2080, %v2092
        %2096 = vrot.lane.b32.xlu0 %v2094, 64
        %v2097 = vpop.permute.xlu0 %2096
        %v2099 = vadd.f32 %v2069, %v2097
        %v2100 = vtanh.pop %v2099
        %v2101 = vsub.f32 1.0, %v2080
        %2103 = vrot.lane.b32.xlu0 %v2100, 96
        %v2104 = vpop.permute.xlu0 %2103
        %v2106 = vmul.f32 %v2101, %v2104
        %2107 = vrot.lane.b32.xlu0 %v1990, 32
        %v2108 = vpop.permute.xlu0 %2107
        %v2110 = vmul.f32 %v2080, %v2108
        %v2111 = vadd.f32 %v2106, %v2110
        %v2113 = vlaneseq
        %v2114 = vshrl.u32 %v2113, 7
        %v2115 = vsub.s32 0, %v2114
        %v2116 = vrot.slane %v2070, %v2115
        %2119 = vrot.lane.b32.xlu0 %v2111, 96
        %v2120 = vpop.permute.xlu0 %2119
        %v2122 = vmul.f32 %v2116, %v2120
        %2124 = vrot.lane.b32.xlu0 %v2069, 32
        %v2125 = vpop.permute.xlu0 %2124
        %v2127 = vadd.f32 %v2122, %v2125
        %v2128 = vmax.f32 %v2127, 0.0
        %2130 = vrot.lane.b32.xlu0 %v2128, 120
        %v2131 = vpop.permute.xlu0 %2130
        %v2133 = vmax.f32 %v2128, %v2131
        %2134 = vrot.lane.b32.xlu0 %v2128, 112
        %v2135 = vpop.permute.xlu0 %2134
        %v2137 = vmax.f32 %v2133, %v2135
        %2138 = vrot.lane.b32.xlu0 %v2128, 104
        %v2139 = vpop.permute.xlu0 %2138
        %v2141 = vmax.f32 %v2137, %v2139
        %v2143 = vlaneseq
        %v2144 = vshrl.u32 %v2143, 7
        %v2145 = vsub.s32 0, %v2144
        %v2146 = vrot.slane %v2072, %v2145
        %v2149 = vsel %vm742, %v2141, 0
        %2151 = vmatprep.subr.mxu0 0.0
        %2152 = vmatpush1.msra.mxu0 %v2071
        %2153 = vmatprep.subr.mxu0 0.0
        %2154 = vmatpush1.msra.mxu0 0.0
        %2155 = vmatprep.subr.mxu0 0.0
        %2156 = vmatpush1.msra.mxu0 0.0
        %2157 = vmatprep.subr.mxu0 0.0
        %2158 = vmatpush1.msra.mxu0 0.0
        %2159 = vmatprep.subr.mxu0 0.0
        %2160 = vmatpush1.msra.mxu0 0.0
        %2161 = vmatprep.subr.mxu0 0.0
        %2162 = vmatpush1.msra.mxu0 0.0
        %2163 = vmatprep.subr.mxu0 0.0
        %2164 = vmatpush1.msra.mxu0 0.0
        %2165 = vmatprep.subr.mxu0 0.0
        %2166 = vmatpush1.msra.mxu0 0.0
        %2167 = vmatprep.subr.mxu0 0.0
        %2168 = vmatpush1.msra.mxu0 0.0
        %2169 = vmatprep.subr.mxu0 0.0
        %2170 = vmatpush1.msra.mxu0 0.0
        %2171 = vmatprep.subr.mxu0 0.0
        %2172 = vmatpush1.msra.mxu0 0.0
        %2173 = vmatprep.subr.mxu0 0.0
        %2174 = vmatpush1.msra.mxu0 0.0
        %2175 = vmatprep.subr.mxu0 0.0
        %2176 = vmatpush1.msra.mxu0 0.0
        %2177 = vmatprep.subr.mxu0 0.0
        %2178 = vmatpush1.msra.mxu0 0.0
        %2179 = vmatprep.subr.mxu0 0.0
        %2180 = vmatpush1.msra.mxu0 0.0
        %2181 = vmatprep.subr.mxu0 0.0
        %2182 = vmatpush1.msra.mxu0 0.0
        %2183 = vmatprep.subr.mxu0 0.0
        %2184 = vmatpush1.msra.mxu0 0.0
        %2185 = vmatprep.subr.mxu0 0.0
        %2186 = vmatpush1.msra.mxu0 0.0
        %2187 = vmatprep.subr.mxu0 0.0
        %2188 = vmatpush1.msra.mxu0 0.0
        %2189 = vmatprep.subr.mxu0 0.0
        %2190 = vmatpush1.msra.mxu0 0.0
        %2191 = vmatprep.subr.mxu0 0.0
        %2192 = vmatpush1.msra.mxu0 0.0
        %2193 = vmatprep.subr.mxu0 0.0
        %2194 = vmatpush1.msra.mxu0 0.0
        %2195 = vmatprep.subr.mxu0 0.0
        %2196 = vmatpush1.msra.mxu0 0.0
        %2197 = vmatprep.subr.mxu0 0.0
        %2198 = vmatpush1.msra.mxu0 0.0
        %2199 = vmatprep.subr.mxu0 0.0
        %2200 = vmatpush1.msra.mxu0 0.0
        %2201 = vmatprep.subr.mxu0 0.0
        %2202 = vmatpush1.msra.mxu0 0.0
        %2203 = vmatprep.subr.mxu0 0.0
        %2204 = vmatpush1.msra.mxu0 0.0
        %2205 = vmatprep.subr.mxu0 0.0
        %2206 = vmatpush1.msra.mxu0 0.0
        %2207 = vmatprep.subr.mxu0 0.0
        %2208 = vmatpush1.msra.mxu0 0.0
        %2209 = vmatprep.subr.mxu0 0.0
        %2210 = vmatpush1.msra.mxu0 0.0
        %2211 = vmatprep.subr.mxu0 0.0
        %2212 = vmatpush1.msra.mxu0 0.0
        %2213 = vmatprep.subr.mxu0 0.0
        %2214 = vmatpush1.msra.mxu0 0.0
        %2215 = vmatprep.mubr.f32.mxu0 0.0
        %2216 = vmatmul.mubr.f32.gmra.mrb[0].mxu0 %v2149
        %v2217 = vpop.f32.mrb[0].mxu0
        %v2218 = vadd.f32 %v2146, %v2217
        %v2219 = vpop.f32.mrb[0].mxu0
        %2220 = vdwg.mxu0
        %v2221 = vtanh.pop %v2218
        %v2222 = vld [vmem:[#allocation10] sm:$0xff]
        %v2223 = vld [vmem:[#allocation10 + $0x8] sm:$0xff]
        %v2224 = vld [vmem:[#allocation10 + $0x10] sm:$0xff]
        %v2225 = vld [vmem:[#allocation10 + $0x18] sm:$0xff]
        %v2226 = vld [vmem:[#allocation10 + $0x20] sm:$0xff]
        %v2227 = vld [vmem:[#allocation10 + $0x28] sm:$0xff]
        %v2228 = vld [vmem:[#allocation10 + $0x30] sm:$0xff]
        %v2229 = vld [vmem:[#allocation10 + $0x38] sm:$0xff]
        %v2230 = vld [vmem:[%s6] sm:$0x3]
        %v2232 = vlaneseq
        %v2233 = vshrl.u32 %v2232, 7
        %v2234 = vsub.s32 0, %v2233
        %v2235 = vrot.slane %v2230, %v2234
        %v2236 = vlaneseq
        %v2237 = vshrl.u32 %v2236, 7
        %v2238 = vsub.s32 1, %v2237
        %v2239 = vrot.slane %v2230, %v2238
        %v2243 = vsel %vm589, %v2221, 0
        %2245 = vmatprep.subr.mxu0 %v2223
        %2246 = vmatpush1.msra.mxu0 %v2222
        %2247 = vmatprep.subr.mxu0 %v2225
        %2248 = vmatpush1.msra.mxu0 %v2224
        %2249 = vmatprep.subr.mxu0 %v2227
        %2250 = vmatpush1.msra.mxu0 %v2226
        %2251 = vmatprep.subr.mxu0 %v2229
        %2252 = vmatpush1.msra.mxu0 %v2228
        %2253 = vmatprep.subr.mxu0 0.0
        %2254 = vmatpush1.msra.mxu0 0.0
        %2255 = vmatprep.subr.mxu0 0.0
        %2256 = vmatpush1.msra.mxu0 0.0
        %2257 = vmatprep.subr.mxu0 0.0
        %2258 = vmatpush1.msra.mxu0 0.0
        %2259 = vmatprep.subr.mxu0 0.0
        %2260 = vmatpush1.msra.mxu0 0.0
        %2261 = vmatprep.subr.mxu0 0.0
        %2262 = vmatpush1.msra.mxu0 0.0
        %2263 = vmatprep.subr.mxu0 0.0
        %2264 = vmatpush1.msra.mxu0 0.0
        %2265 = vmatprep.subr.mxu0 0.0
        %2266 = vmatpush1.msra.mxu0 0.0
        %2267 = vmatprep.subr.mxu0 0.0
        %2268 = vmatpush1.msra.mxu0 0.0
        %2269 = vmatprep.subr.mxu0 0.0
        %2270 = vmatpush1.msra.mxu0 0.0
        %2271 = vmatprep.subr.mxu0 0.0
        %2272 = vmatpush1.msra.mxu0 0.0
        %2273 = vmatprep.subr.mxu0 0.0
        %2274 = vmatpush1.msra.mxu0 0.0
        %2275 = vmatprep.subr.mxu0 0.0
        %2276 = vmatpush1.msra.mxu0 0.0
        %2277 = vmatprep.subr.mxu0 0.0
        %2278 = vmatpush1.msra.mxu0 0.0
        %2279 = vmatprep.subr.mxu0 0.0
        %2280 = vmatpush1.msra.mxu0 0.0
        %2281 = vmatprep.subr.mxu0 0.0
        %2282 = vmatpush1.msra.mxu0 0.0
        %2283 = vmatprep.subr.mxu0 0.0
        %2284 = vmatpush1.msra.mxu0 0.0
        %2285 = vmatprep.subr.mxu0 0.0
        %2286 = vmatpush1.msra.mxu0 0.0
        %2287 = vmatprep.subr.mxu0 0.0
        %2288 = vmatpush1.msra.mxu0 0.0
        %2289 = vmatprep.subr.mxu0 0.0
        %2290 = vmatpush1.msra.mxu0 0.0
        %2291 = vmatprep.subr.mxu0 0.0
        %2292 = vmatpush1.msra.mxu0 0.0
        %2293 = vmatprep.subr.mxu0 0.0
        %2294 = vmatpush1.msra.mxu0 0.0
        %2295 = vmatprep.subr.mxu0 0.0
        %2296 = vmatpush1.msra.mxu0 0.0
        %2297 = vmatprep.subr.mxu0 0.0
        %2298 = vmatpush1.msra.mxu0 0.0
        %2299 = vmatprep.subr.mxu0 0.0
        %2300 = vmatpush1.msra.mxu0 0.0
        %2301 = vmatprep.subr.mxu0 0.0
        %2302 = vmatpush1.msra.mxu0 0.0
        %2303 = vmatprep.subr.mxu0 0.0
        %2304 = vmatpush1.msra.mxu0 0.0
        %2305 = vmatprep.subr.mxu0 0.0
        %2306 = vmatpush1.msra.mxu0 0.0
        %2307 = vmatprep.subr.mxu0 0.0
        %2308 = vmatpush1.msra.mxu0 0.0
        %2309 = vmatprep.mubr.f32.mxu0 0.0
        %2310 = vmatmul.mubr.f32.gmra.mrb[0].mxu0 %v2243
        %v2311 = vpop.f32.mrb[0].mxu0
        %v2312 = vadd.f32 %v2235, %v2311
        %v2313 = vpop.f32.mrb[0].mxu0
        %v2314 = vadd.f32 %v2239, %v2313
        %2315 = vdwg.mxu0
        %v2316 = vld [vmem:[%s911] sm:$0x1]
        %v2317 = vld [vmem:[%s913] sm:$0xff]
        %v2318 = vld [vmem:[%s915] sm:$0x1]
        %v2319 = vadd.f32 %v2312, %v2314
        %v2320 = vxor.u32 %v2319, 2147483648
        %v2321 = vmul.f32 %v2320, 1.442695
        %v2322 = vpow.pop %v2321
        %v2323 = vadd.f32 %v2322, 1.0
        %v2324 = vrcp.pop %v2323
        %v2325 = vmul.f32 1.0, %v2324
        %2327 = vrot.lane.b32.xlu0 %v2314, 64
        %v2328 = vpop.permute.xlu0 %2327
        %v2330 = vmul.f32 %v2325, %v2328
        %2332 = vrot.lane.b32.xlu0 %v2330, 64
        %v2333 = vpop.permute.xlu0 %2332
        %v2335 = vadd.f32 %v2312, %v2333
        %v2336 = vtanh.pop %v2335
        %v2337 = vsub.f32 1.0, %v2325
        %2339 = vrot.lane.b32.xlu0 %v2336, 96
        %v2340 = vpop.permute.xlu0 %2339
        %v2342 = vmul.f32 %v2337, %v2340
        %2343 = vrot.lane.b32.xlu0 %v2221, 32
        %v2344 = vpop.permute.xlu0 %2343
        %v2346 = vmul.f32 %v2325, %v2344
        %v2347 = vadd.f32 %v2342, %v2346
        %v2349 = vlaneseq
        %v2350 = vshrl.u32 %v2349, 7
        %v2351 = vsub.s32 0, %v2350
        %v2352 = vrot.slane %v2316, %v2351
        %2355 = vrot.lane.b32.xlu0 %v2347, 96
        %v2356 = vpop.permute.xlu0 %2355
        %v2358 = vmul.f32 %v2352, %v2356
        %2360 = vrot.lane.b32.xlu0 %v2312, 32
        %v2361 = vpop.permute.xlu0 %2360
        %v2363 = vadd.f32 %v2358, %v2361
        %v2364 = vmax.f32 %v2363, 0.0
        %2366 = vrot.lane.b32.xlu0 %v2364, 120
        %v2367 = vpop.permute.xlu0 %2366
        %v2369 = vmax.f32 %v2364, %v2367
        %2370 = vrot.lane.b32.xlu0 %v2364, 112
        %v2371 = vpop.permute.xlu0 %2370
        %v2373 = vmax.f32 %v2369, %v2371
        %2374 = vrot.lane.b32.xlu0 %v2364, 104
        %v2375 = vpop.permute.xlu0 %2374
        %v2377 = vmax.f32 %v2373, %v2375
        %v2379 = vlaneseq
        %v2380 = vshrl.u32 %v2379, 7
        %v2381 = vsub.s32 0, %v2380
        %v2382 = vrot.slane %v2318, %v2381
        %v2385 = vsel %vm742, %v2377, 0
        %2387 = vmatprep.subr.mxu0 0.0
        %2388 = vmatpush1.msra.mxu0 %v2317
        %2389 = vmatprep.subr.mxu0 0.0
        %2390 = vmatpush1.msra.mxu0 0.0
        %2391 = vmatprep.subr.mxu0 0.0
        %2392 = vmatpush1.msra.mxu0 0.0
        %2393 = vmatprep.subr.mxu0 0.0
        %2394 = vmatpush1.msra.mxu0 0.0
        %2395 = vmatprep.subr.mxu0 0.0
        %2396 = vmatpush1.msra.mxu0 0.0
        %2397 = vmatprep.subr.mxu0 0.0
        %2398 = vmatpush1.msra.mxu0 0.0
        %2399 = vmatprep.subr.mxu0 0.0
        %2400 = vmatpush1.msra.mxu0 0.0
        %2401 = vmatprep.subr.mxu0 0.0
        %2402 = vmatpush1.msra.mxu0 0.0
        %2403 = vmatprep.subr.mxu0 0.0
        %2404 = vmatpush1.msra.mxu0 0.0
        %2405 = vmatprep.subr.mxu0 0.0
        %2406 = vmatpush1.msra.mxu0 0.0
        %2407 = vmatprep.subr.mxu0 0.0
        %2408 = vmatpush1.msra.mxu0 0.0
        %2409 = vmatprep.subr.mxu0 0.0
        %2410 = vmatpush1.msra.mxu0 0.0
        %2411 = vmatprep.subr.mxu0 0.0
        %2412 = vmatpush1.msra.mxu0 0.0
        %2413 = vmatprep.subr.mxu0 0.0
        %2414 = vmatpush1.msra.mxu0 0.0
        %2415 = vmatprep.subr.mxu0 0.0
        %2416 = vmatpush1.msra.mxu0 0.0
        %2417 = vmatprep.subr.mxu0 0.0
        %2418 = vmatpush1.msra.mxu0 0.0
        %2419 = vmatprep.subr.mxu0 0.0
        %2420 = vmatpush1.msra.mxu0 0.0
        %2421 = vmatprep.subr.mxu0 0.0
        %2422 = vmatpush1.msra.mxu0 0.0
        %2423 = vmatprep.subr.mxu0 0.0
        %2424 = vmatpush1.msra.mxu0 0.0
        %2425 = vmatprep.subr.mxu0 0.0
        %2426 = vmatpush1.msra.mxu0 0.0
        %2427 = vmatprep.subr.mxu0 0.0
        %2428 = vmatpush1.msra.mxu0 0.0
        %2429 = vmatprep.subr.mxu0 0.0
        %2430 = vmatpush1.msra.mxu0 0.0
        %2431 = vmatprep.subr.mxu0 0.0
        %2432 = vmatpush1.msra.mxu0 0.0
        %2433 = vmatprep.subr.mxu0 0.0
        %2434 = vmatpush1.msra.mxu0 0.0
        %2435 = vmatprep.subr.mxu0 0.0
        %2436 = vmatpush1.msra.mxu0 0.0
        %2437 = vmatprep.subr.mxu0 0.0
        %2438 = vmatpush1.msra.mxu0 0.0
        %2439 = vmatprep.subr.mxu0 0.0
        %2440 = vmatpush1.msra.mxu0 0.0
        %2441 = vmatprep.subr.mxu0 0.0
        %2442 = vmatpush1.msra.mxu0 0.0
        %2443 = vmatprep.subr.mxu0 0.0
        %2444 = vmatpush1.msra.mxu0 0.0
        %2445 = vmatprep.subr.mxu0 0.0
        %2446 = vmatpush1.msra.mxu0 0.0
        %2447 = vmatprep.subr.mxu0 0.0
        %2448 = vmatpush1.msra.mxu0 0.0
        %2449 = vmatprep.subr.mxu0 0.0
        %2450 = vmatpush1.msra.mxu0 0.0
        %2451 = vmatprep.mubr.f32.mxu0 0.0
        %2452 = vmatmul.mubr.f32.gmra.mrb[0].mxu0 %v2385
        %v2453 = vpop.f32.mrb[0].mxu0
        %v2454 = vadd.f32 %v2382, %v2453
        %v2455 = vpop.f32.mrb[0].mxu0
        %2456 = vdwg.mxu0
        %v2457 = vtanh.pop %v2454
        %2458 = vst.msk [vmem:[#allocation3 + $0x6] sm:$0x3] %vm1056, %v2457
        %2459 = vst.msk [vmem:[#allocation2] sm:$0x3] %vm1056, %v2457
        %v2460 = vld [vmem:[#allocation3] sm:$0xff]
        %v2461 = vld [vmem:[%s10] sm:$0xff]
        %v2462 = vld [vmem:[%s10 + $0x8] sm:$0xff]
        %v2463 = vld [vmem:[%s10 + $0x10] sm:$0xff]
        %v2464 = vld [vmem:[%s10 + $0x18] sm:$0xff]
        %v2465 = vld [vmem:[%s11] sm:$0x1]
        %v2467 = vlaneseq
        %v2468 = vshrl.u32 %v2467, 7
        %v2469 = vsub.s32 0, %v2468
        %v2470 = vrot.slane %v2465, %v2469
        %v2473 = vsel %vm589, %v2460, 0
        %2475 = vmatprep.subr.mxu0 0.0
        %2476 = vmatpush1.msra.mxu0 %v2461
        %2477 = vmatprep.subr.mxu0 0.0
        %2478 = vmatpush1.msra.mxu0 %v2462
        %2479 = vmatprep.subr.mxu0 0.0
        %2480 = vmatpush1.msra.mxu0 %v2463
        %2481 = vmatprep.subr.mxu0 0.0
        %2482 = vmatpush1.msra.mxu0 %v2464
        %2483 = vmatprep.subr.mxu0 0.0
        %2484 = vmatpush1.msra.mxu0 0.0
        %2485 = vmatprep.subr.mxu0 0.0
        %2486 = vmatpush1.msra.mxu0 0.0
        %2487 = vmatprep.subr.mxu0 0.0
        %2488 = vmatpush1.msra.mxu0 0.0
        %2489 = vmatprep.subr.mxu0 0.0
        %2490 = vmatpush1.msra.mxu0 0.0
        %2491 = vmatprep.subr.mxu0 0.0
        %2492 = vmatpush1.msra.mxu0 0.0
        %2493 = vmatprep.subr.mxu0 0.0
        %2494 = vmatpush1.msra.mxu0 0.0
        %2495 = vmatprep.subr.mxu0 0.0
        %2496 = vmatpush1.msra.mxu0 0.0
        %2497 = vmatprep.subr.mxu0 0.0
        %2498 = vmatpush1.msra.mxu0 0.0
        %2499 = vmatprep.subr.mxu0 0.0
        %2500 = vmatpush1.msra.mxu0 0.0
        %2501 = vmatprep.subr.mxu0 0.0
        %2502 = vmatpush1.msra.mxu0 0.0
        %2503 = vmatprep.subr.mxu0 0.0
        %2504 = vmatpush1.msra.mxu0 0.0
        %2505 = vmatprep.subr.mxu0 0.0
        %2506 = vmatpush1.msra.mxu0 0.0
        %2507 = vmatprep.subr.mxu0 0.0
        %2508 = vmatpush1.msra.mxu0 0.0
        %2509 = vmatprep.subr.mxu0 0.0
        %2510 = vmatpush1.msra.mxu0 0.0
        %2511 = vmatprep.subr.mxu0 0.0
        %2512 = vmatpush1.msra.mxu0 0.0
        %2513 = vmatprep.subr.mxu0 0.0
        %2514 = vmatpush1.msra.mxu0 0.0
        %2515 = vmatprep.subr.mxu0 0.0
        %2516 = vmatpush1.msra.mxu0 0.0
        %2517 = vmatprep.subr.mxu0 0.0
        %2518 = vmatpush1.msra.mxu0 0.0
        %2519 = vmatprep.subr.mxu0 0.0
        %2520 = vmatpush1.msra.mxu0 0.0
        %2521 = vmatprep.subr.mxu0 0.0
        %2522 = vmatpush1.msra.mxu0 0.0
        %2523 = vmatprep.subr.mxu0 0.0
        %2524 = vmatpush1.msra.mxu0 0.0
        %2525 = vmatprep.subr.mxu0 0.0
        %2526 = vmatpush1.msra.mxu0 0.0
        %2527 = vmatprep.subr.mxu0 0.0
        %2528 = vmatpush1.msra.mxu0 0.0
        %2529 = vmatprep.subr.mxu0 0.0
        %2530 = vmatpush1.msra.mxu0 0.0
        %2531 = vmatprep.subr.mxu0 0.0
        %2532 = vmatpush1.msra.mxu0 0.0
        %2533 = vmatprep.subr.mxu0 0.0
        %2534 = vmatpush1.msra.mxu0 0.0
        %2535 = vmatprep.subr.mxu0 0.0
        %2536 = vmatpush1.msra.mxu0 0.0
        %2537 = vmatprep.subr.mxu0 0.0
        %2538 = vmatpush1.msra.mxu0 0.0
        %2539 = vmatprep.mubr.f32.mxu0 0.0
        %2540 = vmatmul.mubr.f32.gmra.mrb[0].mxu0 %v2473
        %v2541 = vpop.f32.mrb[0].mxu0
        %v2542 = vadd.f32 %v2470, %v2541
        %v2543 = vpop.f32.mrb[0].mxu0
        %2544 = vdwg.mxu0
        %2545 = vst.msk [vmem:[%s492] sm:$0xff] %vm742, %v2542
        %p2546 = scmp.lt.s32.totalorder %s27, 1
        %s2547 = scalar_select %p2546, %s27, 1
        %s2548 = smul.addr %s2547, 8
        %s2549 = scalar_lea.vmem %s12, %s2548
        // Predicated region
        $region97: #{tpu_custom_call.1} parent=67 // pred_check
          %p2550 = pneg %p302
        $region98: #{tpu_custom_call.1} parent=67 // pred_check_branch
          %2552 = sbr.rel (%p2550) target = $region100
        $region99: #{tpu_custom_call.1} parent=67 // pred_region
          _
        $region100: #{tpu_custom_call.1} parent=67 // pred_fallthru
          _
      $region68: #{tpu_custom_call.1} parent=5 // pred_fallthru
        _
      %p2553 = scmp.le.s32.totalorder 2, %s22
      // Predicated region
      $region101: #{tpu_custom_call.1} parent=5 // pred_check
        %p2554 = pneg %p2553
      $region102: #{tpu_custom_call.1} parent=5 // pred_check_branch
        %2556 = sbr.rel (%p2554) target = $region104
      $region103: #{tpu_custom_call.1} parent=5 // pred_region
        %s2557 = ssub.s32 %s22, 2
        // Predicated region
        $region105: #{tpu_custom_call.1} parent=103 // pred_check
          %p2558 = pneg %p308
        $region106: #{tpu_custom_call.1} parent=103 // pred_check_branch
          %2560 = sbr.rel (%p2558) target = $region108
        $region107: #{tpu_custom_call.1} parent=103 // pred_region
          %p2561 = scmp.lt.s32.totalorder %s28, 1
          %s2562 = scalar_select %p2561, %s28, 1
          %s2563 = smul.addr %s2562, 8
          %s2564 = scalar_lea.vmem %s12, %s2563
        $region108: #{tpu_custom_call.1} parent=103 // pred_fallthru
          _
      $region104: #{tpu_custom_call.1} parent=5 // pred_fallthru
        _
    $region6: #{tpu_custom_call.1} parent=1 // loop_footer
      %s26 = sadd.s32 1, %s22
    $region7: #{tpu_custom_call.1} parent=1 // loop_footer_branch
      %21 = sbr.rel target = $region3
    $region8: #{tpu_custom_call.1} parent=1 // loop_exit
      _
    %2565 = vsyncpa [#allocation6], 1
    %s2566 = scalar_lea.sflag [#allocation6], 1
    %2567 = vsyncpa %s2566, 1
    %2568 = vsyncpa [#allocation8], 1
    %2569 = vsyncpa [#allocation11], 1
    %2570 = vsyncpa [#allocation14], 1

</llo_original>
